<compile_context>
chip_gen: v6e
topology: v6e:2x2x1
jax: 0.10.0
libtpu: 0.0.40
codegen_flags: <defaults>
</compile_context>

<pallas_src>
import functools

import jax
import jax.numpy as jnp
from jax.experimental import pallas as pl
from jax.experimental.pallas import tpu as pltpu

LANE = 128


def _ceil_div(a, b):
    return -(-a // b)


def _pick_tile(m, t_max):
    """Tile for the parallel M axis: >=2 grid steps when possible (v7x has two
    TensorCores on a 'parallel' axis), rounded up to a sublane multiple."""
    if m <= 8:
        return m                          # full-dim block (always legal)
    steps = max(2, _ceil_div(m, t_max))
    t = _ceil_div(m, steps)
    t = _ceil_div(t, 8) * 8
    return min(t, t_max)


def _compiler_params():
    return pltpu.CompilerParams(
        dimension_semantics=("parallel",),
        vmem_limit_bytes=32 * 1024 * 1024)


# ----------------------------------------------------------------------------
# Pallas kernels
# ----------------------------------------------------------------------------
def _mm_bias_act_kernel(a_ref, w_ref, b_ref, o_ref, *, activation):
    """o = act(a @ w + b); a:(TM,K) bf16, w:(K,N) bf16, b:(1,N) f32."""
    acc = jnp.dot(a_ref[...], w_ref[...], preferred_element_type=jnp.float32)
    acc = acc + b_ref[...]
    if activation == "relu":
        acc = jnp.maximum(acc, 0.0)
    o_ref[...] = acc.astype(o_ref.dtype)


def matmul_bias_act(a, w, b, activation="relu", out_dtype=jnp.bfloat16,
                    tm_max=1024):
    """M-tiled matmul + bias + activation; weights stay resident in VMEM."""
    M, K = a.shape
    Kw, N = w.shape
    assert K == Kw and b.shape == (1, N)
    tm = _pick_tile(M, tm_max)
    return pl.pallas_call(
        functools.partial(_mm_bias_act_kernel, activation=activation),
        out_shape=jax.ShapeDtypeStruct((M, N), out_dtype),
        grid=(pl.cdiv(M, tm),),
        in_specs=[
            pl.BlockSpec((tm, K), lambda i: (i, 0)),
            pl.BlockSpec((K, N), lambda i: (0, 0)),
            pl.BlockSpec((1, N), lambda i: (0, 0)),
        ],
        out_specs=pl.BlockSpec((tm, N), lambda i: (i, 0)),
        compiler_params=_compiler_params(),
    )(a, w, b)


def _maxpool2x2_kernel(x0_ref, x1_ref, o_ref):
    """x0/x1: (TB,HO,WO,2C) = the two H-partners; o: (TB,HO,WO,C)."""
    m = jnp.maximum(x0_ref[...], x1_ref[...])        # max over the H pair
    c = o_ref.shape[-1]
    o_ref[...] = jnp.maximum(m[..., :c], m[..., c:])  # max over the W pair


def maxpool2x2_nhwc(x, tb_max=8):
    """x: (B, H, W, C) NHWC -> (B, H//2, W//2, C), non-overlapping 2x2 pool."""
    B, H, W, C = x.shape
    ho, wo = H // 2, W // 2
    tb = min(B, tb_max)
    xr = x.reshape(B, ho, 2, wo, 2 * C)               # free reshape (contiguous)
    in_spec0 = pl.BlockSpec((tb, ho, pl.Squeezed(), wo, 2 * C),
                            lambda b: (b, 0, 0, 0, 0))
    in_spec1 = pl.BlockSpec((tb, ho, pl.Squeezed(), wo, 2 * C),
                            lambda b: (b, 0, 1, 0, 0))
    return pl.pallas_call(
        _maxpool2x2_kernel,
        out_shape=jax.ShapeDtypeStruct((B, ho, wo, C), x.dtype),
        grid=(pl.cdiv(B, tb),),
        in_specs=[in_spec0, in_spec1],
        out_specs=pl.BlockSpec((tb, ho, wo, C), lambda b: (b, 0, 0, 0)),
        compiler_params=_compiler_params(),
    )(xr, xr)


def _classifier_kernel(x_ref, w1_ref, b1_ref, w2_ref, b2_ref, w3_ref, b3_ref,
                       o_ref, *, n_classes):
    """Fused fc1+ReLU+fc2+ReLU+fc3+softmax; padded logit columns masked off."""
    h = jnp.dot(x_ref[...], w1_ref[...],
                preferred_element_type=jnp.float32) + b1_ref[...]
    h = jnp.maximum(h, 0.0)
    h = jnp.dot(h.astype(w2_ref.dtype), w2_ref[...],
                preferred_element_type=jnp.float32) + b2_ref[...]
    h = jnp.maximum(h, 0.0)
    logits = jnp.dot(h.astype(w3_ref.dtype), w3_ref[...],
                     preferred_element_type=jnp.float32) + b3_ref[...]
    col = jax.lax.broadcasted_iota(jnp.int32, logits.shape, 1)
    logits = jnp.where(col < n_classes, logits, -1e30)   # mask padded columns
    m = jnp.max(logits, axis=-1, keepdims=True)
    e = jnp.exp(logits - m)
    o_ref[...] = (e / jnp.sum(e, axis=-1, keepdims=True)).astype(o_ref.dtype)


def classifier_fused(x, w1, b1, w2, b2, w3, b3, n_classes, tb_max=256):
    B, K = x.shape
    N1, N2, N3 = w1.shape[1], w2.shape[1], w3.shape[1]
    tb = _pick_tile(B, tb_max)
    out = pl.pallas_call(
        functools.partial(_classifier_kernel, n_classes=n_classes),
        out_shape=jax.ShapeDtypeStruct((B, N3), jnp.float32),
        grid=(pl.cdiv(B, tb),),
        in_specs=[
            pl.BlockSpec((tb, K), lambda i: (i, 0)),
            pl.BlockSpec((K, N1), lambda i: (0, 0)),
            pl.BlockSpec((1, N1), lambda i: (0, 0)),
            pl.BlockSpec((N1, N2), lambda i: (0, 0)),
            pl.BlockSpec((1, N2), lambda i: (0, 0)),
            pl.BlockSpec((N2, N3), lambda i: (0, 0)),
            pl.BlockSpec((1, N3), lambda i: (0, 0)),
        ],
        out_specs=pl.BlockSpec((tb, N3), lambda i: (i, 0)),
        compiler_params=_compiler_params(),
    )(x, w1, b1, w2, b2, w3, b3)
    return out[:, :n_classes]


# ----------------------------------------------------------------------------
# JAX glue: layout only (im2col patch extraction, one-time weight prep)
# ----------------------------------------------------------------------------
def im2col_nhwc(x, k, k_pad=None):
    """x: (B,H,W,C) NHWC -> patches (B*oh*ow, k*k*C [zero-padded to k_pad]).
    Patch feature order is (ki, kj, c) — weight prep below matches it."""
    B, H, W, C = x.shape
    oh, ow = H - k + 1, W - k + 1
    cols = [x[:, i:i + oh, j:j + ow, :] for i in range(k) for j in range(k)]
    kdim = k * k * C
    if k_pad is not None and k_pad > kdim:
        cols.append(jnp.zeros((B, oh, ow, k_pad - kdim), x.dtype))
    p = jnp.concatenate(cols, axis=-1)
    return p.reshape(B * oh * ow, p.shape[-1]), oh, ow


def prepare_params(params):
    """Pad/permute PyTorch-shaped weights once; K padded only to the next 128."""
    (w1, b1, w2, b2, wf1, bf1, wf2, bf2, wf3, bf3) = params
    f32, bf16 = jnp.float32, jnp.bfloat16

    # conv1: patch order (i,j,c) with C=3 -> K=75, padded to 128; N 6 -> 128.
    w1p = jnp.zeros((LANE, LANE), f32)
    w1p = w1p.at[:75, :6].set(w1.transpose(2, 3, 1, 0).reshape(75, 6))
    b1p = jnp.zeros((1, LANE), f32).at[0, :6].set(b1)

    # conv2: real 6 input channels only -> K = 5*5*6 = 150, padded to 256.
    w2p = jnp.zeros((2 * LANE, LANE), f32)
    w2p = w2p.at[:150, :16].set(w2.transpose(2, 3, 1, 0).reshape(150, 16))
    b2p = jnp.zeros((1, LANE), f32).at[0, :16].set(b2)

    # fc1: bake PyTorch's NCHW view(-1,400) ordering into the weight rows for
    # the NHWC (B,5,5,16) -> (B,400) flatten; K = 400 padded to 512.
    wf1p = jnp.zeros((4 * LANE, LANE), f32)
    wf1p = wf1p.at[:400, :120].set(
        wf1.reshape(120, 16, 5, 5).transpose(2, 3, 1, 0).reshape(400, 120))
    bf1p = jnp.zeros((1, LANE), f32).at[0, :120].set(bf1)

    wf2p = jnp.zeros((LANE, LANE), f32).at[:120, :84].set(wf2.T)
    bf2p = jnp.zeros((1, LANE), f32).at[0, :84].set(bf2)

    wf3p = jnp.zeros((LANE, LANE), f32).at[:84, :10].set(wf3.T)
    bf3p = jnp.zeros((1, LANE), f32).at[0, :10].set(bf3)

    return dict(
        w1=w1p.astype(bf16), b1=b1p, w2=w2p.astype(bf16), b2=b2p,
        wf1=wf1p.astype(bf16), bf1=bf1p, wf2=wf2p.astype(bf16), bf2=bf2p,
        wf3=wf3p.astype(bf16), bf3=bf3p)


def net_forward(x, p):
    """x: (B, 3, 32, 32) f32 NCHW. Returns (B, 10) softmax probabilities."""
    B = x.shape[0]
    xh = x.transpose(0, 2, 3, 1).astype(jnp.bfloat16)      # NHWC (B,32,32,3)

    # Conv2d(3,6,5)+ReLU  (im2col matmul; K 75->128, lane-dense C_out=128 pad)
    a, oh, ow = im2col_nhwc(xh, 5, k_pad=LANE)             # (B*28*28, 128)
    y = matmul_bias_act(a, p["w1"], p["b1"], "relu")       # (B*28*28, 128) bf16
    y = maxpool2x2_nhwc(y.reshape(B, oh, ow, LANE))        # (B,14,14,128)
    y = y[..., :6]                                         # de-pad channels

    # Conv2d(6,16,5)+ReLU  (K = 5*5*6 = 150 padded to 256)
    a, oh, ow = im2col_nhwc(y, 5, k_pad=2 * LANE)          # (B*10*10, 256)
    y = matmul_bias_act(a, p["w2"], p["b2"], "relu")       # (B*10*10, 128)
    y = y.reshape(B, oh, ow, LANE)[..., :16]               # (B,10,10,16)
    y = maxpool2x2_nhwc(y)                                 # (B,5,5,16)

    # Classifier: Linear(400,120)+ReLU+Linear(120,84)+ReLU+Linear(84,10)+Softmax
    feat = y.reshape(B, 400)                               # flatten order baked
    feat = jnp.pad(feat, ((0, 0), (0, 4 * LANE - 400)))    # K 400 -> 512
    return classifier_fused(feat, p["wf1"], p["bf1"], p["wf2"], p["bf2"],
                            p["wf3"], p["bf3"], n_classes=10)


def net_reference(x, params):
    """Pure-JAX f32 reference with PyTorch semantics (for tolerance check)."""
    (w1, b1, w2, b2, wf1, bf1, wf2, bf2, wf3, bf3) = params
    B = x.shape[0]
    xh = x.transpose(0, 2, 3, 1)                                   # NHWC f32
    a, _, _ = im2col_nhwc(xh, 5)                                   # (B*784,75)
    y = jnp.maximum(a @ w1.transpose(2, 3, 1, 0).reshape(75, 6) + b1, 0.0)
    y = y.reshape(B, 28, 28, 6).reshape(B, 14, 2, 14, 2, 6).max(axis=(2, 4))
    a, _, _ = im2col_nhwc(y, 5)                                    # (B*100,150)
    y = jnp.maximum(a @ w2.transpose(2, 3, 1, 0).reshape(150, 16) + b2, 0.0)
    y = y.reshape(B, 10, 10, 16).reshape(B, 5, 2, 5, 2, 16).max(axis=(2, 4))
    feat = y.reshape(B, 400)
    wf1_perm = wf1.reshape(120, 16, 5, 5).transpose(2, 3, 1, 0).reshape(400, 120)
    h = jnp.maximum(feat @ wf1_perm + bf1, 0.0)
    h = jnp.maximum(h @ wf2.T + bf2, 0.0)
    logits = h @ wf3.T + bf3
    return jax.nn.softmax(logits, axis=-1)


def init_params(key):
    """Deterministic synthetic parameters with PyTorch shapes."""
    ks = jax.random.split(key, 10)

    def rnd(k, shape, scale):
        return (scale * jax.random.normal(k, shape)).astype(jnp.float32)

    w1 = rnd(ks[0], (6, 3, 5, 5), 0.1)
    b1 = rnd(ks[1], (6,), 0.05)
    w2 = rnd(ks[2], (16, 6, 5, 5), 0.1)
    b2 = rnd(ks[3], (16,), 0.05)
    wf1 = rnd(ks[4], (120, 400), 0.05)    # PyTorch Linear: (out, in)
    bf1 = rnd(ks[5], (120,), 0.05)
    wf2 = rnd(ks[6], (84, 120), 0.05)
    bf2 = rnd(ks[7], (84,), 0.05)
    wf3 = rnd(ks[8], (10, 84), 0.05)
    bf3 = rnd(ks[9], (10,), 0.05)
    return (w1, b1, w2, b2, wf1, bf1, wf2, bf2, wf3, bf3)


if __name__ == "__main__":
    key = jax.random.PRNGKey(0)
    k_param, k_x = jax.random.split(key)
    params = init_params(k_param)
    prep = prepare_params(params)          # one-time pad/permute, outside jit
    # Input spatial size must be 32x32 so that flatten is 16*5*5 = 400.
    x = jax.random.normal(k_x, (2, 3, 32, 32), dtype=jnp.float32)

    out = jax.jit(net_forward)(x, prep)
    out = jax.block_until_ready(out)

    assert out.shape == (2, 10), out.shape
    row_sums = jnp.sum(out, axis=1)
    assert bool(jnp.all(jnp.abs(row_sums - 1.0) < 1e-4)), row_sums

    ref = jax.jit(net_reference)(x, params)
    ref = jax.block_until_ready(ref)
    max_err = float(jnp.max(jnp.abs(out - ref)))
    assert max_err < 6e-2, max_err          # bf16-MXU vs f32 reference
    print("KERNEL_OK")
</pallas_src>

<mosaic_0001>
module attributes {stable_mosaic.version = 11 : i64} {
  func.func @_mm_bias_act_kernel(%arg0: i32, %arg1: memref<784x128xbf16, #tpu.memory_space<vmem>>, %arg2: memref<128x128xbf16, #tpu.memory_space<vmem>>, %arg3: memref<1x128xf32, #tpu.memory_space<vmem>>, %arg4: memref<784x128xbf16, #tpu.memory_space<vmem>>) attributes {dimension_semantics = [#tpu.dimension_semantics<parallel>], iteration_bounds = array<i64: 2>, scalar_prefetch = 0 : i64, scratch_operands = 0 : i64, tpu.core_type = #tpu.core_type<tc>, window_params = [{transform_indices = @transform_0, window_bounds = array<i64: 784, 128>}, {pipeline_mode = #tpu.pipeline_mode<synchronous>, transform_indices = @transform_1, window_bounds = array<i64: 128, 128>}, {pipeline_mode = #tpu.pipeline_mode<synchronous>, transform_indices = @transform_2, window_bounds = array<i64: 1, 128>}, {transform_indices = @transform_3, window_bounds = array<i64: 784, 128>}]} {
    %c0 = arith.constant 0 : index
    %c0_0 = arith.constant 0 : index
    %0 = vector.load %arg1[%c0, %c0_0] : memref<784x128xbf16, #tpu.memory_space<vmem>>, vector<784x128xbf16>
    %c0_1 = arith.constant 0 : index
    %c0_2 = arith.constant 0 : index
    %1 = vector.load %arg2[%c0_1, %c0_2] : memref<128x128xbf16, #tpu.memory_space<vmem>>, vector<128x128xbf16>
    %cst = arith.constant dense<0.000000e+00> : vector<784x128xf32>
    %2 = tpu.matmul %0, %1, %cst {dimension_numbers = #tpu.dot_dimension_numbers<[1], [0], [0], [1], [0, 0, 1, 1], [], []>} : vector<784x128xbf16>, vector<128x128xbf16>, vector<784x128xf32> -> vector<784x128xf32>
    %c0_3 = arith.constant 0 : index
    %c0_4 = arith.constant 0 : index
    %3 = vector.load %arg3[%c0_3, %c0_4] : memref<1x128xf32, #tpu.memory_space<vmem>>, vector<1x128xf32>
    %4 = vector.broadcast %3 : vector<1x128xf32> to vector<784x128xf32>
    %5 = arith.addf %2, %4 : vector<784x128xf32>
    %cst_5 = arith.constant 0.000000e+00 : f32
    %6 = vector.broadcast %cst_5 : f32 to vector<784x128xf32>
    %7 = arith.maximumf %5, %6 : vector<784x128xf32>
    %8 = arith.truncf %7 : vector<784x128xf32> to vector<784x128xbf16>
    %c0_6 = arith.constant 0 : index
    %c0_7 = arith.constant 0 : index
    %9 = vector.load %arg4[%c0_6, %c0_7] : memref<784x128xbf16, #tpu.memory_space<vmem>>, vector<784x128xbf16>
    tpu.vector_store %arg4[%c0_6, %c0_7], %8 {strides = array<i32>} : memref<784x128xbf16, #tpu.memory_space<vmem>>, vector<784x128xbf16>,
    return
  }
  func.func @transform_0(%arg0: i32) -> (i32, i32) {
    %c0_i32 = arith.constant 0 : i32
    %c0_i32_0 = arith.constant 0 : i32
    return %arg0, %c0_i32 : i32, i32
  }
  func.func @transform_1(%arg0: i32) -> (i32, i32) {
    %c0_i32 = arith.constant 0 : i32
    %c0_i32_0 = arith.constant 0 : i32
    %c0_i32_1 = arith.constant 0 : i32
    return %c0_i32, %c0_i32_0 : i32, i32
  }
  func.func @transform_2(%arg0: i32) -> (i32, i32) {
    %c0_i32 = arith.constant 0 : i32
    %c0_i32_0 = arith.constant 0 : i32
    %c0_i32_1 = arith.constant 0 : i32
    return %c0_i32, %c0_i32_0 : i32, i32
  }
  func.func @transform_3(%arg0: i32) -> (i32, i32) {
    %c0_i32 = arith.constant 0 : i32
    %c0_i32_0 = arith.constant 0 : i32
    return %arg0, %c0_i32 : i32, i32
  }
}

module attributes {stable_mosaic.version = 11 : i64} {
  func.func @_maxpool2x2_kernel(%arg0: i32, %arg1: memref<2x14x1x14x256xbf16, #tpu.memory_space<vmem>>, %arg2: memref<2x14x1x14x256xbf16, #tpu.memory_space<vmem>>, %arg3: memref<2x14x14x128xbf16, #tpu.memory_space<vmem>>) attributes {dimension_semantics = [#tpu.dimension_semantics<parallel>], iteration_bounds = array<i64: 1>, scalar_prefetch = 0 : i64, scratch_operands = 0 : i64, tpu.core_type = #tpu.core_type<tc>, window_params = [{transform_indices = @transform_0, window_bounds = array<i64: 2, 14, 1, 14, 256>}, {transform_indices = @transform_1, window_bounds = array<i64: 2, 14, 1, 14, 256>}, {transform_indices = @transform_2, window_bounds = array<i64: 2, 14, 14, 128>}]} {
    %c0 = arith.constant 0 : index
    %c0_0 = arith.constant 0 : index
    %c0_1 = arith.constant 0 : index
    %c0_2 = arith.constant 0 : index
    %c0_3 = arith.constant 0 : index
    %0 = vector.load %arg1[%c0, %c0_0, %c0_1, %c0_2, %c0_3] : memref<2x14x1x14x256xbf16, #tpu.memory_space<vmem>>, vector<2x14x1x14x256xbf16>
    %1 = vector.shape_cast %0 : vector<2x14x1x14x256xbf16> to vector<2x14x14x256xbf16>
    %c0_4 = arith.constant 0 : index
    %c0_5 = arith.constant 0 : index
    %c0_6 = arith.constant 0 : index
    %c0_7 = arith.constant 0 : index
    %c0_8 = arith.constant 0 : index
    %2 = vector.load %arg2[%c0_4, %c0_5, %c0_6, %c0_7, %c0_8] : memref<2x14x1x14x256xbf16, #tpu.memory_space<vmem>>, vector<2x14x1x14x256xbf16>
    %3 = vector.shape_cast %2 : vector<2x14x1x14x256xbf16> to vector<2x14x14x256xbf16>
    %4 = arith.maximumf %1, %3 : vector<2x14x14x256xbf16>
    %5 = vector.extract_strided_slice %4 {offsets = [0, 0, 0, 0], sizes = [2, 14, 14, 128], strides = [1, 1, 1, 1]} : vector<2x14x14x256xbf16> to vector<2x14x14x128xbf16>
    %6 = vector.extract_strided_slice %4 {offsets = [0, 0, 0, 128], sizes = [2, 14, 14, 128], strides = [1, 1, 1, 1]} : vector<2x14x14x256xbf16> to vector<2x14x14x128xbf16>
    %7 = arith.maximumf %5, %6 : vector<2x14x14x128xbf16>
    %c0_9 = arith.constant 0 : index
    %c0_10 = arith.constant 0 : index
    %c0_11 = arith.constant 0 : index
    %c0_12 = arith.constant 0 : index
    %8 = vector.load %arg3[%c0_9, %c0_10, %c0_11, %c0_12] : memref<2x14x14x128xbf16, #tpu.memory_space<vmem>>, vector<2x14x14x128xbf16>
    tpu.vector_store %arg3[%c0_9, %c0_10, %c0_11, %c0_12], %7 {strides = array<i32>} : memref<2x14x14x128xbf16, #tpu.memory_space<vmem>>, vector<2x14x14x128xbf16>,
    return
  }
  func.func @transform_0(%arg0: i32) -> (i32, i32, i32, i32, i32) {
    %c0_i32 = arith.constant 0 : i32
    %c0_i32_0 = arith.constant 0 : i32
    %c0_i32_1 = arith.constant 0 : i32
    %c0_i32_2 = arith.constant 0 : i32
    %c0_i32_3 = arith.constant 0 : i32
    return %arg0, %c0_i32, %c0_i32_0, %c0_i32_1, %c0_i32_2 : i32, i32, i32, i32, i32
  }
  func.func @transform_1(%arg0: i32) -> (i32, i32, i32, i32, i32) {
    %c0_i32 = arith.constant 0 : i32
    %c1_i32 = arith.constant 1 : i32
    %c0_i32_0 = arith.constant 0 : i32
    %c0_i32_1 = arith.constant 0 : i32
    %c0_i32_2 = arith.constant 0 : i32
    return %arg0, %c0_i32, %c1_i32, %c0_i32_0, %c0_i32_1 : i32, i32, i32, i32, i32
  }
  func.func @transform_2(%arg0: i32) -> (i32, i32, i32, i32) {
    %c0_i32 = arith.constant 0 : i32
    %c0_i32_0 = arith.constant 0 : i32
    %c0_i32_1 = arith.constant 0 : i32
    %c0_i32_2 = arith.constant 0 : i32
    return %arg0, %c0_i32, %c0_i32_0, %c0_i32_1 : i32, i32, i32, i32
  }
}

module attributes {stable_mosaic.version = 11 : i64} {
  func.func @_mm_bias_act_kernel(%arg0: i32, %arg1: memref<104x256xbf16, #tpu.memory_space<vmem>>, %arg2: memref<256x128xbf16, #tpu.memory_space<vmem>>, %arg3: memref<1x128xf32, #tpu.memory_space<vmem>>, %arg4: memref<104x128xbf16, #tpu.memory_space<vmem>>) attributes {dimension_semantics = [#tpu.dimension_semantics<parallel>], iteration_bounds = array<i64: 2>, scalar_prefetch = 0 : i64, scratch_operands = 0 : i64, tpu.core_type = #tpu.core_type<tc>, window_params = [{transform_indices = @transform_0, window_bounds = array<i64: 104, 256>}, {pipeline_mode = #tpu.pipeline_mode<synchronous>, transform_indices = @transform_1, window_bounds = array<i64: 256, 128>}, {pipeline_mode = #tpu.pipeline_mode<synchronous>, transform_indices = @transform_2, window_bounds = array<i64: 1, 128>}, {transform_indices = @transform_3, window_bounds = array<i64: 104, 128>}]} {
    %c0 = arith.constant 0 : index
    %c0_0 = arith.constant 0 : index
    %0 = vector.load %arg1[%c0, %c0_0] : memref<104x256xbf16, #tpu.memory_space<vmem>>, vector<104x256xbf16>
    %c0_1 = arith.constant 0 : index
    %c0_2 = arith.constant 0 : index
    %1 = vector.load %arg2[%c0_1, %c0_2] : memref<256x128xbf16, #tpu.memory_space<vmem>>, vector<256x128xbf16>
    %cst = arith.constant dense<0.000000e+00> : vector<104x128xf32>
    %2 = tpu.matmul %0, %1, %cst {dimension_numbers = #tpu.dot_dimension_numbers<[1], [0], [0], [1], [0, 0, 1, 1], [], []>} : vector<104x256xbf16>, vector<256x128xbf16>, vector<104x128xf32> -> vector<104x128xf32>
    %c0_3 = arith.constant 0 : index
    %c0_4 = arith.constant 0 : index
    %3 = vector.load %arg3[%c0_3, %c0_4] : memref<1x128xf32, #tpu.memory_space<vmem>>, vector<1x128xf32>
    %4 = vector.broadcast %3 : vector<1x128xf32> to vector<104x128xf32>
    %5 = arith.addf %2, %4 : vector<104x128xf32>
    %cst_5 = arith.constant 0.000000e+00 : f32
    %6 = vector.broadcast %cst_5 : f32 to vector<104x128xf32>
    %7 = arith.maximumf %5, %6 : vector<104x128xf32>
    %8 = arith.truncf %7 : vector<104x128xf32> to vector<104x128xbf16>
    %c0_6 = arith.constant 0 : index
    %c0_7 = arith.constant 0 : index
    %9 = vector.load %arg4[%c0_6, %c0_7] : memref<104x128xbf16, #tpu.memory_space<vmem>>, vector<104x128xbf16>
    tpu.vector_store %arg4[%c0_6, %c0_7], %8 {strides = array<i32>} : memref<104x128xbf16, #tpu.memory_space<vmem>>, vector<104x128xbf16>,
    return
  }
  func.func @transform_0(%arg0: i32) -> (i32, i32) {
    %c0_i32 = arith.constant 0 : i32
    %c0_i32_0 = arith.constant 0 : i32
    return %arg0, %c0_i32 : i32, i32
  }
  func.func @transform_1(%arg0: i32) -> (i32, i32) {
    %c0_i32 = arith.constant 0 : i32
    %c0_i32_0 = arith.constant 0 : i32
    %c0_i32_1 = arith.constant 0 : i32
    return %c0_i32, %c0_i32_0 : i32, i32
  }
  func.func @transform_2(%arg0: i32) -> (i32, i32) {
    %c0_i32 = arith.constant 0 : i32
    %c0_i32_0 = arith.constant 0 : i32
    %c0_i32_1 = arith.constant 0 : i32
    return %c0_i32, %c0_i32_0 : i32, i32
  }
  func.func @transform_3(%arg0: i32) -> (i32, i32) {
    %c0_i32 = arith.constant 0 : i32
    %c0_i32_0 = arith.constant 0 : i32
    return %arg0, %c0_i32 : i32, i32
  }
}

module attributes {stable_mosaic.version = 11 : i64} {
  func.func @_maxpool2x2_kernel(%arg0: i32, %arg1: memref<2x5x1x5x32xbf16, #tpu.memory_space<vmem>>, %arg2: memref<2x5x1x5x32xbf16, #tpu.memory_space<vmem>>, %arg3: memref<2x5x5x16xbf16, #tpu.memory_space<vmem>>) attributes {dimension_semantics = [#tpu.dimension_semantics<parallel>], iteration_bounds = array<i64: 1>, scalar_prefetch = 0 : i64, scratch_operands = 0 : i64, tpu.core_type = #tpu.core_type<tc>, window_params = [{transform_indices = @transform_0, window_bounds = array<i64: 2, 5, 1, 5, 32>}, {transform_indices = @transform_1, window_bounds = array<i64: 2, 5, 1, 5, 32>}, {transform_indices = @transform_2, window_bounds = array<i64: 2, 5, 5, 16>}]} {
    %c0 = arith.constant 0 : index
    %c0_0 = arith.constant 0 : index
    %c0_1 = arith.constant 0 : index
    %c0_2 = arith.constant 0 : index
    %c0_3 = arith.constant 0 : index
    %0 = vector.load %arg1[%c0, %c0_0, %c0_1, %c0_2, %c0_3] : memref<2x5x1x5x32xbf16, #tpu.memory_space<vmem>>, vector<2x5x1x5x32xbf16>
    %1 = vector.shape_cast %0 : vector<2x5x1x5x32xbf16> to vector<2x5x5x32xbf16>
    %c0_4 = arith.constant 0 : index
    %c0_5 = arith.constant 0 : index
    %c0_6 = arith.constant 0 : index
    %c0_7 = arith.constant 0 : index
    %c0_8 = arith.constant 0 : index
    %2 = vector.load %arg2[%c0_4, %c0_5, %c0_6, %c0_7, %c0_8] : memref<2x5x1x5x32xbf16, #tpu.memory_space<vmem>>, vector<2x5x1x5x32xbf16>
    %3 = vector.shape_cast %2 : vector<2x5x1x5x32xbf16> to vector<2x5x5x32xbf16>
    %4 = arith.maximumf %1, %3 : vector<2x5x5x32xbf16>
    %5 = vector.extract_strided_slice %4 {offsets = [0, 0, 0, 0], sizes = [2, 5, 5, 16], strides = [1, 1, 1, 1]} : vector<2x5x5x32xbf16> to vector<2x5x5x16xbf16>
    %6 = vector.extract_strided_slice %4 {offsets = [0, 0, 0, 16], sizes = [2, 5, 5, 16], strides = [1, 1, 1, 1]} : vector<2x5x5x32xbf16> to vector<2x5x5x16xbf16>
    %7 = arith.maximumf %5, %6 : vector<2x5x5x16xbf16>
    %c0_9 = arith.constant 0 : index
    %c0_10 = arith.constant 0 : index
    %c0_11 = arith.constant 0 : index
    %c0_12 = arith.constant 0 : index
    %8 = vector.load %arg3[%c0_9, %c0_10, %c0_11, %c0_12] : memref<2x5x5x16xbf16, #tpu.memory_space<vmem>>, vector<2x5x5x16xbf16>
    tpu.vector_store %arg3[%c0_9, %c0_10, %c0_11, %c0_12], %7 {strides = array<i32>} : memref<2x5x5x16xbf16, #tpu.memory_space<vmem>>, vector<2x5x5x16xbf16>,
    return
  }
  func.func @transform_0(%arg0: i32) -> (i32, i32, i32, i32, i32) {
    %c0_i32 = arith.constant 0 : i32
    %c0_i32_0 = arith.constant 0 : i32
    %c0_i32_1 = arith.constant 0 : i32
    %c0_i32_2 = arith.constant 0 : i32
    %c0_i32_3 = arith.constant 0 : i32
    return %arg0, %c0_i32, %c0_i32_0, %c0_i32_1, %c0_i32_2 : i32, i32, i32, i32, i32
  }
  func.func @transform_1(%arg0: i32) -> (i32, i32, i32, i32, i32) {
    %c0_i32 = arith.constant 0 : i32
    %c1_i32 = arith.constant 1 : i32
    %c0_i32_0 = arith.constant 0 : i32
    %c0_i32_1 = arith.constant 0 : i32
    %c0_i32_2 = arith.constant 0 : i32
    return %arg0, %c0_i32, %c1_i32, %c0_i32_0, %c0_i32_1 : i32, i32, i32, i32, i32
  }
  func.func @transform_2(%arg0: i32) -> (i32, i32, i32, i32) {
    %c0_i32 = arith.constant 0 : i32
    %c0_i32_0 = arith.constant 0 : i32
    %c0_i32_1 = arith.constant 0 : i32
    %c0_i32_2 = arith.constant 0 : i32
    return %arg0, %c0_i32, %c0_i32_0, %c0_i32_1 : i32, i32, i32, i32
  }
}

module attributes {stable_mosaic.version = 11 : i64} {
  func.func @_classifier_kernel(%arg0: i32, %arg1: memref<2x512xbf16, #tpu.memory_space<vmem>>, %arg2: memref<512x128xbf16, #tpu.memory_space<vmem>>, %arg3: memref<1x128xf32, #tpu.memory_space<vmem>>, %arg4: memref<128x128xbf16, #tpu.memory_space<vmem>>, %arg5: memref<1x128xf32, #tpu.memory_space<vmem>>, %arg6: memref<128x128xbf16, #tpu.memory_space<vmem>>, %arg7: memref<1x128xf32, #tpu.memory_space<vmem>>, %arg8: memref<2x128xf32, #tpu.memory_space<vmem>>) attributes {dimension_semantics = [#tpu.dimension_semantics<parallel>], iteration_bounds = array<i64: 1>, scalar_prefetch = 0 : i64, scratch_operands = 0 : i64, tpu.core_type = #tpu.core_type<tc>, window_params = [{transform_indices = @transform_0, window_bounds = array<i64: 2, 512>}, {pipeline_mode = #tpu.pipeline_mode<synchronous>, transform_indices = @transform_1, window_bounds = array<i64: 512, 128>}, {pipeline_mode = #tpu.pipeline_mode<synchronous>, transform_indices = @transform_2, window_bounds = array<i64: 1, 128>}, {pipeline_mode = #tpu.pipeline_mode<synchronous>, transform_indices = @transform_3, window_bounds = array<i64: 128, 128>}, {pipeline_mode = #tpu.pipeline_mode<synchronous>, transform_indices = @transform_4, window_bounds = array<i64: 1, 128>}, {pipeline_mode = #tpu.pipeline_mode<synchronous>, transform_indices = @transform_5, window_bounds = array<i64: 128, 128>}, {pipeline_mode = #tpu.pipeline_mode<synchronous>, transform_indices = @transform_6, window_bounds = array<i64: 1, 128>}, {transform_indices = @transform_7, window_bounds = array<i64: 2, 128>}]} {
    %c0 = arith.constant 0 : index
    %c0_0 = arith.constant 0 : index
    %0 = vector.load %arg1[%c0, %c0_0] : memref<2x512xbf16, #tpu.memory_space<vmem>>, vector<2x512xbf16>
    %c0_1 = arith.constant 0 : index
    %c0_2 = arith.constant 0 : index
    %1 = vector.load %arg2[%c0_1, %c0_2] : memref<512x128xbf16, #tpu.memory_space<vmem>>, vector<512x128xbf16>
    %cst = arith.constant dense<0.000000e+00> : vector<2x128xf32>
    %2 = tpu.matmul %0, %1, %cst {dimension_numbers = #tpu.dot_dimension_numbers<[1], [0], [0], [1], [0, 0, 1, 1], [], []>} : vector<2x512xbf16>, vector<512x128xbf16>, vector<2x128xf32> -> vector<2x128xf32>
    %c0_3 = arith.constant 0 : index
    %c0_4 = arith.constant 0 : index
    %3 = vector.load %arg3[%c0_3, %c0_4] : memref<1x128xf32, #tpu.memory_space<vmem>>, vector<1x128xf32>
    %4 = vector.broadcast %3 : vector<1x128xf32> to vector<2x128xf32>
    %5 = arith.addf %2, %4 : vector<2x128xf32>
    %cst_5 = arith.constant 0.000000e+00 : f32
    %6 = vector.broadcast %cst_5 : f32 to vector<2x128xf32>
    %7 = arith.maximumf %5, %6 : vector<2x128xf32>
    %8 = arith.truncf %7 : vector<2x128xf32> to vector<2x128xbf16>
    %c0_6 = arith.constant 0 : index
    %c0_7 = arith.constant 0 : index
    %9 = vector.load %arg4[%c0_6, %c0_7] : memref<128x128xbf16, #tpu.memory_space<vmem>>, vector<128x128xbf16>
    %cst_8 = arith.constant dense<0.000000e+00> : vector<2x128xf32>
    %10 = tpu.matmul %8, %9, %cst_8 {dimension_numbers = #tpu.dot_dimension_numbers<[1], [0], [0], [1], [0, 0, 1, 1], [], []>} : vector<2x128xbf16>, vector<128x128xbf16>, vector<2x128xf32> -> vector<2x128xf32>
    %c0_9 = arith.constant 0 : index
    %c0_10 = arith.constant 0 : index
    %11 = vector.load %arg5[%c0_9, %c0_10] : memref<1x128xf32, #tpu.memory_space<vmem>>, vector<1x128xf32>
    %12 = vector.broadcast %11 : vector<1x128xf32> to vector<2x128xf32>
    %13 = arith.addf %10, %12 : vector<2x128xf32>
    %cst_11 = arith.constant 0.000000e+00 : f32
    %14 = vector.broadcast %cst_11 : f32 to vector<2x128xf32>
    %15 = arith.maximumf %13, %14 : vector<2x128xf32>
    %16 = arith.truncf %15 : vector<2x128xf32> to vector<2x128xbf16>
    %c0_12 = arith.constant 0 : index
    %c0_13 = arith.constant 0 : index
    %17 = vector.load %arg6[%c0_12, %c0_13] : memref<128x128xbf16, #tpu.memory_space<vmem>>, vector<128x128xbf16>
    %cst_14 = arith.constant dense<0.000000e+00> : vector<2x128xf32>
    %18 = tpu.matmul %16, %17, %cst_14 {dimension_numbers = #tpu.dot_dimension_numbers<[1], [0], [0], [1], [0, 0, 1, 1], [], []>} : vector<2x128xbf16>, vector<128x128xbf16>, vector<2x128xf32> -> vector<2x128xf32>
    %c0_15 = arith.constant 0 : index
    %c0_16 = arith.constant 0 : index
    %19 = vector.load %arg7[%c0_15, %c0_16] : memref<1x128xf32, #tpu.memory_space<vmem>>, vector<1x128xf32>
    %20 = vector.broadcast %19 : vector<1x128xf32> to vector<2x128xf32>
    %21 = arith.addf %18, %20 : vector<2x128xf32>
    %22 = tpu.iota {dimensions = array<i32: 1>} : vector<2x128xi32>
    %c10_i32 = arith.constant 10 : i32
    %23 = vector.broadcast %c10_i32 : i32 to vector<2x128xi32>
    %24 = arith.cmpi slt, %22, %23 : vector<2x128xi32>
    %cst_17 = arith.constant -1.000000e+30 : f32
    %25 = vector.broadcast %cst_17 : f32 to vector<2x128xf32>
    %26 = arith.select %24, %21, %25 : vector<2x128xi1>, vector<2x128xf32>
    %cst_18 = arith.constant dense<0xFF800000> : vector<2xf32>
    %27 = vector.multi_reduction <maximumf>, %26, %cst_18 [1] : vector<2x128xf32> to vector<2xf32>
    %28 = vector.shape_cast %27 : vector<2xf32> to vector<2x1xf32>
    %29 = vector.broadcast %28 : vector<2x1xf32> to vector<2x128xf32>
    %30 = arith.subf %26, %29 : vector<2x128xf32>
    %31 = math.exp %30 : vector<2x128xf32>
    %cst_19 = arith.constant dense<0.000000e+00> : vector<2xf32>
    %32 = vector.multi_reduction <add>, %31, %cst_19 [1] : vector<2x128xf32> to vector<2xf32>
    %33 = vector.shape_cast %32 : vector<2xf32> to vector<2x1xf32>
    %34 = vector.broadcast %33 : vector<2x1xf32> to vector<2x128xf32>
    %35 = arith.divf %31, %34 : vector<2x128xf32>
    %c0_20 = arith.constant 0 : index
    %c0_21 = arith.constant 0 : index
    %36 = vector.load %arg8[%c0_20, %c0_21] : memref<2x128xf32, #tpu.memory_space<vmem>>, vector<2x128xf32>
    tpu.vector_store %arg8[%c0_20, %c0_21], %35 {strides = array<i32>} : memref<2x128xf32, #tpu.memory_space<vmem>>, vector<2x128xf32>,
    return
  }
  func.func @transform_0(%arg0: i32) -> (i32, i32) {
    %c0_i32 = arith.constant 0 : i32
    %c0_i32_0 = arith.constant 0 : i32
    return %arg0, %c0_i32 : i32, i32
  }
  func.func @transform_1(%arg0: i32) -> (i32, i32) {
    %c0_i32 = arith.constant 0 : i32
    %c0_i32_0 = arith.constant 0 : i32
    %c0_i32_1 = arith.constant 0 : i32
    return %c0_i32, %c0_i32_0 : i32, i32
  }
  func.func @transform_2(%arg0: i32) -> (i32, i32) {
    %c0_i32 = arith.constant 0 : i32
    %c0_i32_0 = arith.constant 0 : i32
    %c0_i32_1 = arith.constant 0 : i32
    return %c0_i32, %c0_i32_0 : i32, i32
  }
  func.func @transform_3(%arg0: i32) -> (i32, i32) {
    %c0_i32 = arith.constant 0 : i32
    %c0_i32_0 = arith.constant 0 : i32
    %c0_i32_1 = arith.constant 0 : i32
    return %c0_i32, %c0_i32_0 : i32, i32
  }
  func.func @transform_4(%arg0: i32) -> (i32, i32) {
    %c0_i32 = arith.constant 0 : i32
    %c0_i32_0 = arith.constant 0 : i32
    %c0_i32_1 = arith.constant 0 : i32
    return %c0_i32, %c0_i32_0 : i32, i32
  }
  func.func @transform_5(%arg0: i32) -> (i32, i32) {
    %c0_i32 = arith.constant 0 : i32
    %c0_i32_0 = arith.constant 0 : i32
    %c0_i32_1 = arith.constant 0 : i32
    return %c0_i32, %c0_i32_0 : i32, i32
  }
  func.func @transform_6(%arg0: i32) -> (i32, i32) {
    %c0_i32 = arith.constant 0 : i32
    %c0_i32_0 = arith.constant 0 : i32
    %c0_i32_1 = arith.constant 0 : i32
    return %c0_i32, %c0_i32_0 : i32, i32
  }
  func.func @transform_7(%arg0: i32) -> (i32, i32) {
    %c0_i32 = arith.constant 0 : i32
    %c0_i32_0 = arith.constant 0 : i32
    return %arg0, %c0_i32 : i32, i32
  }
}

</mosaic_0001>

<llo_original>
// kernel: net_forward.5
$region0: #{net_forward.5}
  #allocation0 [shape = 'u32[]', space=smem, size = 0x4, offset = 0x4, fixed_abs, tag = 'smem constant byte address 0x4 - core index']
  #allocation1 [shape = 'u32[144,128]{1,0:T(1,128)}', space=vmem, size = 0x12000, scoped, tag = 'internal scratch']
  %s0 = inlined_call_operand.vmem [shape: bf16[1568,128], index: 0, kind: input, shape index: {}]
  %s1 = inlined_call_operand.vmem [shape: bf16[128,128], index: 1, kind: input, shape index: {}]
  %s2 = inlined_call_operand.vmem [shape: f32[1,128], index: 2, kind: input, shape index: {}]
  %s3 = inlined_call_operand.vmem [shape: bf16[1568,128], index: 3, kind: output, shape index: {}]
  %s4 = sld [smem:[#allocation0]]
  $region45: #{net_forward.5} parent=0
    _
  %s6 = ssub.s32 1, %s4
  %s7 = scalar_select 0, %s6, %s4
  loop: start=0, step=1, limit=4
  $region2: #{net_forward.5} parent=0 // loop_pre_header
    _
  $region3: #{net_forward.5} parent=0 // loop_header
    %s9 = sphi 0, %s13
    %p10 = scmp.ge.s32.totalorder %s9, 4
    %s19 = sphi 0, %s21
    %s22 = sphi 0, %s19
    %s23 = sphi 0, %s22
    %s39 = sphi 0, %s23
    %s43 = sphi 0, %s43
    %s45 = sphi 0, %s43
    %s46 = sphi 0, %s45
    %s60 = sphi 0, %s46
    %s64 = sphi 0, %s64
    %s66 = sphi 0, %s64
    %s67 = sphi 0, %s66
    %s81 = sphi 0, %s67
    %s87 = sphi 0, %s89
    %s90 = sphi 0, %s87
    %s91 = sphi 0, %s90
    %s107 = sphi 0, %s91
  $region4: #{net_forward.5} parent=0 // loop_header_branch
    %12 = sbr.rel (%p10) target = $region8
  $region5: #{net_forward.5} parent=0 // loop_body
    %s14 = ssub.s32 %s9, 1
    %s15 = ssub.s32 %s9, 2
    %s16 = sadd.s32 %s9, 1
    %s17 = ssub.s32 %s9, %s16
    %p18 = scmp.eq.s32.totalorder %s17, 0
    %s20 = sadd.s32 %s19, 1
    %s21 = scalar_select %p18, %s19, %s20
    %p24 = pneg %p18
    %p25 = scmp.eq.s32.totalorder %s9, 1
    %p26 = por %p24, %p25
    %p27 = scmp.ne.s32.totalorder %s19, %s22
    %p28 = scmp.eq.s32.totalorder %s9, 0
    %p29 = por %p27, %p28
    %p30 = scmp.ne.s32.totalorder %s19, %s22
    %p31 = scmp.eq.s32.totalorder %s14, 1
    %p32 = por %p30, %p31
    %p33 = scmp.ne.s32.totalorder %s22, %s23
    %p34 = scmp.eq.s32.totalorder %s14, 0
    %p35 = por %p33, %p34
    %p36 = scmp.ne.s32.totalorder %s22, %s23
    %p37 = scmp.eq.s32.totalorder %s15, 1
    %p38 = por %p36, %p37
    %p40 = scmp.ne.s32.totalorder %s23, %s39
    %p41 = scmp.eq.s32.totalorder %s15, 0
    %p42 = por %p40, %p41
    %s44 = sadd.s32 %s43, 1
    %p47 = scmp.eq.s32.totalorder %s9, 1
    %p48 = scmp.ne.s32.totalorder %s43, %s45
    %p49 = scmp.eq.s32.totalorder %s9, 0
    %p50 = por %p48, %p49
    %p51 = scmp.ne.s32.totalorder %s43, %s45
    %p52 = scmp.eq.s32.totalorder %s14, 1
    %p53 = por %p51, %p52
    %p54 = scmp.ne.s32.totalorder %s45, %s46
    %p55 = scmp.eq.s32.totalorder %s14, 0
    %p56 = por %p54, %p55
    %p57 = scmp.ne.s32.totalorder %s45, %s46
    %p58 = scmp.eq.s32.totalorder %s15, 1
    %p59 = por %p57, %p58
    %p61 = scmp.ne.s32.totalorder %s46, %s60
    %p62 = scmp.eq.s32.totalorder %s15, 0
    %p63 = por %p61, %p62
    %s65 = sadd.s32 %s64, 1
    %p68 = scmp.eq.s32.totalorder %s9, 1
    %p69 = scmp.ne.s32.totalorder %s64, %s66
    %p70 = scmp.eq.s32.totalorder %s9, 0
    %p71 = por %p69, %p70
    %p72 = scmp.ne.s32.totalorder %s64, %s66
    %p73 = scmp.eq.s32.totalorder %s14, 1
    %p74 = por %p72, %p73
    %p75 = scmp.ne.s32.totalorder %s66, %s67
    %p76 = scmp.eq.s32.totalorder %s14, 0
    %p77 = por %p75, %p76
    %p78 = scmp.ne.s32.totalorder %s66, %s67
    %p79 = scmp.eq.s32.totalorder %s15, 1
    %p80 = por %p78, %p79
    %p82 = scmp.ne.s32.totalorder %s67, %s81
    %p83 = scmp.eq.s32.totalorder %s15, 0
    %p84 = por %p82, %p83
    %s85 = ssub.s32 %s9, %s16
    %p86 = scmp.eq.s32.totalorder %s85, 0
    %s88 = sadd.s32 %s87, 1
    %s89 = scalar_select %p86, %s87, %s88
    %p92 = pneg %p86
    %p93 = scmp.eq.s32.totalorder %s9, 1
    %p94 = por %p92, %p93
    %p95 = scmp.ne.s32.totalorder %s87, %s90
    %p96 = scmp.eq.s32.totalorder %s9, 0
    %p97 = por %p95, %p96
    %p98 = scmp.ne.s32.totalorder %s87, %s90
    %p99 = scmp.eq.s32.totalorder %s14, 1
    %p100 = por %p98, %p99
    %p101 = scmp.ne.s32.totalorder %s90, %s91
    %p102 = scmp.eq.s32.totalorder %s14, 0
    %p103 = por %p101, %p102
    %p104 = scmp.ne.s32.totalorder %s90, %s91
    %p105 = scmp.eq.s32.totalorder %s15, 1
    %p106 = por %p104, %p105
    %p108 = scmp.ne.s32.totalorder %s91, %s107
    %p109 = scmp.eq.s32.totalorder %s15, 0
    %p110 = por %p108, %p109
    %p111 = scmp.le.s32.totalorder 1, %s9
    %p112 = scmp.lt.s32.totalorder %s9, 3
    %p113 = pnand %p111, %p112
    %p114 = pneg %p113
    // Predicated region
    $region9: #{net_forward.5} parent=5 // pred_check
      _
    $region10: #{net_forward.5} parent=5 // pred_check_branch
      %116 = sbr.rel (%p113) target = $region12
    $region11: #{net_forward.5} parent=5 // pred_region
      %s117 = ssub.s32 %s9, 1
      // Predicated region
      $region13: #{net_forward.5} parent=11 // pred_check
        %p118 = pneg %p56
      $region14: #{net_forward.5} parent=11 // pred_check_branch
        %120 = sbr.rel (%p118) target = $region16
      $region15: #{net_forward.5} parent=11 // pred_region
        _
      $region16: #{net_forward.5} parent=11 // pred_fallthru
        _
      // Predicated region
      $region17: #{net_forward.5} parent=11 // pred_check
        %p121 = pneg %p77
      $region18: #{net_forward.5} parent=11 // pred_check_branch
        %123 = sbr.rel (%p121) target = $region20
      $region19: #{net_forward.5} parent=11 // pred_region
        _
      $region20: #{net_forward.5} parent=11 // pred_fallthru
        _
    $region12: #{net_forward.5} parent=5 // pred_fallthru
      _
    %p124 = scmp.lt.s32.totalorder %s9, 2
    // Predicated region
    $region21: #{net_forward.5} parent=5 // pred_check
      %p125 = pneg %p124
    $region22: #{net_forward.5} parent=5 // pred_check_branch
      %127 = sbr.rel (%p125) target = $region24
    $region23: #{net_forward.5} parent=5 // pred_region
      // Predicated region
      $region25: #{net_forward.5} parent=23 // pred_check
        %p128 = pneg %p29
      $region26: #{net_forward.5} parent=23 // pred_check_branch
        %130 = sbr.rel (%p128) target = $region28
      $region27: #{net_forward.5} parent=23 // pred_region
        %s131 = smul.u32 98, %s9
        %p132 = scmp.lt.s32.totalorder %s131, 195
        %s133 = scalar_select %p132, %s131, 195
        %s134 = smul.addr %s133, 4
        %s135 = scalar_lea.vmem %s0, %s134
        %s136 = smul.u32 98, %s9
      $region28: #{net_forward.5} parent=23 // pred_fallthru
        _
    $region24: #{net_forward.5} parent=5 // pred_fallthru
      _
    %p137 = scmp.le.s32.totalorder 1, %s9
    %p138 = scmp.lt.s32.totalorder %s9, 3
    %p139 = pnand %p137, %p138
    %p140 = pneg %p139
    // Predicated region
    $region29: #{net_forward.5} parent=5 // pred_check
      _
    $region30: #{net_forward.5} parent=5 // pred_check_branch
      %142 = sbr.rel (%p139) target = $region32
    $region31: #{net_forward.5} parent=5 // pred_region
      %s143 = ssub.s32 %s9, 1
      %s144 = smul.u32 98, %s14
      %p145 = scmp.lt.s32.totalorder %s144, 195
      %s146 = scalar_select %p145, %s144, 195
      %s147 = smul.addr %s146, 4
      %s148 = scalar_lea.vmem %s0, %s147
      %p149 = pneg %p35
      %p150 = pneg %p32
      %p151 = pneg %p56
      %p152 = pneg %p53
      %p153 = pneg %p77
      %p154 = pneg %p74
      %p155 = pneg %p103
      %p156 = pneg %p100
      %s157 = smul.u32 98, %s14
      %p158 = scmp.lt.s32.totalorder %s157, 195
      %s159 = scalar_select %p158, %s157, 195
      %s160 = smul.addr %s159, 4
      %s161 = scalar_lea.vmem %s3, %s160
      %s162 = smul.u32 98, %s14
      %p163 = scmp.lt.s32.totalorder %s162, 195
      %s164 = scalar_select %p163, %s162, 195
      %s165 = smul.addr %s164, 4
      %s166 = scalar_lea.vmem %s0, %s165
      %s167 = smul.u32 98, %s14
      %s168 = smul.u32 98, %s14
      %p169 = scmp.lt.s32.totalorder %s168, 195
      %s170 = scalar_select %p169, %s168, 195
      %s171 = smul.addr %s170, 4
      %s172 = scalar_lea.vmem %s3, %s171
      %s173 = smul.u32 98, %s14
      %v175 = vld [vmem:[%s166] sm:$0xf]
      %v176 = vld [vmem:[%s166 + $0x4] sm:$0xf]
      %v177 = vld [vmem:[%s166 + $0x8] sm:$0xf]
      %v178 = vld [vmem:[%s166 + $0xc] sm:$0xf]
      %v179 = vld [vmem:[%s166 + $0x10] sm:$0xf]
      %v180 = vld [vmem:[%s166 + $0x14] sm:$0xf]
      %v181 = vld [vmem:[%s166 + $0x18] sm:$0xf]
      %v182 = vld [vmem:[%s166 + $0x1c] sm:$0xf]
      %v183 = vld [vmem:[%s166 + $0x20] sm:$0xf]
      %v184 = vld [vmem:[%s166 + $0x24] sm:$0xf]
      %v185 = vld [vmem:[%s166 + $0x28] sm:$0xf]
      %v186 = vld [vmem:[%s166 + $0x2c] sm:$0xf]
      %v187 = vld [vmem:[%s166 + $0x30] sm:$0xf]
      %v188 = vld [vmem:[%s166 + $0x34] sm:$0xf]
      %v189 = vld [vmem:[%s166 + $0x38] sm:$0xf]
      %v190 = vld [vmem:[%s166 + $0x3c] sm:$0xf]
      %v191 = vld [vmem:[%s166 + $0x40] sm:$0xf]
      %v192 = vld [vmem:[%s166 + $0x44] sm:$0xf]
      %v193 = vld [vmem:[%s166 + $0x48] sm:$0xf]
      %v194 = vld [vmem:[%s166 + $0x4c] sm:$0xf]
      %v195 = vld [vmem:[%s166 + $0x50] sm:$0xf]
      %v196 = vld [vmem:[%s166 + $0x54] sm:$0xf]
      %v197 = vld [vmem:[%s166 + $0x58] sm:$0xf]
      %v198 = vld [vmem:[%s166 + $0x5c] sm:$0xf]
      %v199 = vld [vmem:[%s166 + $0x60] sm:$0xf]
      %v200 = vld [vmem:[%s166 + $0x64] sm:$0xf]
      %v201 = vld [vmem:[%s166 + $0x68] sm:$0xf]
      %v202 = vld [vmem:[%s166 + $0x6c] sm:$0xf]
      %v203 = vld [vmem:[%s166 + $0x70] sm:$0xf]
      %v204 = vld [vmem:[%s166 + $0x74] sm:$0xf]
      %v205 = vld [vmem:[%s166 + $0x78] sm:$0xf]
      %v206 = vld [vmem:[%s166 + $0x7c] sm:$0xf]
      %v207 = vld [vmem:[%s166 + $0x80] sm:$0xf]
      %v208 = vld [vmem:[%s166 + $0x84] sm:$0xf]
      %v209 = vld [vmem:[%s166 + $0x88] sm:$0xf]
      %v210 = vld [vmem:[%s166 + $0x8c] sm:$0xf]
      %v211 = vld [vmem:[%s166 + $0x90] sm:$0xf]
      %v212 = vld [vmem:[%s166 + $0x94] sm:$0xf]
      %v213 = vld [vmem:[%s166 + $0x98] sm:$0xf]
      %v214 = vld [vmem:[%s166 + $0x9c] sm:$0xf]
      %v215 = vld [vmem:[%s166 + $0xa0] sm:$0xf]
      %v216 = vld [vmem:[%s166 + $0xa4] sm:$0xf]
      %v217 = vld [vmem:[%s166 + $0xa8] sm:$0xf]
      %v218 = vld [vmem:[%s166 + $0xac] sm:$0xf]
      %v219 = vld [vmem:[%s166 + $0xb0] sm:$0xf]
      %v220 = vld [vmem:[%s166 + $0xb4] sm:$0xf]
      %v221 = vld [vmem:[%s166 + $0xb8] sm:$0xf]
      %v222 = vld [vmem:[%s166 + $0xbc] sm:$0xf]
      %v223 = vld [vmem:[%s166 + $0xc0] sm:$0xf]
      %v224 = vld [vmem:[%s166 + $0xc4] sm:$0xf]
      %v225 = vld [vmem:[%s166 + $0xc8] sm:$0xf]
      %v226 = vld [vmem:[%s166 + $0xcc] sm:$0xf]
      %v227 = vld [vmem:[%s166 + $0xd0] sm:$0xf]
      %v228 = vld [vmem:[%s166 + $0xd4] sm:$0xf]
      %v229 = vld [vmem:[%s166 + $0xd8] sm:$0xf]
      %v230 = vld [vmem:[%s166 + $0xdc] sm:$0xf]
      %v231 = vld [vmem:[%s166 + $0xe0] sm:$0xf]
      %v232 = vld [vmem:[%s166 + $0xe4] sm:$0xf]
      %v233 = vld [vmem:[%s166 + $0xe8] sm:$0xf]
      %v234 = vld [vmem:[%s166 + $0xec] sm:$0xf]
      %v235 = vld [vmem:[%s166 + $0xf0] sm:$0xf]
      %v236 = vld [vmem:[%s166 + $0xf4] sm:$0xf]
      %v237 = vld [vmem:[%s166 + $0xf8] sm:$0xf]
      %v238 = vld [vmem:[%s166 + $0xfc] sm:$0xf]
      %v239 = vld [vmem:[%s166 + $0x100] sm:$0xf]
      %v240 = vld [vmem:[%s166 + $0x104] sm:$0xf]
      %v241 = vld [vmem:[%s166 + $0x108] sm:$0xf]
      %v242 = vld [vmem:[%s166 + $0x10c] sm:$0xf]
      %v243 = vld [vmem:[%s166 + $0x110] sm:$0xf]
      %v244 = vld [vmem:[%s166 + $0x114] sm:$0xf]
      %v245 = vld [vmem:[%s166 + $0x118] sm:$0xf]
      %v246 = vld [vmem:[%s166 + $0x11c] sm:$0xf]
      %v247 = vld [vmem:[%s166 + $0x120] sm:$0xf]
      %v248 = vld [vmem:[%s166 + $0x124] sm:$0xf]
      %v249 = vld [vmem:[%s166 + $0x128] sm:$0xf]
      %v250 = vld [vmem:[%s166 + $0x12c] sm:$0xf]
      %v251 = vld [vmem:[%s166 + $0x130] sm:$0xf]
      %v252 = vld [vmem:[%s166 + $0x134] sm:$0xf]
      %v253 = vld [vmem:[%s166 + $0x138] sm:$0xf]
      %v254 = vld [vmem:[%s166 + $0x13c] sm:$0xf]
      %v255 = vld [vmem:[%s166 + $0x140] sm:$0xf]
      %v256 = vld [vmem:[%s166 + $0x144] sm:$0xf]
      %v257 = vld [vmem:[%s166 + $0x148] sm:$0xf]
      %v258 = vld [vmem:[%s166 + $0x14c] sm:$0xf]
      %v259 = vld [vmem:[%s166 + $0x150] sm:$0xf]
      %v260 = vld [vmem:[%s166 + $0x154] sm:$0xf]
      %v261 = vld [vmem:[%s166 + $0x158] sm:$0xf]
      %v262 = vld [vmem:[%s166 + $0x15c] sm:$0xf]
      %v263 = vld [vmem:[%s166 + $0x160] sm:$0xf]
      %v264 = vld [vmem:[%s166 + $0x164] sm:$0xf]
      %v265 = vld [vmem:[%s166 + $0x168] sm:$0xf]
      %v266 = vld [vmem:[%s166 + $0x16c] sm:$0xf]
      %v267 = vld [vmem:[%s166 + $0x170] sm:$0xf]
      %v268 = vld [vmem:[%s166 + $0x174] sm:$0xf]
      %v269 = vld [vmem:[%s166 + $0x178] sm:$0xf]
      %v270 = vld [vmem:[%s166 + $0x17c] sm:$0xf]
      %v271 = vld [vmem:[%s166 + $0x180] sm:$0xf]
      %v272 = vld [vmem:[%s166 + $0x184] sm:$0xf]
      %v273 = vld [vmem:[%s1] sm:$0xf]
      %v274 = vld [vmem:[%s1 + $0x4] sm:$0xf]
      %v275 = vld [vmem:[%s1 + $0x8] sm:$0xf]
      %v276 = vld [vmem:[%s1 + $0xc] sm:$0xf]
      %v277 = vld [vmem:[%s1 + $0x10] sm:$0xf]
      %v278 = vld [vmem:[%s1 + $0x14] sm:$0xf]
      %v279 = vld [vmem:[%s1 + $0x18] sm:$0xf]
      %v280 = vld [vmem:[%s1 + $0x1c] sm:$0xf]
      %v281 = vld [vmem:[%s1 + $0x20] sm:$0xf]
      %v282 = vld [vmem:[%s1 + $0x24] sm:$0xf]
      %v283 = vld [vmem:[%s1 + $0x28] sm:$0xf]
      %v284 = vld [vmem:[%s1 + $0x2c] sm:$0xf]
      %v285 = vld [vmem:[%s1 + $0x30] sm:$0xf]
      %v286 = vld [vmem:[%s1 + $0x34] sm:$0xf]
      %v287 = vld [vmem:[%s1 + $0x38] sm:$0xf]
      %v288 = vld [vmem:[%s1 + $0x3c] sm:$0xf]
      %v289 = vld [vmem:[%s2] sm:$0x1]
      %v291 = vlaneseq
      %v292 = vshrl.u32 %v291, 7
      %v293 = vsub.s32 0, %v292
      %v294 = vrot.slane %v289, %v293
      %v394 = vunpack.c.l.b16 %v175
      %v395 = vunpack.c.l.b16 %v176
      %v396 = vunpack.c.l.b16 %v177
      %v397 = vunpack.c.l.b16 %v178
      %v398 = vunpack.c.l.b16 %v179
      %v399 = vunpack.c.l.b16 %v180
      %v400 = vunpack.c.l.b16 %v181
      %v401 = vunpack.c.l.b16 %v182
      %v402 = vunpack.c.l.b16 %v183
      %v403 = vunpack.c.l.b16 %v184
      %v404 = vunpack.c.l.b16 %v185
      %v405 = vunpack.c.l.b16 %v186
      %v406 = vunpack.c.l.b16 %v187
      %v407 = vunpack.c.l.b16 %v188
      %v408 = vunpack.c.l.b16 %v189
      %v409 = vunpack.c.l.b16 %v190
      %v410 = vunpack.c.l.b16 %v191
      %v411 = vunpack.c.l.b16 %v192
      %v412 = vunpack.c.l.b16 %v193
      %v413 = vunpack.c.l.b16 %v194
      %v414 = vunpack.c.l.b16 %v195
      %v415 = vunpack.c.l.b16 %v196
      %v416 = vunpack.c.l.b16 %v197
      %v417 = vunpack.c.l.b16 %v198
      %v418 = vunpack.c.l.b16 %v199
      %v419 = vunpack.c.l.b16 %v200
      %v420 = vunpack.c.l.b16 %v201
      %v421 = vunpack.c.l.b16 %v202
      %v422 = vunpack.c.l.b16 %v203
      %v423 = vunpack.c.l.b16 %v204
      %v424 = vunpack.c.l.b16 %v205
      %v425 = vunpack.c.l.b16 %v206
      %v426 = vunpack.c.l.b16 %v207
      %v427 = vunpack.c.l.b16 %v208
      %v428 = vunpack.c.l.b16 %v209
      %v429 = vunpack.c.l.b16 %v210
      %v430 = vunpack.c.l.b16 %v211
      %v431 = vunpack.c.l.b16 %v212
      %v432 = vunpack.c.l.b16 %v213
      %v433 = vunpack.c.l.b16 %v214
      %v434 = vunpack.c.l.b16 %v215
      %v435 = vunpack.c.l.b16 %v216
      %v436 = vunpack.c.l.b16 %v217
      %v437 = vunpack.c.l.b16 %v218
      %v438 = vunpack.c.l.b16 %v219
      %v439 = vunpack.c.l.b16 %v220
      %v440 = vunpack.c.l.b16 %v221
      %v441 = vunpack.c.l.b16 %v222
      %v442 = vunpack.c.l.b16 %v223
      %v443 = vunpack.c.l.b16 %v224
      %v444 = vunpack.c.l.b16 %v225
      %v445 = vunpack.c.l.b16 %v226
      %v446 = vunpack.c.l.b16 %v227
      %v447 = vunpack.c.l.b16 %v228
      %v448 = vunpack.c.l.b16 %v229
      %v449 = vunpack.c.l.b16 %v230
      %v450 = vunpack.c.l.b16 %v231
      %v451 = vunpack.c.l.b16 %v232
      %v452 = vunpack.c.l.b16 %v233
      %v453 = vunpack.c.l.b16 %v234
      %v454 = vunpack.c.l.b16 %v235
      %v455 = vunpack.c.l.b16 %v236
      %v456 = vunpack.c.l.b16 %v237
      %v457 = vunpack.c.l.b16 %v238
      %v458 = vunpack.c.l.b16 %v239
      %v459 = vunpack.c.l.b16 %v240
      %v460 = vunpack.c.l.b16 %v241
      %v461 = vunpack.c.l.b16 %v242
      %v462 = vunpack.c.l.b16 %v243
      %v463 = vunpack.c.l.b16 %v244
      %v464 = vunpack.c.l.b16 %v245
      %v465 = vunpack.c.l.b16 %v246
      %v466 = vunpack.c.l.b16 %v247
      %v467 = vunpack.c.l.b16 %v248
      %v468 = vunpack.c.l.b16 %v249
      %v469 = vunpack.c.l.b16 %v250
      %v470 = vunpack.c.l.b16 %v251
      %v471 = vunpack.c.l.b16 %v252
      %v472 = vunpack.c.l.b16 %v253
      %v473 = vunpack.c.l.b16 %v254
      %v474 = vunpack.c.l.b16 %v255
      %v475 = vunpack.c.l.b16 %v256
      %v476 = vunpack.c.l.b16 %v257
      %v477 = vunpack.c.l.b16 %v258
      %v478 = vunpack.c.l.b16 %v259
      %v479 = vunpack.c.l.b16 %v260
      %v480 = vunpack.c.l.b16 %v261
      %v481 = vunpack.c.l.b16 %v262
      %v482 = vunpack.c.l.b16 %v263
      %v483 = vunpack.c.l.b16 %v264
      %v484 = vunpack.c.l.b16 %v265
      %v485 = vunpack.c.l.b16 %v266
      %v486 = vunpack.c.l.b16 %v267
      %v487 = vunpack.c.l.b16 %v268
      %v488 = vunpack.c.l.b16 %v269
      %v489 = vunpack.c.l.b16 %v270
      %v490 = vunpack.c.l.b16 %v271
      %v491 = vunpack.c.l.b16 %v272
      %v492 = vpack.c.b16 %v395, %v394
      %v493 = vpack.c.b16 %v397, %v396
      %v494 = vpack.c.b16 %v399, %v398
      %v495 = vpack.c.b16 %v401, %v400
      %v496 = vpack.c.b16 %v403, %v402
      %v497 = vpack.c.b16 %v405, %v404
      %v498 = vpack.c.b16 %v407, %v406
      %v499 = vpack.c.b16 %v409, %v408
      %v500 = vpack.c.b16 %v411, %v410
      %v501 = vpack.c.b16 %v413, %v412
      %v502 = vpack.c.b16 %v415, %v414
      %v503 = vpack.c.b16 %v417, %v416
      %v504 = vpack.c.b16 %v419, %v418
      %v505 = vpack.c.b16 %v421, %v420
      %v506 = vpack.c.b16 %v423, %v422
      %v507 = vpack.c.b16 %v425, %v424
      %v508 = vpack.c.b16 %v427, %v426
      %v509 = vpack.c.b16 %v429, %v428
      %v510 = vpack.c.b16 %v431, %v430
      %v511 = vpack.c.b16 %v433, %v432
      %v512 = vpack.c.b16 %v435, %v434
      %v513 = vpack.c.b16 %v437, %v436
      %v514 = vpack.c.b16 %v439, %v438
      %v515 = vpack.c.b16 %v441, %v440
      %v516 = vpack.c.b16 %v443, %v442
      %v517 = vpack.c.b16 %v445, %v444
      %v518 = vpack.c.b16 %v447, %v446
      %v519 = vpack.c.b16 %v449, %v448
      %v520 = vpack.c.b16 %v451, %v450
      %v521 = vpack.c.b16 %v453, %v452
      %v522 = vpack.c.b16 %v455, %v454
      %v523 = vpack.c.b16 %v457, %v456
      %v524 = vpack.c.b16 %v459, %v458
      %v525 = vpack.c.b16 %v461, %v460
      %v526 = vpack.c.b16 %v463, %v462
      %v527 = vpack.c.b16 %v465, %v464
      %v528 = vpack.c.b16 %v467, %v466
      %v529 = vpack.c.b16 %v469, %v468
      %v530 = vpack.c.b16 %v471, %v470
      %v531 = vpack.c.b16 %v473, %v472
      %v532 = vpack.c.b16 %v475, %v474
      %v533 = vpack.c.b16 %v477, %v476
      %v534 = vpack.c.b16 %v479, %v478
      %v535 = vpack.c.b16 %v481, %v480
      %v536 = vpack.c.b16 %v483, %v482
      %v537 = vpack.c.b16 %v485, %v484
      %v538 = vpack.c.b16 %v487, %v486
      %v539 = vpack.c.b16 %v489, %v488
      %v540 = vpack.c.b16 %v491, %v490
      %v606 = vunpack.c.l.b16 %v273
      %v607 = vunpack.c.l.b16 %v274
      %v608 = vunpack.c.l.b16 %v275
      %v609 = vunpack.c.l.b16 %v276
      %v610 = vunpack.c.l.b16 %v277
      %v611 = vunpack.c.l.b16 %v278
      %v612 = vunpack.c.l.b16 %v279
      %v613 = vunpack.c.l.b16 %v280
      %v614 = vunpack.c.l.b16 %v281
      %v615 = vunpack.c.l.b16 %v282
      %v616 = vunpack.c.l.b16 %v283
      %v617 = vunpack.c.l.b16 %v284
      %v618 = vunpack.c.l.b16 %v285
      %v619 = vunpack.c.l.b16 %v286
      %v620 = vunpack.c.l.b16 %v287
      %v621 = vunpack.c.l.b16 %v288
      %v622 = vpack.c.b16 %v607, %v606
      %v623 = vpack.c.b16 %v609, %v608
      %v624 = vpack.c.b16 %v611, %v610
      %v625 = vpack.c.b16 %v613, %v612
      %v626 = vpack.c.b16 %v615, %v614
      %v627 = vpack.c.b16 %v617, %v616
      %v628 = vpack.c.b16 %v619, %v618
      %v629 = vpack.c.b16 %v621, %v620
      %638 = vmatprep.subr.bf16.mxu0 0
      %639 = vmatpush1.bf16.msra.mxu0 %v629
      %640 = vmatprep.subr.bf16.mxu0 0
      %641 = vmatpush1.bf16.msra.mxu0 %v628
      %642 = vmatprep.subr.bf16.mxu0 0
      %643 = vmatpush1.bf16.msra.mxu0 %v627
      %644 = vmatprep.subr.bf16.mxu0 0
      %645 = vmatpush1.bf16.msra.mxu0 %v626
      %646 = vmatprep.subr.bf16.mxu0 0
      %647 = vmatpush1.bf16.msra.mxu0 %v625
      %648 = vmatprep.subr.bf16.mxu0 0
      %649 = vmatpush1.bf16.msra.mxu0 %v624
      %650 = vmatprep.subr.bf16.mxu0 0
      %651 = vmatpush1.bf16.msra.mxu0 %v623
      %652 = vmatprep.subr.bf16.mxu0 0
      %653 = vmatpush1.bf16.msra.mxu0 %v622
      %654 = vmatprep.subr.bf16.mxu0 0
      %655 = vmatpush2.bf16.msra.mxu0 0
      %656 = vmatprep.subr.bf16.mxu0 0
      %657 = vmatpush2.bf16.msra.mxu0 0
      %658 = vmatprep.subr.bf16.mxu0 0
      %659 = vmatpush2.bf16.msra.mxu0 0
      %660 = vmatprep.subr.bf16.mxu0 0
      %661 = vmatpush2.bf16.msra.mxu0 0
      %662 = vmatprep.subr.bf16.mxu0 0
      %663 = vmatpush2.bf16.msra.mxu0 0
      %664 = vmatprep.subr.bf16.mxu0 0
      %665 = vmatpush2.bf16.msra.mxu0 0
      %666 = vmatprep.subr.bf16.mxu0 0
      %667 = vmatpush2.bf16.msra.mxu0 0
      %668 = vmatprep.subr.bf16.mxu0 0
      %669 = vmatpush2.bf16.msra.mxu0 0
      %670 = vmatprep.mubr.bf16.mxu0 0
      %671 = vmatmul.mubr.bf16.gmra.mxu0 %v492
      %v672 = vpop.f32.mrf.mxu0
      %v673 = vadd.f32 %v294, %v672
      %v674 = vpop.f32.mrf.mxu0
      %v675 = vpop.f32.mrf.mxu0
      %v676 = vadd.f32 %v294, %v675
      %v677 = vpop.f32.mrf.mxu0
      %678 = vmatprep.mubr.bf16.mxu0 0
      %679 = vmatmul.mubr.bf16.gmra.mxu0 %v493
      %v680 = vpop.f32.mrf.mxu0
      %v681 = vadd.f32 %v294, %v680
      %v682 = vpop.f32.mrf.mxu0
      %v683 = vpop.f32.mrf.mxu0
      %v684 = vadd.f32 %v294, %v683
      %v685 = vpop.f32.mrf.mxu0
      %686 = vmatprep.mubr.bf16.mxu0 0
      %687 = vmatmul.mubr.bf16.gmra.mxu0 %v494
      %v688 = vpop.f32.mrf.mxu0
      %v689 = vadd.f32 %v294, %v688
      %v690 = vpop.f32.mrf.mxu0
      %v691 = vpop.f32.mrf.mxu0
      %v692 = vadd.f32 %v294, %v691
      %v693 = vpop.f32.mrf.mxu0
      %694 = vmatprep.mubr.bf16.mxu0 0
      %695 = vmatmul.mubr.bf16.gmra.mxu0 %v495
      %v696 = vpop.f32.mrf.mxu0
      %v697 = vadd.f32 %v294, %v696
      %v698 = vpop.f32.mrf.mxu0
      %v699 = vpop.f32.mrf.mxu0
      %v700 = vadd.f32 %v294, %v699
      %v701 = vpop.f32.mrf.mxu0
      %702 = vmatprep.mubr.bf16.mxu0 0
      %703 = vmatmul.mubr.bf16.gmra.mxu0 %v496
      %v704 = vpop.f32.mrf.mxu0
      %v705 = vadd.f32 %v294, %v704
      %v706 = vpop.f32.mrf.mxu0
      %v707 = vpop.f32.mrf.mxu0
      %v708 = vadd.f32 %v294, %v707
      %v709 = vpop.f32.mrf.mxu0
      %710 = vmatprep.mubr.bf16.mxu0 0
      %711 = vmatmul.mubr.bf16.gmra.mxu0 %v497
      %v712 = vpop.f32.mrf.mxu0
      %v713 = vadd.f32 %v294, %v712
      %v714 = vpop.f32.mrf.mxu0
      %v715 = vpop.f32.mrf.mxu0
      %v716 = vadd.f32 %v294, %v715
      %v717 = vpop.f32.mrf.mxu0
      %718 = vmatprep.mubr.bf16.mxu0 0
      %719 = vmatmul.mubr.bf16.gmra.mxu0 %v498
      %v720 = vpop.f32.mrf.mxu0
      %v721 = vadd.f32 %v294, %v720
      %v722 = vpop.f32.mrf.mxu0
      %v723 = vpop.f32.mrf.mxu0
      %v724 = vadd.f32 %v294, %v723
      %v725 = vpop.f32.mrf.mxu0
      %726 = vmatprep.mubr.bf16.mxu0 0
      %727 = vmatmul.mubr.bf16.gmra.mxu0 %v499
      %v728 = vpop.f32.mrf.mxu0
      %v729 = vadd.f32 %v294, %v728
      %v730 = vpop.f32.mrf.mxu0
      %v731 = vpop.f32.mrf.mxu0
      %v732 = vadd.f32 %v294, %v731
      %v733 = vpop.f32.mrf.mxu0
      %734 = vmatprep.mubr.bf16.mxu0 0
      %735 = vmatmul.mubr.bf16.gmra.mxu0 %v500
      %v736 = vpop.f32.mrf.mxu0
      %v737 = vadd.f32 %v294, %v736
      %v738 = vpop.f32.mrf.mxu0
      %v739 = vpop.f32.mrf.mxu0
      %v740 = vadd.f32 %v294, %v739
      %v741 = vpop.f32.mrf.mxu0
      %742 = vmatprep.mubr.bf16.mxu0 0
      %743 = vmatmul.mubr.bf16.gmra.mxu0 %v501
      %v744 = vpop.f32.mrf.mxu0
      %v745 = vadd.f32 %v294, %v744
      %v746 = vpop.f32.mrf.mxu0
      %v747 = vpop.f32.mrf.mxu0
      %v748 = vadd.f32 %v294, %v747
      %v749 = vpop.f32.mrf.mxu0
      %750 = vmatprep.mubr.bf16.mxu0 0
      %751 = vmatmul.mubr.bf16.gmra.mxu0 %v502
      %v752 = vpop.f32.mrf.mxu0
      %v753 = vadd.f32 %v294, %v752
      %v754 = vpop.f32.mrf.mxu0
      %v755 = vpop.f32.mrf.mxu0
      %v756 = vadd.f32 %v294, %v755
      %v757 = vpop.f32.mrf.mxu0
      %758 = vmatprep.mubr.bf16.mxu0 0
      %759 = vmatmul.mubr.bf16.gmra.mxu0 %v503
      %v760 = vpop.f32.mrf.mxu0
      %v761 = vadd.f32 %v294, %v760
      %v762 = vpop.f32.mrf.mxu0
      %v763 = vpop.f32.mrf.mxu0
      %v764 = vadd.f32 %v294, %v763
      %v765 = vpop.f32.mrf.mxu0
      %766 = vmatprep.mubr.bf16.mxu0 0
      %767 = vmatmul.mubr.bf16.gmra.mxu0 %v504
      %v768 = vpop.f32.mrf.mxu0
      %v769 = vadd.f32 %v294, %v768
      %v770 = vpop.f32.mrf.mxu0
      %v771 = vpop.f32.mrf.mxu0
      %v772 = vadd.f32 %v294, %v771
      %v773 = vpop.f32.mrf.mxu0
      %774 = vmatprep.mubr.bf16.mxu0 0
      %775 = vmatmul.mubr.bf16.gmra.mxu0 %v505
      %v776 = vpop.f32.mrf.mxu0
      %v777 = vadd.f32 %v294, %v776
      %v778 = vpop.f32.mrf.mxu0
      %v779 = vpop.f32.mrf.mxu0
      %v780 = vadd.f32 %v294, %v779
      %v781 = vpop.f32.mrf.mxu0
      %782 = vmatprep.mubr.bf16.mxu0 0
      %783 = vmatmul.mubr.bf16.gmra.mxu0 %v506
      %v784 = vpop.f32.mrf.mxu0
      %v785 = vadd.f32 %v294, %v784
      %v786 = vpop.f32.mrf.mxu0
      %v787 = vpop.f32.mrf.mxu0
      %v788 = vadd.f32 %v294, %v787
      %v789 = vpop.f32.mrf.mxu0
      %790 = vmatprep.mubr.bf16.mxu0 0
      %791 = vmatmul.mubr.bf16.gmra.mxu0 %v507
      %v792 = vpop.f32.mrf.mxu0
      %v793 = vadd.f32 %v294, %v792
      %v794 = vpop.f32.mrf.mxu0
      %v795 = vpop.f32.mrf.mxu0
      %v796 = vadd.f32 %v294, %v795
      %v797 = vpop.f32.mrf.mxu0
      %798 = vmatprep.mubr.bf16.mxu0 0
      %799 = vmatmul.mubr.bf16.gmra.mxu0 %v508
      %v800 = vpop.f32.mrf.mxu0
      %v801 = vadd.f32 %v294, %v800
      %v802 = vpop.f32.mrf.mxu0
      %v803 = vpop.f32.mrf.mxu0
      %v804 = vadd.f32 %v294, %v803
      %v805 = vpop.f32.mrf.mxu0
      %806 = vmatprep.mubr.bf16.mxu0 0
      %807 = vmatmul.mubr.bf16.gmra.mxu0 %v509
      %v808 = vpop.f32.mrf.mxu0
      %v809 = vadd.f32 %v294, %v808
      %v810 = vpop.f32.mrf.mxu0
      %v811 = vpop.f32.mrf.mxu0
      %v812 = vadd.f32 %v294, %v811
      %v813 = vpop.f32.mrf.mxu0
      %814 = vmatprep.mubr.bf16.mxu0 0
      %815 = vmatmul.mubr.bf16.gmra.mxu0 %v510
      %v816 = vpop.f32.mrf.mxu0
      %v817 = vadd.f32 %v294, %v816
      %v818 = vpop.f32.mrf.mxu0
      %v819 = vpop.f32.mrf.mxu0
      %v820 = vadd.f32 %v294, %v819
      %v821 = vpop.f32.mrf.mxu0
      %822 = vmatprep.mubr.bf16.mxu0 0
      %823 = vmatmul.mubr.bf16.gmra.mxu0 %v511
      %v824 = vpop.f32.mrf.mxu0
      %v825 = vadd.f32 %v294, %v824
      %v826 = vpop.f32.mrf.mxu0
      %v827 = vpop.f32.mrf.mxu0
      %v828 = vadd.f32 %v294, %v827
      %v829 = vpop.f32.mrf.mxu0
      %830 = vmatprep.mubr.bf16.mxu0 0
      %831 = vmatmul.mubr.bf16.gmra.mxu0 %v512
      %v832 = vpop.f32.mrf.mxu0
      %v833 = vadd.f32 %v294, %v832
      %v834 = vpop.f32.mrf.mxu0
      %v835 = vpop.f32.mrf.mxu0
      %v836 = vadd.f32 %v294, %v835
      %v837 = vpop.f32.mrf.mxu0
      %838 = vmatprep.mubr.bf16.mxu0 0
      %839 = vmatmul.mubr.bf16.gmra.mxu0 %v513
      %v840 = vpop.f32.mrf.mxu0
      %v841 = vadd.f32 %v294, %v840
      %v842 = vpop.f32.mrf.mxu0
      %v843 = vpop.f32.mrf.mxu0
      %v844 = vadd.f32 %v294, %v843
      %v845 = vpop.f32.mrf.mxu0
      %846 = vmatprep.mubr.bf16.mxu0 0
      %847 = vmatmul.mubr.bf16.gmra.mxu0 %v514
      %v848 = vpop.f32.mrf.mxu0
      %v849 = vadd.f32 %v294, %v848
      %v850 = vpop.f32.mrf.mxu0
      %v851 = vpop.f32.mrf.mxu0
      %v852 = vadd.f32 %v294, %v851
      %v853 = vpop.f32.mrf.mxu0
      %854 = vmatprep.mubr.bf16.mxu0 0
      %855 = vmatmul.mubr.bf16.gmra.mxu0 %v515
      %v856 = vpop.f32.mrf.mxu0
      %v857 = vadd.f32 %v294, %v856
      %v858 = vpop.f32.mrf.mxu0
      %v859 = vpop.f32.mrf.mxu0
      %v860 = vadd.f32 %v294, %v859
      %v861 = vpop.f32.mrf.mxu0
      %862 = vmatprep.mubr.bf16.mxu0 0
      %863 = vmatmul.mubr.bf16.gmra.mxu0 %v516
      %v864 = vpop.f32.mrf.mxu0
      %v865 = vadd.f32 %v294, %v864
      %v866 = vpop.f32.mrf.mxu0
      %v867 = vpop.f32.mrf.mxu0
      %v868 = vadd.f32 %v294, %v867
      %v869 = vpop.f32.mrf.mxu0
      %870 = vmatprep.mubr.bf16.mxu0 0
      %871 = vmatmul.mubr.bf16.gmra.mxu0 %v517
      %v872 = vpop.f32.mrf.mxu0
      %v873 = vadd.f32 %v294, %v872
      %v874 = vpop.f32.mrf.mxu0
      %v875 = vpop.f32.mrf.mxu0
      %v876 = vadd.f32 %v294, %v875
      %v877 = vpop.f32.mrf.mxu0
      %878 = vmatprep.mubr.bf16.mxu0 0
      %879 = vmatmul.mubr.bf16.gmra.mxu0 %v518
      %v880 = vpop.f32.mrf.mxu0
      %v881 = vadd.f32 %v294, %v880
      %v882 = vpop.f32.mrf.mxu0
      %v883 = vpop.f32.mrf.mxu0
      %v884 = vadd.f32 %v294, %v883
      %v885 = vpop.f32.mrf.mxu0
      %886 = vmatprep.mubr.bf16.mxu0 0
      %887 = vmatmul.mubr.bf16.gmra.mxu0 %v519
      %v888 = vpop.f32.mrf.mxu0
      %v889 = vadd.f32 %v294, %v888
      %v890 = vpop.f32.mrf.mxu0
      %v891 = vpop.f32.mrf.mxu0
      %v892 = vadd.f32 %v294, %v891
      %v893 = vpop.f32.mrf.mxu0
      %894 = vmatprep.mubr.bf16.mxu0 0
      %895 = vmatmul.mubr.bf16.gmra.mxu0 %v520
      %v896 = vpop.f32.mrf.mxu0
      %v897 = vadd.f32 %v294, %v896
      %v898 = vpop.f32.mrf.mxu0
      %v899 = vpop.f32.mrf.mxu0
      %v900 = vadd.f32 %v294, %v899
      %v901 = vpop.f32.mrf.mxu0
      %902 = vmatprep.mubr.bf16.mxu0 0
      %903 = vmatmul.mubr.bf16.gmra.mxu0 %v521
      %v904 = vpop.f32.mrf.mxu0
      %v905 = vadd.f32 %v294, %v904
      %v906 = vpop.f32.mrf.mxu0
      %v907 = vpop.f32.mrf.mxu0
      %v908 = vadd.f32 %v294, %v907
      %v909 = vpop.f32.mrf.mxu0
      %910 = vmatprep.mubr.bf16.mxu0 0
      %911 = vmatmul.mubr.bf16.gmra.mxu0 %v522
      %v912 = vpop.f32.mrf.mxu0
      %v913 = vadd.f32 %v294, %v912
      %v914 = vpop.f32.mrf.mxu0
      %v915 = vpop.f32.mrf.mxu0
      %v916 = vadd.f32 %v294, %v915
      %v917 = vpop.f32.mrf.mxu0
      %918 = vmatprep.mubr.bf16.mxu0 0
      %919 = vmatmul.mubr.bf16.gmra.mxu0 %v523
      %v920 = vpop.f32.mrf.mxu0
      %v921 = vadd.f32 %v294, %v920
      %v922 = vpop.f32.mrf.mxu0
      %v923 = vpop.f32.mrf.mxu0
      %v924 = vadd.f32 %v294, %v923
      %v925 = vpop.f32.mrf.mxu0
      %926 = vmatprep.mubr.bf16.mxu0 0
      %927 = vmatmul.mubr.bf16.gmra.mxu0 %v524
      %v928 = vpop.f32.mrf.mxu0
      %v929 = vadd.f32 %v294, %v928
      %v930 = vpop.f32.mrf.mxu0
      %v931 = vpop.f32.mrf.mxu0
      %v932 = vadd.f32 %v294, %v931
      %v933 = vpop.f32.mrf.mxu0
      %934 = vmatprep.mubr.bf16.mxu0 0
      %935 = vmatmul.mubr.bf16.gmra.mxu0 %v525
      %v936 = vpop.f32.mrf.mxu0
      %v937 = vadd.f32 %v294, %v936
      %v938 = vpop.f32.mrf.mxu0
      %v939 = vpop.f32.mrf.mxu0
      %v940 = vadd.f32 %v294, %v939
      %v941 = vpop.f32.mrf.mxu0
      %942 = vmatprep.mubr.bf16.mxu0 0
      %943 = vmatmul.mubr.bf16.gmra.mxu0 %v526
      %v944 = vpop.f32.mrf.mxu0
      %v945 = vadd.f32 %v294, %v944
      %v946 = vpop.f32.mrf.mxu0
      %v947 = vpop.f32.mrf.mxu0
      %v948 = vadd.f32 %v294, %v947
      %v949 = vpop.f32.mrf.mxu0
      %950 = vmatprep.mubr.bf16.mxu0 0
      %951 = vmatmul.mubr.bf16.gmra.mxu0 %v527
      %v952 = vpop.f32.mrf.mxu0
      %v953 = vadd.f32 %v294, %v952
      %v954 = vpop.f32.mrf.mxu0
      %v955 = vpop.f32.mrf.mxu0
      %v956 = vadd.f32 %v294, %v955
      %v957 = vpop.f32.mrf.mxu0
      %958 = vmatprep.mubr.bf16.mxu0 0
      %959 = vmatmul.mubr.bf16.gmra.mxu0 %v528
      %v960 = vpop.f32.mrf.mxu0
      %v961 = vadd.f32 %v294, %v960
      %v962 = vpop.f32.mrf.mxu0
      %v963 = vpop.f32.mrf.mxu0
      %v964 = vadd.f32 %v294, %v963
      %v965 = vpop.f32.mrf.mxu0
      %966 = vmatprep.mubr.bf16.mxu0 0
      %967 = vmatmul.mubr.bf16.gmra.mxu0 %v529
      %v968 = vpop.f32.mrf.mxu0
      %v969 = vadd.f32 %v294, %v968
      %v970 = vpop.f32.mrf.mxu0
      %v971 = vpop.f32.mrf.mxu0
      %v972 = vadd.f32 %v294, %v971
      %v973 = vpop.f32.mrf.mxu0
      %974 = vmatprep.mubr.bf16.mxu0 0
      %975 = vmatmul.mubr.bf16.gmra.mxu0 %v530
      %v976 = vpop.f32.mrf.mxu0
      %v977 = vadd.f32 %v294, %v976
      %v978 = vpop.f32.mrf.mxu0
      %v979 = vpop.f32.mrf.mxu0
      %v980 = vadd.f32 %v294, %v979
      %v981 = vpop.f32.mrf.mxu0
      %982 = vmatprep.mubr.bf16.mxu0 0
      %983 = vmatmul.mubr.bf16.gmra.mxu0 %v531
      %v984 = vpop.f32.mrf.mxu0
      %v985 = vadd.f32 %v294, %v984
      %v986 = vpop.f32.mrf.mxu0
      %v987 = vpop.f32.mrf.mxu0
      %v988 = vadd.f32 %v294, %v987
      %v989 = vpop.f32.mrf.mxu0
      %990 = vmatprep.mubr.bf16.mxu0 0
      %991 = vmatmul.mubr.bf16.gmra.mxu0 %v532
      %v992 = vpop.f32.mrf.mxu0
      %v993 = vadd.f32 %v294, %v992
      %v994 = vpop.f32.mrf.mxu0
      %v995 = vpop.f32.mrf.mxu0
      %v996 = vadd.f32 %v294, %v995
      %v997 = vpop.f32.mrf.mxu0
      %998 = vmatprep.mubr.bf16.mxu0 0
      %999 = vmatmul.mubr.bf16.gmra.mxu0 %v533
      %v1000 = vpop.f32.mrf.mxu0
      %v1001 = vadd.f32 %v294, %v1000
      %v1002 = vpop.f32.mrf.mxu0
      %v1003 = vpop.f32.mrf.mxu0
      %v1004 = vadd.f32 %v294, %v1003
      %v1005 = vpop.f32.mrf.mxu0
      %1006 = vmatprep.mubr.bf16.mxu0 0
      %1007 = vmatmul.mubr.bf16.gmra.mxu0 %v534
      %v1008 = vpop.f32.mrf.mxu0
      %v1009 = vadd.f32 %v294, %v1008
      %v1010 = vpop.f32.mrf.mxu0
      %v1011 = vpop.f32.mrf.mxu0
      %v1012 = vadd.f32 %v294, %v1011
      %v1013 = vpop.f32.mrf.mxu0
      %1014 = vmatprep.mubr.bf16.mxu0 0
      %1015 = vmatmul.mubr.bf16.gmra.mxu0 %v535
      %v1016 = vpop.f32.mrf.mxu0
      %v1017 = vadd.f32 %v294, %v1016
      %v1018 = vpop.f32.mrf.mxu0
      %v1019 = vpop.f32.mrf.mxu0
      %v1020 = vadd.f32 %v294, %v1019
      %v1021 = vpop.f32.mrf.mxu0
      %1022 = vmatprep.mubr.bf16.mxu0 0
      %1023 = vmatmul.mubr.bf16.gmra.mxu0 %v536
      %v1024 = vpop.f32.mrf.mxu0
      %v1025 = vadd.f32 %v294, %v1024
      %v1026 = vpop.f32.mrf.mxu0
      %v1027 = vpop.f32.mrf.mxu0
      %v1028 = vadd.f32 %v294, %v1027
      %v1029 = vpop.f32.mrf.mxu0
      %1030 = vmatprep.mubr.bf16.mxu0 0
      %1031 = vmatmul.mubr.bf16.gmra.mxu0 %v537
      %v1032 = vpop.f32.mrf.mxu0
      %v1033 = vadd.f32 %v294, %v1032
      %v1034 = vpop.f32.mrf.mxu0
      %v1035 = vpop.f32.mrf.mxu0
      %v1036 = vadd.f32 %v294, %v1035
      %v1037 = vpop.f32.mrf.mxu0
      %1038 = vmatprep.mubr.bf16.mxu0 0
      %1039 = vmatmul.mubr.bf16.gmra.mxu0 %v538
      %v1040 = vpop.f32.mrf.mxu0
      %v1041 = vadd.f32 %v294, %v1040
      %v1042 = vpop.f32.mrf.mxu0
      %v1043 = vpop.f32.mrf.mxu0
      %v1044 = vadd.f32 %v294, %v1043
      %v1045 = vpop.f32.mrf.mxu0
      %1046 = vmatprep.mubr.bf16.mxu0 0
      %1047 = vmatmul.mubr.bf16.gmra.mxu0 %v539
      %v1048 = vpop.f32.mrf.mxu0
      %v1049 = vadd.f32 %v294, %v1048
      %v1050 = vpop.f32.mrf.mxu0
      %v1051 = vpop.f32.mrf.mxu0
      %v1052 = vadd.f32 %v294, %v1051
      %v1053 = vpop.f32.mrf.mxu0
      %1054 = vmatprep.mubr.bf16.mxu0 0
      %1055 = vmatmul.mubr.bf16.gmra.mxu0 %v540
      %v1056 = vpop.f32.mrf.mxu0
      %v1057 = vadd.f32 %v294, %v1056
      %v1058 = vpop.f32.mrf.mxu0
      %v1059 = vpop.f32.mrf.mxu0
      %v1060 = vadd.f32 %v294, %v1059
      %v1061 = vpop.f32.mrf.mxu0
      %1062 = vdwg.mxu0
      %v1063 = vmax.f32 %v673, 0.0
      %v1064 = vmax.f32 %v676, 0.0
      %v1065 = vmax.f32 %v681, 0.0
      %v1066 = vmax.f32 %v684, 0.0
      %v1067 = vmax.f32 %v689, 0.0
      %v1068 = vmax.f32 %v692, 0.0
      %v1069 = vmax.f32 %v697, 0.0
      %v1070 = vmax.f32 %v700, 0.0
      %v1071 = vmax.f32 %v705, 0.0
      %v1072 = vmax.f32 %v708, 0.0
      %v1073 = vmax.f32 %v713, 0.0
      %v1074 = vmax.f32 %v716, 0.0
      %v1075 = vmax.f32 %v721, 0.0
      %v1076 = vmax.f32 %v724, 0.0
      %v1077 = vmax.f32 %v729, 0.0
      %v1078 = vmax.f32 %v732, 0.0
      %v1079 = vmax.f32 %v737, 0.0
      %v1080 = vmax.f32 %v740, 0.0
      %v1081 = vmax.f32 %v745, 0.0
      %v1082 = vmax.f32 %v748, 0.0
      %v1083 = vmax.f32 %v753, 0.0
      %v1084 = vmax.f32 %v756, 0.0
      %v1085 = vmax.f32 %v761, 0.0
      %v1086 = vmax.f32 %v764, 0.0
      %v1087 = vmax.f32 %v769, 0.0
      %v1088 = vmax.f32 %v772, 0.0
      %v1089 = vmax.f32 %v777, 0.0
      %v1090 = vmax.f32 %v780, 0.0
      %v1091 = vmax.f32 %v785, 0.0
      %v1092 = vmax.f32 %v788, 0.0
      %v1093 = vmax.f32 %v793, 0.0
      %v1094 = vmax.f32 %v796, 0.0
      %v1095 = vmax.f32 %v801, 0.0
      %v1096 = vmax.f32 %v804, 0.0
      %v1097 = vmax.f32 %v809, 0.0
      %v1098 = vmax.f32 %v812, 0.0
      %v1099 = vmax.f32 %v817, 0.0
      %v1100 = vmax.f32 %v820, 0.0
      %v1101 = vmax.f32 %v825, 0.0
      %v1102 = vmax.f32 %v828, 0.0
      %v1103 = vmax.f32 %v833, 0.0
      %v1104 = vmax.f32 %v836, 0.0
      %v1105 = vmax.f32 %v841, 0.0
      %v1106 = vmax.f32 %v844, 0.0
      %v1107 = vmax.f32 %v849, 0.0
      %v1108 = vmax.f32 %v852, 0.0
      %v1109 = vmax.f32 %v857, 0.0
      %v1110 = vmax.f32 %v860, 0.0
      %v1111 = vmax.f32 %v865, 0.0
      %v1112 = vmax.f32 %v868, 0.0
      %v1113 = vmax.f32 %v873, 0.0
      %v1114 = vmax.f32 %v876, 0.0
      %v1115 = vmax.f32 %v881, 0.0
      %v1116 = vmax.f32 %v884, 0.0
      %v1117 = vmax.f32 %v889, 0.0
      %v1118 = vmax.f32 %v892, 0.0
      %v1119 = vmax.f32 %v897, 0.0
      %v1120 = vmax.f32 %v900, 0.0
      %v1121 = vmax.f32 %v905, 0.0
      %v1122 = vmax.f32 %v908, 0.0
      %v1123 = vmax.f32 %v913, 0.0
      %v1124 = vmax.f32 %v916, 0.0
      %v1125 = vmax.f32 %v921, 0.0
      %v1126 = vmax.f32 %v924, 0.0
      %v1127 = vmax.f32 %v929, 0.0
      %v1128 = vmax.f32 %v932, 0.0
      %v1129 = vmax.f32 %v937, 0.0
      %v1130 = vmax.f32 %v940, 0.0
      %v1131 = vmax.f32 %v945, 0.0
      %v1132 = vmax.f32 %v948, 0.0
      %v1133 = vmax.f32 %v953, 0.0
      %v1134 = vmax.f32 %v956, 0.0
      %v1135 = vmax.f32 %v961, 0.0
      %v1136 = vmax.f32 %v964, 0.0
      %v1137 = vmax.f32 %v969, 0.0
      %v1138 = vmax.f32 %v972, 0.0
      %v1139 = vmax.f32 %v977, 0.0
      %v1140 = vmax.f32 %v980, 0.0
      %v1141 = vmax.f32 %v985, 0.0
      %v1142 = vmax.f32 %v988, 0.0
      %v1143 = vmax.f32 %v993, 0.0
      %v1144 = vmax.f32 %v996, 0.0
      %v1145 = vmax.f32 %v1001, 0.0
      %v1146 = vmax.f32 %v1004, 0.0
      %v1147 = vmax.f32 %v1009, 0.0
      %v1148 = vmax.f32 %v1012, 0.0
      %v1149 = vmax.f32 %v1017, 0.0
      %v1150 = vmax.f32 %v1020, 0.0
      %v1151 = vmax.f32 %v1025, 0.0
      %v1152 = vmax.f32 %v1028, 0.0
      %v1153 = vmax.f32 %v1033, 0.0
      %v1154 = vmax.f32 %v1036, 0.0
      %v1155 = vmax.f32 %v1041, 0.0
      %v1156 = vmax.f32 %v1044, 0.0
      %v1157 = vmax.f32 %v1049, 0.0
      %v1158 = vmax.f32 %v1052, 0.0
      %v1159 = vmax.f32 %v1057, 0.0
      %v1160 = vmax.f32 %v1060, 0.0
      %v1161 = vpack.c.bf16 %v1064, %v1063
      %v1162 = vpack.c.bf16 %v1066, %v1065
      %v1163 = vpack.c.bf16 %v1068, %v1067
      %v1164 = vpack.c.bf16 %v1070, %v1069
      %v1165 = vpack.c.bf16 %v1072, %v1071
      %v1166 = vpack.c.bf16 %v1074, %v1073
      %v1167 = vpack.c.bf16 %v1076, %v1075
      %v1168 = vpack.c.bf16 %v1078, %v1077
      %v1169 = vpack.c.bf16 %v1080, %v1079
      %v1170 = vpack.c.bf16 %v1082, %v1081
      %v1171 = vpack.c.bf16 %v1084, %v1083
      %v1172 = vpack.c.bf16 %v1086, %v1085
      %v1173 = vpack.c.bf16 %v1088, %v1087
      %v1174 = vpack.c.bf16 %v1090, %v1089
      %v1175 = vpack.c.bf16 %v1092, %v1091
      %v1176 = vpack.c.bf16 %v1094, %v1093
      %v1177 = vpack.c.bf16 %v1096, %v1095
      %v1178 = vpack.c.bf16 %v1098, %v1097
      %v1179 = vpack.c.bf16 %v1100, %v1099
      %v1180 = vpack.c.bf16 %v1102, %v1101
      %v1181 = vpack.c.bf16 %v1104, %v1103
      %v1182 = vpack.c.bf16 %v1106, %v1105
      %v1183 = vpack.c.bf16 %v1108, %v1107
      %v1184 = vpack.c.bf16 %v1110, %v1109
      %v1185 = vpack.c.bf16 %v1112, %v1111
      %v1186 = vpack.c.bf16 %v1114, %v1113
      %v1187 = vpack.c.bf16 %v1116, %v1115
      %v1188 = vpack.c.bf16 %v1118, %v1117
      %v1189 = vpack.c.bf16 %v1120, %v1119
      %v1190 = vpack.c.bf16 %v1122, %v1121
      %v1191 = vpack.c.bf16 %v1124, %v1123
      %v1192 = vpack.c.bf16 %v1126, %v1125
      %v1193 = vpack.c.bf16 %v1128, %v1127
      %v1194 = vpack.c.bf16 %v1130, %v1129
      %v1195 = vpack.c.bf16 %v1132, %v1131
      %v1196 = vpack.c.bf16 %v1134, %v1133
      %v1197 = vpack.c.bf16 %v1136, %v1135
      %v1198 = vpack.c.bf16 %v1138, %v1137
      %v1199 = vpack.c.bf16 %v1140, %v1139
      %v1200 = vpack.c.bf16 %v1142, %v1141
      %v1201 = vpack.c.bf16 %v1144, %v1143
      %v1202 = vpack.c.bf16 %v1146, %v1145
      %v1203 = vpack.c.bf16 %v1148, %v1147
      %v1204 = vpack.c.bf16 %v1150, %v1149
      %v1205 = vpack.c.bf16 %v1152, %v1151
      %v1206 = vpack.c.bf16 %v1154, %v1153
      %v1207 = vpack.c.bf16 %v1156, %v1155
      %v1208 = vpack.c.bf16 %v1158, %v1157
      %v1209 = vpack.c.bf16 %v1160, %v1159
      %v1259 = vunpack.c.l.b16 %v1161
      %v1260 = vunpack.c.h.b16 %v1161
      %v1261 = vunpack.c.l.b16 %v1162
      %v1262 = vunpack.c.h.b16 %v1162
      %v1263 = vunpack.c.l.b16 %v1163
      %v1264 = vunpack.c.h.b16 %v1163
      %v1265 = vunpack.c.l.b16 %v1164
      %v1266 = vunpack.c.h.b16 %v1164
      %v1267 = vunpack.c.l.b16 %v1165
      %v1268 = vunpack.c.h.b16 %v1165
      %v1269 = vunpack.c.l.b16 %v1166
      %v1270 = vunpack.c.h.b16 %v1166
      %v1271 = vunpack.c.l.b16 %v1167
      %v1272 = vunpack.c.h.b16 %v1167
      %v1273 = vunpack.c.l.b16 %v1168
      %v1274 = vunpack.c.h.b16 %v1168
      %v1275 = vunpack.c.l.b16 %v1169
      %v1276 = vunpack.c.h.b16 %v1169
      %v1277 = vunpack.c.l.b16 %v1170
      %v1278 = vunpack.c.h.b16 %v1170
      %v1279 = vunpack.c.l.b16 %v1171
      %v1280 = vunpack.c.h.b16 %v1171
      %v1281 = vunpack.c.l.b16 %v1172
      %v1282 = vunpack.c.h.b16 %v1172
      %v1283 = vunpack.c.l.b16 %v1173
      %v1284 = vunpack.c.h.b16 %v1173
      %v1285 = vunpack.c.l.b16 %v1174
      %v1286 = vunpack.c.h.b16 %v1174
      %v1287 = vunpack.c.l.b16 %v1175
      %v1288 = vunpack.c.h.b16 %v1175
      %v1289 = vunpack.c.l.b16 %v1176
      %v1290 = vunpack.c.h.b16 %v1176
      %v1291 = vunpack.c.l.b16 %v1177
      %v1292 = vunpack.c.h.b16 %v1177
      %v1293 = vunpack.c.l.b16 %v1178
      %v1294 = vunpack.c.h.b16 %v1178
      %v1295 = vunpack.c.l.b16 %v1179
      %v1296 = vunpack.c.h.b16 %v1179
      %v1297 = vunpack.c.l.b16 %v1180
      %v1298 = vunpack.c.h.b16 %v1180
      %v1299 = vunpack.c.l.b16 %v1181
      %v1300 = vunpack.c.h.b16 %v1181
      %v1301 = vunpack.c.l.b16 %v1182
      %v1302 = vunpack.c.h.b16 %v1182
      %v1303 = vunpack.c.l.b16 %v1183
      %v1304 = vunpack.c.h.b16 %v1183
      %v1305 = vunpack.c.l.b16 %v1184
      %v1306 = vunpack.c.h.b16 %v1184
      %v1307 = vunpack.c.l.b16 %v1185
      %v1308 = vunpack.c.h.b16 %v1185
      %v1309 = vunpack.c.l.b16 %v1186
      %v1310 = vunpack.c.h.b16 %v1186
      %v1311 = vunpack.c.l.b16 %v1187
      %v1312 = vunpack.c.h.b16 %v1187
      %v1313 = vunpack.c.l.b16 %v1188
      %v1314 = vunpack.c.h.b16 %v1188
      %v1315 = vunpack.c.l.b16 %v1189
      %v1316 = vunpack.c.h.b16 %v1189
      %v1317 = vunpack.c.l.b16 %v1190
      %v1318 = vunpack.c.h.b16 %v1190
      %v1319 = vunpack.c.l.b16 %v1191
      %v1320 = vunpack.c.h.b16 %v1191
      %v1321 = vunpack.c.l.b16 %v1192
      %v1322 = vunpack.c.h.b16 %v1192
      %v1323 = vunpack.c.l.b16 %v1193
      %v1324 = vunpack.c.h.b16 %v1193
      %v1325 = vunpack.c.l.b16 %v1194
      %v1326 = vunpack.c.h.b16 %v1194
      %v1327 = vunpack.c.l.b16 %v1195
      %v1328 = vunpack.c.h.b16 %v1195
      %v1329 = vunpack.c.l.b16 %v1196
      %v1330 = vunpack.c.h.b16 %v1196
      %v1331 = vunpack.c.l.b16 %v1197
      %v1332 = vunpack.c.h.b16 %v1197
      %v1333 = vunpack.c.l.b16 %v1198
      %v1334 = vunpack.c.h.b16 %v1198
      %v1335 = vunpack.c.l.b16 %v1199
      %v1336 = vunpack.c.h.b16 %v1199
      %v1337 = vunpack.c.l.b16 %v1200
      %v1338 = vunpack.c.h.b16 %v1200
      %v1339 = vunpack.c.l.b16 %v1201
      %v1340 = vunpack.c.h.b16 %v1201
      %v1341 = vunpack.c.l.b16 %v1202
      %v1342 = vunpack.c.h.b16 %v1202
      %v1343 = vunpack.c.l.b16 %v1203
      %v1344 = vunpack.c.h.b16 %v1203
      %v1345 = vunpack.c.l.b16 %v1204
      %v1346 = vunpack.c.h.b16 %v1204
      %v1347 = vunpack.c.l.b16 %v1205
      %v1348 = vunpack.c.h.b16 %v1205
      %v1349 = vunpack.c.l.b16 %v1206
      %v1350 = vunpack.c.h.b16 %v1206
      %v1351 = vunpack.c.l.b16 %v1207
      %v1352 = vunpack.c.h.b16 %v1207
      %v1353 = vunpack.c.l.b16 %v1208
      %v1354 = vunpack.c.h.b16 %v1208
      %v1355 = vunpack.c.l.b16 %v1209
      %v1356 = vunpack.c.h.b16 %v1209
      %v1357 = vpack.c.b16 %v1259, %v1259
      %v1358 = vpack.c.b16 %v1260, %v1260
      %v1359 = vpack.c.b16 %v1261, %v1261
      %v1360 = vpack.c.b16 %v1262, %v1262
      %v1361 = vpack.c.b16 %v1263, %v1263
      %v1362 = vpack.c.b16 %v1264, %v1264
      %v1363 = vpack.c.b16 %v1265, %v1265
      %v1364 = vpack.c.b16 %v1266, %v1266
      %v1365 = vpack.c.b16 %v1267, %v1267
      %v1366 = vpack.c.b16 %v1268, %v1268
      %v1367 = vpack.c.b16 %v1269, %v1269
      %v1368 = vpack.c.b16 %v1270, %v1270
      %v1369 = vpack.c.b16 %v1271, %v1271
      %v1370 = vpack.c.b16 %v1272, %v1272
      %v1371 = vpack.c.b16 %v1273, %v1273
      %v1372 = vpack.c.b16 %v1274, %v1274
      %v1373 = vpack.c.b16 %v1275, %v1275
      %v1374 = vpack.c.b16 %v1276, %v1276
      %v1375 = vpack.c.b16 %v1277, %v1277
      %v1376 = vpack.c.b16 %v1278, %v1278
      %v1377 = vpack.c.b16 %v1279, %v1279
      %v1378 = vpack.c.b16 %v1280, %v1280
      %v1379 = vpack.c.b16 %v1281, %v1281
      %v1380 = vpack.c.b16 %v1282, %v1282
      %v1381 = vpack.c.b16 %v1283, %v1283
      %v1382 = vpack.c.b16 %v1284, %v1284
      %v1383 = vpack.c.b16 %v1285, %v1285
      %v1384 = vpack.c.b16 %v1286, %v1286
      %v1385 = vpack.c.b16 %v1287, %v1287
      %v1386 = vpack.c.b16 %v1288, %v1288
      %v1387 = vpack.c.b16 %v1289, %v1289
      %v1388 = vpack.c.b16 %v1290, %v1290
      %v1389 = vpack.c.b16 %v1291, %v1291
      %v1390 = vpack.c.b16 %v1292, %v1292
      %v1391 = vpack.c.b16 %v1293, %v1293
      %v1392 = vpack.c.b16 %v1294, %v1294
      %v1393 = vpack.c.b16 %v1295, %v1295
      %v1394 = vpack.c.b16 %v1296, %v1296
      %v1395 = vpack.c.b16 %v1297, %v1297
      %v1396 = vpack.c.b16 %v1298, %v1298
      %v1397 = vpack.c.b16 %v1299, %v1299
      %v1398 = vpack.c.b16 %v1300, %v1300
      %v1399 = vpack.c.b16 %v1301, %v1301
      %v1400 = vpack.c.b16 %v1302, %v1302
      %v1401 = vpack.c.b16 %v1303, %v1303
      %v1402 = vpack.c.b16 %v1304, %v1304
      %v1403 = vpack.c.b16 %v1305, %v1305
      %v1404 = vpack.c.b16 %v1306, %v1306
      %v1405 = vpack.c.b16 %v1307, %v1307
      %v1406 = vpack.c.b16 %v1308, %v1308
      %v1407 = vpack.c.b16 %v1309, %v1309
      %v1408 = vpack.c.b16 %v1310, %v1310
      %v1409 = vpack.c.b16 %v1311, %v1311
      %v1410 = vpack.c.b16 %v1312, %v1312
      %v1411 = vpack.c.b16 %v1313, %v1313
      %v1412 = vpack.c.b16 %v1314, %v1314
      %v1413 = vpack.c.b16 %v1315, %v1315
      %v1414 = vpack.c.b16 %v1316, %v1316
      %v1415 = vpack.c.b16 %v1317, %v1317
      %v1416 = vpack.c.b16 %v1318, %v1318
      %v1417 = vpack.c.b16 %v1319, %v1319
      %v1418 = vpack.c.b16 %v1320, %v1320
      %v1419 = vpack.c.b16 %v1321, %v1321
      %v1420 = vpack.c.b16 %v1322, %v1322
      %v1421 = vpack.c.b16 %v1323, %v1323
      %v1422 = vpack.c.b16 %v1324, %v1324
      %v1423 = vpack.c.b16 %v1325, %v1325
      %v1424 = vpack.c.b16 %v1326, %v1326
      %v1425 = vpack.c.b16 %v1327, %v1327
      %v1426 = vpack.c.b16 %v1328, %v1328
      %v1427 = vpack.c.b16 %v1329, %v1329
      %v1428 = vpack.c.b16 %v1330, %v1330
      %v1429 = vpack.c.b16 %v1331, %v1331
      %v1430 = vpack.c.b16 %v1332, %v1332
      %v1431 = vpack.c.b16 %v1333, %v1333
      %v1432 = vpack.c.b16 %v1334, %v1334
      %v1433 = vpack.c.b16 %v1335, %v1335
      %v1434 = vpack.c.b16 %v1336, %v1336
      %v1435 = vpack.c.b16 %v1337, %v1337
      %v1436 = vpack.c.b16 %v1338, %v1338
      %v1437 = vpack.c.b16 %v1339, %v1339
      %v1438 = vpack.c.b16 %v1340, %v1340
      %v1439 = vpack.c.b16 %v1341, %v1341
      %v1440 = vpack.c.b16 %v1342, %v1342
      %v1441 = vpack.c.b16 %v1343, %v1343
      %v1442 = vpack.c.b16 %v1344, %v1344
      %v1443 = vpack.c.b16 %v1345, %v1345
      %v1444 = vpack.c.b16 %v1346, %v1346
      %v1445 = vpack.c.b16 %v1347, %v1347
      %v1446 = vpack.c.b16 %v1348, %v1348
      %v1447 = vpack.c.b16 %v1349, %v1349
      %v1448 = vpack.c.b16 %v1350, %v1350
      %v1449 = vpack.c.b16 %v1351, %v1351
      %v1450 = vpack.c.b16 %v1352, %v1352
      %v1451 = vpack.c.b16 %v1353, %v1353
      %v1452 = vpack.c.b16 %v1354, %v1354
      %v1453 = vpack.c.b16 %v1355, %v1355
      %v1454 = vpack.c.b16 %v1356, %v1356
      %1553 = vst [vmem:[%s172] sm:$0xf] %v1357
      %1554 = vst [vmem:[%s172 + $0x4] sm:$0xf] %v1358
      %1555 = vst [vmem:[%s172 + $0x8] sm:$0xf] %v1359
      %1556 = vst [vmem:[%s172 + $0xc] sm:$0xf] %v1360
      %1557 = vst [vmem:[%s172 + $0x10] sm:$0xf] %v1361
      %1558 = vst [vmem:[%s172 + $0x14] sm:$0xf] %v1362
      %1559 = vst [vmem:[%s172 + $0x18] sm:$0xf] %v1363
      %1560 = vst [vmem:[%s172 + $0x1c] sm:$0xf] %v1364
      %1561 = vst [vmem:[%s172 + $0x20] sm:$0xf] %v1365
      %1562 = vst [vmem:[%s172 + $0x24] sm:$0xf] %v1366
      %1563 = vst [vmem:[%s172 + $0x28] sm:$0xf] %v1367
      %1564 = vst [vmem:[%s172 + $0x2c] sm:$0xf] %v1368
      %1565 = vst [vmem:[%s172 + $0x30] sm:$0xf] %v1369
      %1566 = vst [vmem:[%s172 + $0x34] sm:$0xf] %v1370
      %1567 = vst [vmem:[%s172 + $0x38] sm:$0xf] %v1371
      %1568 = vst [vmem:[%s172 + $0x3c] sm:$0xf] %v1372
      %1569 = vst [vmem:[%s172 + $0x40] sm:$0xf] %v1373
      %1570 = vst [vmem:[%s172 + $0x44] sm:$0xf] %v1374
      %1571 = vst [vmem:[%s172 + $0x48] sm:$0xf] %v1375
      %1572 = vst [vmem:[%s172 + $0x4c] sm:$0xf] %v1376
      %1573 = vst [vmem:[%s172 + $0x50] sm:$0xf] %v1377
      %1574 = vst [vmem:[%s172 + $0x54] sm:$0xf] %v1378
      %1575 = vst [vmem:[%s172 + $0x58] sm:$0xf] %v1379
      %1576 = vst [vmem:[%s172 + $0x5c] sm:$0xf] %v1380
      %1577 = vst [vmem:[%s172 + $0x60] sm:$0xf] %v1381
      %1578 = vst [vmem:[%s172 + $0x64] sm:$0xf] %v1382
      %1579 = vst [vmem:[%s172 + $0x68] sm:$0xf] %v1383
      %1580 = vst [vmem:[%s172 + $0x6c] sm:$0xf] %v1384
      %1581 = vst [vmem:[%s172 + $0x70] sm:$0xf] %v1385
      %1582 = vst [vmem:[%s172 + $0x74] sm:$0xf] %v1386
      %1583 = vst [vmem:[%s172 + $0x78] sm:$0xf] %v1387
      %1584 = vst [vmem:[%s172 + $0x7c] sm:$0xf] %v1388
      %1585 = vst [vmem:[%s172 + $0x80] sm:$0xf] %v1389
      %1586 = vst [vmem:[%s172 + $0x84] sm:$0xf] %v1390
      %1587 = vst [vmem:[%s172 + $0x88] sm:$0xf] %v1391
      %1588 = vst [vmem:[%s172 + $0x8c] sm:$0xf] %v1392
      %1589 = vst [vmem:[%s172 + $0x90] sm:$0xf] %v1393
      %1590 = vst [vmem:[%s172 + $0x94] sm:$0xf] %v1394
      %1591 = vst [vmem:[%s172 + $0x98] sm:$0xf] %v1395
      %1592 = vst [vmem:[%s172 + $0x9c] sm:$0xf] %v1396
      %1593 = vst [vmem:[%s172 + $0xa0] sm:$0xf] %v1397
      %1594 = vst [vmem:[%s172 + $0xa4] sm:$0xf] %v1398
      %1595 = vst [vmem:[%s172 + $0xa8] sm:$0xf] %v1399
      %1596 = vst [vmem:[%s172 + $0xac] sm:$0xf] %v1400
      %1597 = vst [vmem:[%s172 + $0xb0] sm:$0xf] %v1401
      %1598 = vst [vmem:[%s172 + $0xb4] sm:$0xf] %v1402
      %1599 = vst [vmem:[%s172 + $0xb8] sm:$0xf] %v1403
      %1600 = vst [vmem:[%s172 + $0xbc] sm:$0xf] %v1404
      %1601 = vst [vmem:[%s172 + $0xc0] sm:$0xf] %v1405
      %1602 = vst [vmem:[%s172 + $0xc4] sm:$0xf] %v1406
      %1603 = vst [vmem:[%s172 + $0xc8] sm:$0xf] %v1407
      %1604 = vst [vmem:[%s172 + $0xcc] sm:$0xf] %v1408
      %1605 = vst [vmem:[%s172 + $0xd0] sm:$0xf] %v1409
      %1606 = vst [vmem:[%s172 + $0xd4] sm:$0xf] %v1410
      %1607 = vst [vmem:[%s172 + $0xd8] sm:$0xf] %v1411
      %1608 = vst [vmem:[%s172 + $0xdc] sm:$0xf] %v1412
      %1609 = vst [vmem:[%s172 + $0xe0] sm:$0xf] %v1413
      %1610 = vst [vmem:[%s172 + $0xe4] sm:$0xf] %v1414
      %1611 = vst [vmem:[%s172 + $0xe8] sm:$0xf] %v1415
      %1612 = vst [vmem:[%s172 + $0xec] sm:$0xf] %v1416
      %1613 = vst [vmem:[%s172 + $0xf0] sm:$0xf] %v1417
      %1614 = vst [vmem:[%s172 + $0xf4] sm:$0xf] %v1418
      %1615 = vst [vmem:[%s172 + $0xf8] sm:$0xf] %v1419
      %1616 = vst [vmem:[%s172 + $0xfc] sm:$0xf] %v1420
      %1617 = vst [vmem:[%s172 + $0x100] sm:$0xf] %v1421
      %1618 = vst [vmem:[%s172 + $0x104] sm:$0xf] %v1422
      %1619 = vst [vmem:[%s172 + $0x108] sm:$0xf] %v1423
      %1620 = vst [vmem:[%s172 + $0x10c] sm:$0xf] %v1424
      %1621 = vst [vmem:[%s172 + $0x110] sm:$0xf] %v1425
      %1622 = vst [vmem:[%s172 + $0x114] sm:$0xf] %v1426
      %1623 = vst [vmem:[%s172 + $0x118] sm:$0xf] %v1427
      %1624 = vst [vmem:[%s172 + $0x11c] sm:$0xf] %v1428
      %1625 = vst [vmem:[%s172 + $0x120] sm:$0xf] %v1429
      %1626 = vst [vmem:[%s172 + $0x124] sm:$0xf] %v1430
      %1627 = vst [vmem:[%s172 + $0x128] sm:$0xf] %v1431
      %1628 = vst [vmem:[%s172 + $0x12c] sm:$0xf] %v1432
      %1629 = vst [vmem:[%s172 + $0x130] sm:$0xf] %v1433
      %1630 = vst [vmem:[%s172 + $0x134] sm:$0xf] %v1434
      %1631 = vst [vmem:[%s172 + $0x138] sm:$0xf] %v1435
      %1632 = vst [vmem:[%s172 + $0x13c] sm:$0xf] %v1436
      %1633 = vst [vmem:[%s172 + $0x140] sm:$0xf] %v1437
      %1634 = vst [vmem:[%s172 + $0x144] sm:$0xf] %v1438
      %1635 = vst [vmem:[%s172 + $0x148] sm:$0xf] %v1439
      %1636 = vst [vmem:[%s172 + $0x14c] sm:$0xf] %v1440
      %1637 = vst [vmem:[%s172 + $0x150] sm:$0xf] %v1441
      %1638 = vst [vmem:[%s172 + $0x154] sm:$0xf] %v1442
      %1639 = vst [vmem:[%s172 + $0x158] sm:$0xf] %v1443
      %1640 = vst [vmem:[%s172 + $0x15c] sm:$0xf] %v1444
      %1641 = vst [vmem:[%s172 + $0x160] sm:$0xf] %v1445
      %1642 = vst [vmem:[%s172 + $0x164] sm:$0xf] %v1446
      %1643 = vst [vmem:[%s172 + $0x168] sm:$0xf] %v1447
      %1644 = vst [vmem:[%s172 + $0x16c] sm:$0xf] %v1448
      %1645 = vst [vmem:[%s172 + $0x170] sm:$0xf] %v1449
      %1646 = vst [vmem:[%s172 + $0x174] sm:$0xf] %v1450
      %1647 = vst [vmem:[%s172 + $0x178] sm:$0xf] %v1451
      %1648 = vst [vmem:[%s172 + $0x17c] sm:$0xf] %v1452
      %1649 = vst [vmem:[%s172 + $0x180] sm:$0xf] %v1453
      %1650 = vst [vmem:[%s172 + $0x184] sm:$0xf] %v1454
      %s1651 = smul.u32 98, %s14
      %p1652 = scmp.lt.s32.totalorder %s1651, 195
      %s1653 = scalar_select %p1652, %s1651, 195
      %s1654 = smul.addr %s1653, 4
      %s1655 = scalar_lea.vmem %s3, %s1654
      // Predicated region
      $region33: #{net_forward.5} parent=31 // pred_check
        %p1656 = pneg %p100
      $region34: #{net_forward.5} parent=31 // pred_check_branch
        %1658 = sbr.rel (%p1656) target = $region36
      $region35: #{net_forward.5} parent=31 // pred_region
        %s1659 = smul.u32 98, %s14
      $region36: #{net_forward.5} parent=31 // pred_fallthru
        _
    $region32: #{net_forward.5} parent=5 // pred_fallthru
      _
    %p1660 = scmp.le.s32.totalorder 2, %s9
    // Predicated region
    $region37: #{net_forward.5} parent=5 // pred_check
      %p1661 = pneg %p1660
    $region38: #{net_forward.5} parent=5 // pred_check_branch
      %1663 = sbr.rel (%p1661) target = $region40
    $region39: #{net_forward.5} parent=5 // pred_region
      %s1664 = ssub.s32 %s9, 2
      // Predicated region
      $region41: #{net_forward.5} parent=39 // pred_check
        %p1665 = pneg %p106
      $region42: #{net_forward.5} parent=39 // pred_check_branch
        %1667 = sbr.rel (%p1665) target = $region44
      $region43: #{net_forward.5} parent=39 // pred_region
        %s1668 = smul.u32 98, %s15
        %p1669 = scmp.lt.s32.totalorder %s1668, 195
        %s1670 = scalar_select %p1669, %s1668, 195
        %s1671 = smul.addr %s1670, 4
        %s1672 = scalar_lea.vmem %s3, %s1671
      $region44: #{net_forward.5} parent=39 // pred_fallthru
        _
    $region40: #{net_forward.5} parent=5 // pred_fallthru
      _
  $region6: #{net_forward.5} parent=0 // loop_footer
    %s13 = sadd.s32 1, %s9
  $region7: #{net_forward.5} parent=0 // loop_footer_branch
    %8 = sbr.rel target = $region3
  $region8: #{net_forward.5} parent=0 // loop_exit
    _

// kernel: net_forward.6
$region0: #{net_forward.6}
  #allocation0 [shape = 'u32[]', space=smem, size = 0x4, offset = 0x4, fixed_abs, tag = 'smem constant byte address 0x4 - core index']
  #allocation1 [shape = 'u32[144,128]{1,0:T(1,128)}', space=vmem, size = 0x12000, scoped, tag = 'internal scratch']
  %s0 = inlined_call_operand.vmem [shape: bf16[2,14,2,14,256], index: 0, kind: input, shape index: {}, may-alias: {0,1}]
  %s1 = inlined_call_operand.vmem [shape: bf16[2,14,2,14,256], index: 1, kind: input, shape index: {}, may-alias: {0,1}]
  %s2 = inlined_call_operand.vmem [shape: bf16[2,14,14,128], index: 2, kind: output, shape index: {}]
  %s3 = sld [smem:[#allocation0]]
  $region94: #{net_forward.6} parent=0
    _
  %s5 = ssub.s32 1, %s3
  %s6 = scalar_select 0, %s5, %s3
  $region1: #{net_forward.6} parent=0
    #allocation2 [shape = 'u8[229376]{0}', space=vmem, size = 0x38000, scoped, tag = 'input window, operand 0, single buffered']
    #allocation3 [shape = 'u8[229376]{0}', space=vmem, size = 0x38000, scoped, tag = 'input window, operand 1, single buffered']
    // Predicated region
    $region2: #{net_forward.6} parent=1 // pred_check
      _
    $region3: #{net_forward.6} parent=1 // pred_check_branch
      %8 = sbr.rel (0) target = $region5
    $region4: #{net_forward.6} parent=1 // pred_region
      // Predicated region
      $region6: #{net_forward.6} parent=4 // pred_check
        _
      $region7: #{net_forward.6} parent=4 // pred_check_branch
        %10 = sbr.rel (0) target = $region9
      $region8: #{net_forward.6} parent=4 // pred_region
        // Predicated region
        $region10: #{net_forward.6} parent=8 // pred_check
          _
        $region11: #{net_forward.6} parent=8 // pred_check_branch
          %12 = sbr.rel (0) target = $region13
        $region12: #{net_forward.6} parent=8 // pred_region
          // Predicated region
          $region25: #{net_forward.6} parent=12 // pred_check
            _
          $region26: #{net_forward.6} parent=12 // pred_check_branch
            %138 = sbr.rel (0) target = $region28
          $region27: #{net_forward.6} parent=12 // pred_region
            loop: start=0, step=1, limit=1
            $region29: #{net_forward.6} parent=27 // loop_pre_header
              _
            $region30: #{net_forward.6} parent=27 // loop_header
              %s140 = sphi 0, %s144
              %p141 = scmp.ge.s32.totalorder %s140, 1
              %s145 = sphi %s0, %s0
              %s146 = sphi [#allocation2], [#allocation2]
            $region31: #{net_forward.6} parent=27 // loop_header_branch
              %143 = sbr.rel (%p141) target = $region35
            $region32: #{net_forward.6} parent=27 // loop_body
              %v147 = vld [vmem:[%s145] sm:$0xff]
              %148 = vst [vmem:[%s146] sm:$0xff] %v147
              %v149 = vld [vmem:[%s145 + $0x8] sm:$0xff]
              %150 = vst [vmem:[%s146 + $0x8] sm:$0xff] %v149
              %v151 = vld [vmem:[%s145 + $0x20] sm:$0xff]
              %152 = vst [vmem:[%s146 + $0x10] sm:$0xff] %v151
              %v153 = vld [vmem:[%s145 + $0x28] sm:$0xff]
              %154 = vst [vmem:[%s146 + $0x18] sm:$0xff] %v153
              %v155 = vld [vmem:[%s145 + $0x40] sm:$0xff]
              %156 = vst [vmem:[%s146 + $0x20] sm:$0xff] %v155
              %v157 = vld [vmem:[%s145 + $0x48] sm:$0xff]
              %158 = vst [vmem:[%s146 + $0x28] sm:$0xff] %v157
              %v159 = vld [vmem:[%s145 + $0x60] sm:$0xff]
              %160 = vst [vmem:[%s146 + $0x30] sm:$0xff] %v159
              %v161 = vld [vmem:[%s145 + $0x68] sm:$0xff]
              %162 = vst [vmem:[%s146 + $0x38] sm:$0xff] %v161
              %v163 = vld [vmem:[%s145 + $0x80] sm:$0xff]
              %164 = vst [vmem:[%s146 + $0x40] sm:$0xff] %v163
              %v165 = vld [vmem:[%s145 + $0x88] sm:$0xff]
              %166 = vst [vmem:[%s146 + $0x48] sm:$0xff] %v165
              %v167 = vld [vmem:[%s145 + $0xa0] sm:$0xff]
              %168 = vst [vmem:[%s146 + $0x50] sm:$0xff] %v167
              %v169 = vld [vmem:[%s145 + $0xa8] sm:$0xff]
              %170 = vst [vmem:[%s146 + $0x58] sm:$0xff] %v169
              %v171 = vld [vmem:[%s145 + $0xc0] sm:$0xff]
              %172 = vst [vmem:[%s146 + $0x60] sm:$0xff] %v171
              %v173 = vld [vmem:[%s145 + $0xc8] sm:$0xff]
              %174 = vst [vmem:[%s146 + $0x68] sm:$0xff] %v173
              %v175 = vld [vmem:[%s145 + $0xe0] sm:$0xff]
              %176 = vst [vmem:[%s146 + $0x70] sm:$0xff] %v175
              %v177 = vld [vmem:[%s145 + $0xe8] sm:$0xff]
              %178 = vst [vmem:[%s146 + $0x78] sm:$0xff] %v177
              %v179 = vld [vmem:[%s145 + $0x100] sm:$0xff]
              %180 = vst [vmem:[%s146 + $0x80] sm:$0xff] %v179
              %v181 = vld [vmem:[%s145 + $0x108] sm:$0xff]
              %182 = vst [vmem:[%s146 + $0x88] sm:$0xff] %v181
              %v183 = vld [vmem:[%s145 + $0x120] sm:$0xff]
              %184 = vst [vmem:[%s146 + $0x90] sm:$0xff] %v183
              %v185 = vld [vmem:[%s145 + $0x128] sm:$0xff]
              %186 = vst [vmem:[%s146 + $0x98] sm:$0xff] %v185
              %v187 = vld [vmem:[%s145 + $0x140] sm:$0xff]
              %188 = vst [vmem:[%s146 + $0xa0] sm:$0xff] %v187
              %v189 = vld [vmem:[%s145 + $0x148] sm:$0xff]
              %190 = vst [vmem:[%s146 + $0xa8] sm:$0xff] %v189
              %v191 = vld [vmem:[%s145 + $0x160] sm:$0xff]
              %192 = vst [vmem:[%s146 + $0xb0] sm:$0xff] %v191
              %v193 = vld [vmem:[%s145 + $0x168] sm:$0xff]
              %194 = vst [vmem:[%s146 + $0xb8] sm:$0xff] %v193
              %v195 = vld [vmem:[%s145 + $0x180] sm:$0xff]
              %196 = vst [vmem:[%s146 + $0xc0] sm:$0xff] %v195
              %v197 = vld [vmem:[%s145 + $0x188] sm:$0xff]
              %198 = vst [vmem:[%s146 + $0xc8] sm:$0xff] %v197
              %v199 = vld [vmem:[%s145 + $0x1a0] sm:$0xff]
              %200 = vst [vmem:[%s146 + $0xd0] sm:$0xff] %v199
              %v201 = vld [vmem:[%s145 + $0x1a8] sm:$0xff]
              %202 = vst [vmem:[%s146 + $0xd8] sm:$0xff] %v201
              %v203 = vld [vmem:[%s145 + $0x1c0] sm:$0xff]
              %204 = vst [vmem:[%s146 + $0xe0] sm:$0xff] %v203
              %v205 = vld [vmem:[%s145 + $0x1c8] sm:$0xff]
              %206 = vst [vmem:[%s146 + $0xe8] sm:$0xff] %v205
              %v207 = vld [vmem:[%s145 + $0x1e0] sm:$0xff]
              %208 = vst [vmem:[%s146 + $0xf0] sm:$0xff] %v207
              %v209 = vld [vmem:[%s145 + $0x1e8] sm:$0xff]
              %210 = vst [vmem:[%s146 + $0xf8] sm:$0xff] %v209
              %v211 = vld [vmem:[%s145 + $0x200] sm:$0xff]
              %212 = vst [vmem:[%s146 + $0x100] sm:$0xff] %v211
              %v213 = vld [vmem:[%s145 + $0x208] sm:$0xff]
              %214 = vst [vmem:[%s146 + $0x108] sm:$0xff] %v213
              %v215 = vld [vmem:[%s145 + $0x220] sm:$0xff]
              %216 = vst [vmem:[%s146 + $0x110] sm:$0xff] %v215
              %v217 = vld [vmem:[%s145 + $0x228] sm:$0xff]
              %218 = vst [vmem:[%s146 + $0x118] sm:$0xff] %v217
              %v219 = vld [vmem:[%s145 + $0x240] sm:$0xff]
              %220 = vst [vmem:[%s146 + $0x120] sm:$0xff] %v219
              %v221 = vld [vmem:[%s145 + $0x248] sm:$0xff]
              %222 = vst [vmem:[%s146 + $0x128] sm:$0xff] %v221
              %v223 = vld [vmem:[%s145 + $0x260] sm:$0xff]
              %224 = vst [vmem:[%s146 + $0x130] sm:$0xff] %v223
              %v225 = vld [vmem:[%s145 + $0x268] sm:$0xff]
              %226 = vst [vmem:[%s146 + $0x138] sm:$0xff] %v225
              %v227 = vld [vmem:[%s145 + $0x280] sm:$0xff]
              %228 = vst [vmem:[%s146 + $0x140] sm:$0xff] %v227
              %v229 = vld [vmem:[%s145 + $0x288] sm:$0xff]
              %230 = vst [vmem:[%s146 + $0x148] sm:$0xff] %v229
              %v231 = vld [vmem:[%s145 + $0x2a0] sm:$0xff]
              %232 = vst [vmem:[%s146 + $0x150] sm:$0xff] %v231
              %v233 = vld [vmem:[%s145 + $0x2a8] sm:$0xff]
              %234 = vst [vmem:[%s146 + $0x158] sm:$0xff] %v233
              %v235 = vld [vmem:[%s145 + $0x2c0] sm:$0xff]
              %236 = vst [vmem:[%s146 + $0x160] sm:$0xff] %v235
              %v237 = vld [vmem:[%s145 + $0x2c8] sm:$0xff]
              %238 = vst [vmem:[%s146 + $0x168] sm:$0xff] %v237
              %v239 = vld [vmem:[%s145 + $0x2e0] sm:$0xff]
              %240 = vst [vmem:[%s146 + $0x170] sm:$0xff] %v239
              %v241 = vld [vmem:[%s145 + $0x2e8] sm:$0xff]
              %242 = vst [vmem:[%s146 + $0x178] sm:$0xff] %v241
              %v243 = vld [vmem:[%s145 + $0x300] sm:$0xff]
              %244 = vst [vmem:[%s146 + $0x180] sm:$0xff] %v243
              %v245 = vld [vmem:[%s145 + $0x308] sm:$0xff]
              %246 = vst [vmem:[%s146 + $0x188] sm:$0xff] %v245
              %v247 = vld [vmem:[%s145 + $0x320] sm:$0xff]
              %248 = vst [vmem:[%s146 + $0x190] sm:$0xff] %v247
              %v249 = vld [vmem:[%s145 + $0x328] sm:$0xff]
              %250 = vst [vmem:[%s146 + $0x198] sm:$0xff] %v249
              %v251 = vld [vmem:[%s145 + $0x340] sm:$0xff]
              %252 = vst [vmem:[%s146 + $0x1a0] sm:$0xff] %v251
              %v253 = vld [vmem:[%s145 + $0x348] sm:$0xff]
              %254 = vst [vmem:[%s146 + $0x1a8] sm:$0xff] %v253
              %v255 = vld [vmem:[%s145 + $0x360] sm:$0xff]
              %256 = vst [vmem:[%s146 + $0x1b0] sm:$0xff] %v255
              %v257 = vld [vmem:[%s145 + $0x368] sm:$0xff]
              %258 = vst [vmem:[%s146 + $0x1b8] sm:$0xff] %v257
            $region33: #{net_forward.6} parent=27 // loop_footer
              %s144 = sadd.s32 1, %s140
            $region34: #{net_forward.6} parent=27 // loop_footer_branch
              %139 = sbr.rel target = $region30
            $region35: #{net_forward.6} parent=27 // loop_exit
              _
          $region28: #{net_forward.6} parent=12 // pred_fallthru
            _
          // Predicated region
          $region36: #{net_forward.6} parent=12 // pred_check
            _
          $region37: #{net_forward.6} parent=12 // pred_check_branch
            %260 = sbr.rel target = $region39
          $region38: #{net_forward.6} parent=12 // pred_region
            _
          $region39: #{net_forward.6} parent=12 // pred_fallthru
            _
        $region13: #{net_forward.6} parent=8 // pred_fallthru
          _
        // Predicated region
        $region14: #{net_forward.6} parent=8 // pred_check
          _
        $region15: #{net_forward.6} parent=8 // pred_check_branch
          %14 = sbr.rel target = $region17
        $region16: #{net_forward.6} parent=8 // pred_region
          %s16 = ssub.s32 256, 1
          loop: start=0, step=1, limit=1
          $region18: #{net_forward.6} parent=16 // loop_pre_header
            _
          $region19: #{net_forward.6} parent=16 // loop_header
            %s18 = sphi 0, %s22
            %p19 = scmp.ge.s32.totalorder %s18, 1
            %s23 = sphi %s0, %s0
            %s24 = sphi [#allocation2], [#allocation2]
          $region20: #{net_forward.6} parent=16 // loop_header_branch
            %21 = sbr.rel (%p19) target = $region24
          $region21: #{net_forward.6} parent=16 // loop_body
            %v25 = vld [vmem:[%s23] sm:%s16]
            %26 = vst [vmem:[%s24] sm:%s16] %v25
            %v27 = vld [vmem:[%s23 + $0x8] sm:%s16]
            %28 = vst [vmem:[%s24 + $0x8] sm:%s16] %v27
            %v29 = vld [vmem:[%s23 + $0x20] sm:%s16]
            %30 = vst [vmem:[%s24 + $0x10] sm:%s16] %v29
            %v31 = vld [vmem:[%s23 + $0x28] sm:%s16]
            %32 = vst [vmem:[%s24 + $0x18] sm:%s16] %v31
            %v33 = vld [vmem:[%s23 + $0x40] sm:%s16]
            %34 = vst [vmem:[%s24 + $0x20] sm:%s16] %v33
            %v35 = vld [vmem:[%s23 + $0x48] sm:%s16]
            %36 = vst [vmem:[%s24 + $0x28] sm:%s16] %v35
            %v37 = vld [vmem:[%s23 + $0x60] sm:%s16]
            %38 = vst [vmem:[%s24 + $0x30] sm:%s16] %v37
            %v39 = vld [vmem:[%s23 + $0x68] sm:%s16]
            %40 = vst [vmem:[%s24 + $0x38] sm:%s16] %v39
            %v41 = vld [vmem:[%s23 + $0x80] sm:%s16]
            %42 = vst [vmem:[%s24 + $0x40] sm:%s16] %v41
            %v43 = vld [vmem:[%s23 + $0x88] sm:%s16]
            %44 = vst [vmem:[%s24 + $0x48] sm:%s16] %v43
            %v45 = vld [vmem:[%s23 + $0xa0] sm:%s16]
            %46 = vst [vmem:[%s24 + $0x50] sm:%s16] %v45
            %v47 = vld [vmem:[%s23 + $0xa8] sm:%s16]
            %48 = vst [vmem:[%s24 + $0x58] sm:%s16] %v47
            %v49 = vld [vmem:[%s23 + $0xc0] sm:%s16]
            %50 = vst [vmem:[%s24 + $0x60] sm:%s16] %v49
            %v51 = vld [vmem:[%s23 + $0xc8] sm:%s16]
            %52 = vst [vmem:[%s24 + $0x68] sm:%s16] %v51
            %v53 = vld [vmem:[%s23 + $0xe0] sm:%s16]
            %54 = vst [vmem:[%s24 + $0x70] sm:%s16] %v53
            %v55 = vld [vmem:[%s23 + $0xe8] sm:%s16]
            %56 = vst [vmem:[%s24 + $0x78] sm:%s16] %v55
            %v57 = vld [vmem:[%s23 + $0x100] sm:%s16]
            %58 = vst [vmem:[%s24 + $0x80] sm:%s16] %v57
            %v59 = vld [vmem:[%s23 + $0x108] sm:%s16]
            %60 = vst [vmem:[%s24 + $0x88] sm:%s16] %v59
            %v61 = vld [vmem:[%s23 + $0x120] sm:%s16]
            %62 = vst [vmem:[%s24 + $0x90] sm:%s16] %v61
            %v63 = vld [vmem:[%s23 + $0x128] sm:%s16]
            %64 = vst [vmem:[%s24 + $0x98] sm:%s16] %v63
            %v65 = vld [vmem:[%s23 + $0x140] sm:%s16]
            %66 = vst [vmem:[%s24 + $0xa0] sm:%s16] %v65
            %v67 = vld [vmem:[%s23 + $0x148] sm:%s16]
            %68 = vst [vmem:[%s24 + $0xa8] sm:%s16] %v67
            %v69 = vld [vmem:[%s23 + $0x160] sm:%s16]
            %70 = vst [vmem:[%s24 + $0xb0] sm:%s16] %v69
            %v71 = vld [vmem:[%s23 + $0x168] sm:%s16]
            %72 = vst [vmem:[%s24 + $0xb8] sm:%s16] %v71
            %v73 = vld [vmem:[%s23 + $0x180] sm:%s16]
            %74 = vst [vmem:[%s24 + $0xc0] sm:%s16] %v73
            %v75 = vld [vmem:[%s23 + $0x188] sm:%s16]
            %76 = vst [vmem:[%s24 + $0xc8] sm:%s16] %v75
            %v77 = vld [vmem:[%s23 + $0x1a0] sm:%s16]
            %78 = vst [vmem:[%s24 + $0xd0] sm:%s16] %v77
            %v79 = vld [vmem:[%s23 + $0x1a8] sm:%s16]
            %80 = vst [vmem:[%s24 + $0xd8] sm:%s16] %v79
            %v81 = vld [vmem:[%s23 + $0x1c0] sm:%s16]
            %82 = vst [vmem:[%s24 + $0xe0] sm:%s16] %v81
            %v83 = vld [vmem:[%s23 + $0x1c8] sm:%s16]
            %84 = vst [vmem:[%s24 + $0xe8] sm:%s16] %v83
            %v85 = vld [vmem:[%s23 + $0x1e0] sm:%s16]
            %86 = vst [vmem:[%s24 + $0xf0] sm:%s16] %v85
            %v87 = vld [vmem:[%s23 + $0x1e8] sm:%s16]
            %88 = vst [vmem:[%s24 + $0xf8] sm:%s16] %v87
            %v89 = vld [vmem:[%s23 + $0x200] sm:%s16]
            %90 = vst [vmem:[%s24 + $0x100] sm:%s16] %v89
            %v91 = vld [vmem:[%s23 + $0x208] sm:%s16]
            %92 = vst [vmem:[%s24 + $0x108] sm:%s16] %v91
            %v93 = vld [vmem:[%s23 + $0x220] sm:%s16]
            %94 = vst [vmem:[%s24 + $0x110] sm:%s16] %v93
            %v95 = vld [vmem:[%s23 + $0x228] sm:%s16]
            %96 = vst [vmem:[%s24 + $0x118] sm:%s16] %v95
            %v97 = vld [vmem:[%s23 + $0x240] sm:%s16]
            %98 = vst [vmem:[%s24 + $0x120] sm:%s16] %v97
            %v99 = vld [vmem:[%s23 + $0x248] sm:%s16]
            %100 = vst [vmem:[%s24 + $0x128] sm:%s16] %v99
            %v101 = vld [vmem:[%s23 + $0x260] sm:%s16]
            %102 = vst [vmem:[%s24 + $0x130] sm:%s16] %v101
            %v103 = vld [vmem:[%s23 + $0x268] sm:%s16]
            %104 = vst [vmem:[%s24 + $0x138] sm:%s16] %v103
            %v105 = vld [vmem:[%s23 + $0x280] sm:%s16]
            %106 = vst [vmem:[%s24 + $0x140] sm:%s16] %v105
            %v107 = vld [vmem:[%s23 + $0x288] sm:%s16]
            %108 = vst [vmem:[%s24 + $0x148] sm:%s16] %v107
            %v109 = vld [vmem:[%s23 + $0x2a0] sm:%s16]
            %110 = vst [vmem:[%s24 + $0x150] sm:%s16] %v109
            %v111 = vld [vmem:[%s23 + $0x2a8] sm:%s16]
            %112 = vst [vmem:[%s24 + $0x158] sm:%s16] %v111
            %v113 = vld [vmem:[%s23 + $0x2c0] sm:%s16]
            %114 = vst [vmem:[%s24 + $0x160] sm:%s16] %v113
            %v115 = vld [vmem:[%s23 + $0x2c8] sm:%s16]
            %116 = vst [vmem:[%s24 + $0x168] sm:%s16] %v115
            %v117 = vld [vmem:[%s23 + $0x2e0] sm:%s16]
            %118 = vst [vmem:[%s24 + $0x170] sm:%s16] %v117
            %v119 = vld [vmem:[%s23 + $0x2e8] sm:%s16]
            %120 = vst [vmem:[%s24 + $0x178] sm:%s16] %v119
            %v121 = vld [vmem:[%s23 + $0x300] sm:%s16]
            %122 = vst [vmem:[%s24 + $0x180] sm:%s16] %v121
            %v123 = vld [vmem:[%s23 + $0x308] sm:%s16]
            %124 = vst [vmem:[%s24 + $0x188] sm:%s16] %v123
            %v125 = vld [vmem:[%s23 + $0x320] sm:%s16]
            %126 = vst [vmem:[%s24 + $0x190] sm:%s16] %v125
            %v127 = vld [vmem:[%s23 + $0x328] sm:%s16]
            %128 = vst [vmem:[%s24 + $0x198] sm:%s16] %v127
            %v129 = vld [vmem:[%s23 + $0x340] sm:%s16]
            %130 = vst [vmem:[%s24 + $0x1a0] sm:%s16] %v129
            %v131 = vld [vmem:[%s23 + $0x348] sm:%s16]
            %132 = vst [vmem:[%s24 + $0x1a8] sm:%s16] %v131
            %v133 = vld [vmem:[%s23 + $0x360] sm:%s16]
            %134 = vst [vmem:[%s24 + $0x1b0] sm:%s16] %v133
            %v135 = vld [vmem:[%s23 + $0x368] sm:%s16]
            %136 = vst [vmem:[%s24 + $0x1b8] sm:%s16] %v135
          $region22: #{net_forward.6} parent=16 // loop_footer
            %s22 = sadd.s32 1, %s18
          $region23: #{net_forward.6} parent=16 // loop_footer_branch
            %17 = sbr.rel target = $region19
          $region24: #{net_forward.6} parent=16 // loop_exit
            _
        $region17: #{net_forward.6} parent=8 // pred_fallthru
          _
      $region9: #{net_forward.6} parent=4 // pred_fallthru
        _
      %261 = vnop
    $region5: #{net_forward.6} parent=1 // pred_fallthru
      _
    // Predicated region
    $region40: #{net_forward.6} parent=1 // pred_check
      _
    $region41: #{net_forward.6} parent=1 // pred_check_branch
      %263 = sbr.rel (0) target = $region43
    $region42: #{net_forward.6} parent=1 // pred_region
      %s264 = scalar_lea.vmem %s1, 16
      // Predicated region
      $region44: #{net_forward.6} parent=42 // pred_check
        _
      $region45: #{net_forward.6} parent=42 // pred_check_branch
        %266 = sbr.rel (0) target = $region47
      $region46: #{net_forward.6} parent=42 // pred_region
        // Predicated region
        $region48: #{net_forward.6} parent=46 // pred_check
          _
        $region49: #{net_forward.6} parent=46 // pred_check_branch
          %268 = sbr.rel (0) target = $region51
        $region50: #{net_forward.6} parent=46 // pred_region
          // Predicated region
          $region63: #{net_forward.6} parent=50 // pred_check
            _
          $region64: #{net_forward.6} parent=50 // pred_check_branch
            %394 = sbr.rel (0) target = $region66
          $region65: #{net_forward.6} parent=50 // pred_region
            loop: start=0, step=1, limit=1
            $region67: #{net_forward.6} parent=65 // loop_pre_header
              _
            $region68: #{net_forward.6} parent=65 // loop_header
              %s396 = sphi 0, %s400
              %p397 = scmp.ge.s32.totalorder %s396, 1
              %s401 = sphi %s264, %s264
              %s402 = sphi [#allocation3], [#allocation3]
            $region69: #{net_forward.6} parent=65 // loop_header_branch
              %399 = sbr.rel (%p397) target = $region73
            $region70: #{net_forward.6} parent=65 // loop_body
              %v403 = vld [vmem:[%s401] sm:$0xff]
              %404 = vst [vmem:[%s402] sm:$0xff] %v403
              %v405 = vld [vmem:[%s401 + $0x8] sm:$0xff]
              %406 = vst [vmem:[%s402 + $0x8] sm:$0xff] %v405
              %v407 = vld [vmem:[%s401 + $0x20] sm:$0xff]
              %408 = vst [vmem:[%s402 + $0x10] sm:$0xff] %v407
              %v409 = vld [vmem:[%s401 + $0x28] sm:$0xff]
              %410 = vst [vmem:[%s402 + $0x18] sm:$0xff] %v409
              %v411 = vld [vmem:[%s401 + $0x40] sm:$0xff]
              %412 = vst [vmem:[%s402 + $0x20] sm:$0xff] %v411
              %v413 = vld [vmem:[%s401 + $0x48] sm:$0xff]
              %414 = vst [vmem:[%s402 + $0x28] sm:$0xff] %v413
              %v415 = vld [vmem:[%s401 + $0x60] sm:$0xff]
              %416 = vst [vmem:[%s402 + $0x30] sm:$0xff] %v415
              %v417 = vld [vmem:[%s401 + $0x68] sm:$0xff]
              %418 = vst [vmem:[%s402 + $0x38] sm:$0xff] %v417
              %v419 = vld [vmem:[%s401 + $0x80] sm:$0xff]
              %420 = vst [vmem:[%s402 + $0x40] sm:$0xff] %v419
              %v421 = vld [vmem:[%s401 + $0x88] sm:$0xff]
              %422 = vst [vmem:[%s402 + $0x48] sm:$0xff] %v421
              %v423 = vld [vmem:[%s401 + $0xa0] sm:$0xff]
              %424 = vst [vmem:[%s402 + $0x50] sm:$0xff] %v423
              %v425 = vld [vmem:[%s401 + $0xa8] sm:$0xff]
              %426 = vst [vmem:[%s402 + $0x58] sm:$0xff] %v425
              %v427 = vld [vmem:[%s401 + $0xc0] sm:$0xff]
              %428 = vst [vmem:[%s402 + $0x60] sm:$0xff] %v427
              %v429 = vld [vmem:[%s401 + $0xc8] sm:$0xff]
              %430 = vst [vmem:[%s402 + $0x68] sm:$0xff] %v429
              %v431 = vld [vmem:[%s401 + $0xe0] sm:$0xff]
              %432 = vst [vmem:[%s402 + $0x70] sm:$0xff] %v431
              %v433 = vld [vmem:[%s401 + $0xe8] sm:$0xff]
              %434 = vst [vmem:[%s402 + $0x78] sm:$0xff] %v433
              %v435 = vld [vmem:[%s401 + $0x100] sm:$0xff]
              %436 = vst [vmem:[%s402 + $0x80] sm:$0xff] %v435
              %v437 = vld [vmem:[%s401 + $0x108] sm:$0xff]
              %438 = vst [vmem:[%s402 + $0x88] sm:$0xff] %v437
              %v439 = vld [vmem:[%s401 + $0x120] sm:$0xff]
              %440 = vst [vmem:[%s402 + $0x90] sm:$0xff] %v439
              %v441 = vld [vmem:[%s401 + $0x128] sm:$0xff]
              %442 = vst [vmem:[%s402 + $0x98] sm:$0xff] %v441
              %v443 = vld [vmem:[%s401 + $0x140] sm:$0xff]
              %444 = vst [vmem:[%s402 + $0xa0] sm:$0xff] %v443
              %v445 = vld [vmem:[%s401 + $0x148] sm:$0xff]
              %446 = vst [vmem:[%s402 + $0xa8] sm:$0xff] %v445
              %v447 = vld [vmem:[%s401 + $0x160] sm:$0xff]
              %448 = vst [vmem:[%s402 + $0xb0] sm:$0xff] %v447
              %v449 = vld [vmem:[%s401 + $0x168] sm:$0xff]
              %450 = vst [vmem:[%s402 + $0xb8] sm:$0xff] %v449
              %v451 = vld [vmem:[%s401 + $0x180] sm:$0xff]
              %452 = vst [vmem:[%s402 + $0xc0] sm:$0xff] %v451
              %v453 = vld [vmem:[%s401 + $0x188] sm:$0xff]
              %454 = vst [vmem:[%s402 + $0xc8] sm:$0xff] %v453
              %v455 = vld [vmem:[%s401 + $0x1a0] sm:$0xff]
              %456 = vst [vmem:[%s402 + $0xd0] sm:$0xff] %v455
              %v457 = vld [vmem:[%s401 + $0x1a8] sm:$0xff]
              %458 = vst [vmem:[%s402 + $0xd8] sm:$0xff] %v457
              %v459 = vld [vmem:[%s401 + $0x1c0] sm:$0xff]
              %460 = vst [vmem:[%s402 + $0xe0] sm:$0xff] %v459
              %v461 = vld [vmem:[%s401 + $0x1c8] sm:$0xff]
              %462 = vst [vmem:[%s402 + $0xe8] sm:$0xff] %v461
              %v463 = vld [vmem:[%s401 + $0x1e0] sm:$0xff]
              %464 = vst [vmem:[%s402 + $0xf0] sm:$0xff] %v463
              %v465 = vld [vmem:[%s401 + $0x1e8] sm:$0xff]
              %466 = vst [vmem:[%s402 + $0xf8] sm:$0xff] %v465
              %v467 = vld [vmem:[%s401 + $0x200] sm:$0xff]
              %468 = vst [vmem:[%s402 + $0x100] sm:$0xff] %v467
              %v469 = vld [vmem:[%s401 + $0x208] sm:$0xff]
              %470 = vst [vmem:[%s402 + $0x108] sm:$0xff] %v469
              %v471 = vld [vmem:[%s401 + $0x220] sm:$0xff]
              %472 = vst [vmem:[%s402 + $0x110] sm:$0xff] %v471
              %v473 = vld [vmem:[%s401 + $0x228] sm:$0xff]
              %474 = vst [vmem:[%s402 + $0x118] sm:$0xff] %v473
              %v475 = vld [vmem:[%s401 + $0x240] sm:$0xff]
              %476 = vst [vmem:[%s402 + $0x120] sm:$0xff] %v475
              %v477 = vld [vmem:[%s401 + $0x248] sm:$0xff]
              %478 = vst [vmem:[%s402 + $0x128] sm:$0xff] %v477
              %v479 = vld [vmem:[%s401 + $0x260] sm:$0xff]
              %480 = vst [vmem:[%s402 + $0x130] sm:$0xff] %v479
              %v481 = vld [vmem:[%s401 + $0x268] sm:$0xff]
              %482 = vst [vmem:[%s402 + $0x138] sm:$0xff] %v481
              %v483 = vld [vmem:[%s401 + $0x280] sm:$0xff]
              %484 = vst [vmem:[%s402 + $0x140] sm:$0xff] %v483
              %v485 = vld [vmem:[%s401 + $0x288] sm:$0xff]
              %486 = vst [vmem:[%s402 + $0x148] sm:$0xff] %v485
              %v487 = vld [vmem:[%s401 + $0x2a0] sm:$0xff]
              %488 = vst [vmem:[%s402 + $0x150] sm:$0xff] %v487
              %v489 = vld [vmem:[%s401 + $0x2a8] sm:$0xff]
              %490 = vst [vmem:[%s402 + $0x158] sm:$0xff] %v489
              %v491 = vld [vmem:[%s401 + $0x2c0] sm:$0xff]
              %492 = vst [vmem:[%s402 + $0x160] sm:$0xff] %v491
              %v493 = vld [vmem:[%s401 + $0x2c8] sm:$0xff]
              %494 = vst [vmem:[%s402 + $0x168] sm:$0xff] %v493
              %v495 = vld [vmem:[%s401 + $0x2e0] sm:$0xff]
              %496 = vst [vmem:[%s402 + $0x170] sm:$0xff] %v495
              %v497 = vld [vmem:[%s401 + $0x2e8] sm:$0xff]
              %498 = vst [vmem:[%s402 + $0x178] sm:$0xff] %v497
              %v499 = vld [vmem:[%s401 + $0x300] sm:$0xff]
              %500 = vst [vmem:[%s402 + $0x180] sm:$0xff] %v499
              %v501 = vld [vmem:[%s401 + $0x308] sm:$0xff]
              %502 = vst [vmem:[%s402 + $0x188] sm:$0xff] %v501
              %v503 = vld [vmem:[%s401 + $0x320] sm:$0xff]
              %504 = vst [vmem:[%s402 + $0x190] sm:$0xff] %v503
              %v505 = vld [vmem:[%s401 + $0x328] sm:$0xff]
              %506 = vst [vmem:[%s402 + $0x198] sm:$0xff] %v505
              %v507 = vld [vmem:[%s401 + $0x340] sm:$0xff]
              %508 = vst [vmem:[%s402 + $0x1a0] sm:$0xff] %v507
              %v509 = vld [vmem:[%s401 + $0x348] sm:$0xff]
              %510 = vst [vmem:[%s402 + $0x1a8] sm:$0xff] %v509
              %v511 = vld [vmem:[%s401 + $0x360] sm:$0xff]
              %512 = vst [vmem:[%s402 + $0x1b0] sm:$0xff] %v511
              %v513 = vld [vmem:[%s401 + $0x368] sm:$0xff]
              %514 = vst [vmem:[%s402 + $0x1b8] sm:$0xff] %v513
            $region71: #{net_forward.6} parent=65 // loop_footer
              %s400 = sadd.s32 1, %s396
            $region72: #{net_forward.6} parent=65 // loop_footer_branch
              %395 = sbr.rel target = $region68
            $region73: #{net_forward.6} parent=65 // loop_exit
              _
          $region66: #{net_forward.6} parent=50 // pred_fallthru
            _
          // Predicated region
          $region74: #{net_forward.6} parent=50 // pred_check
            _
          $region75: #{net_forward.6} parent=50 // pred_check_branch
            %516 = sbr.rel target = $region77
          $region76: #{net_forward.6} parent=50 // pred_region
            _
          $region77: #{net_forward.6} parent=50 // pred_fallthru
            _
        $region51: #{net_forward.6} parent=46 // pred_fallthru
          _
        // Predicated region
        $region52: #{net_forward.6} parent=46 // pred_check
          _
        $region53: #{net_forward.6} parent=46 // pred_check_branch
          %270 = sbr.rel target = $region55
        $region54: #{net_forward.6} parent=46 // pred_region
          %s272 = ssub.s32 256, 1
          loop: start=0, step=1, limit=1
          $region56: #{net_forward.6} parent=54 // loop_pre_header
            _
          $region57: #{net_forward.6} parent=54 // loop_header
            %s274 = sphi 0, %s278
            %p275 = scmp.ge.s32.totalorder %s274, 1
            %s279 = sphi %s264, %s264
            %s280 = sphi [#allocation3], [#allocation3]
          $region58: #{net_forward.6} parent=54 // loop_header_branch
            %277 = sbr.rel (%p275) target = $region62
          $region59: #{net_forward.6} parent=54 // loop_body
            %v281 = vld [vmem:[%s279] sm:%s272]
            %282 = vst [vmem:[%s280] sm:%s272] %v281
            %v283 = vld [vmem:[%s279 + $0x8] sm:%s272]
            %284 = vst [vmem:[%s280 + $0x8] sm:%s272] %v283
            %v285 = vld [vmem:[%s279 + $0x20] sm:%s272]
            %286 = vst [vmem:[%s280 + $0x10] sm:%s272] %v285
            %v287 = vld [vmem:[%s279 + $0x28] sm:%s272]
            %288 = vst [vmem:[%s280 + $0x18] sm:%s272] %v287
            %v289 = vld [vmem:[%s279 + $0x40] sm:%s272]
            %290 = vst [vmem:[%s280 + $0x20] sm:%s272] %v289
            %v291 = vld [vmem:[%s279 + $0x48] sm:%s272]
            %292 = vst [vmem:[%s280 + $0x28] sm:%s272] %v291
            %v293 = vld [vmem:[%s279 + $0x60] sm:%s272]
            %294 = vst [vmem:[%s280 + $0x30] sm:%s272] %v293
            %v295 = vld [vmem:[%s279 + $0x68] sm:%s272]
            %296 = vst [vmem:[%s280 + $0x38] sm:%s272] %v295
            %v297 = vld [vmem:[%s279 + $0x80] sm:%s272]
            %298 = vst [vmem:[%s280 + $0x40] sm:%s272] %v297
            %v299 = vld [vmem:[%s279 + $0x88] sm:%s272]
            %300 = vst [vmem:[%s280 + $0x48] sm:%s272] %v299
            %v301 = vld [vmem:[%s279 + $0xa0] sm:%s272]
            %302 = vst [vmem:[%s280 + $0x50] sm:%s272] %v301
            %v303 = vld [vmem:[%s279 + $0xa8] sm:%s272]
            %304 = vst [vmem:[%s280 + $0x58] sm:%s272] %v303
            %v305 = vld [vmem:[%s279 + $0xc0] sm:%s272]
            %306 = vst [vmem:[%s280 + $0x60] sm:%s272] %v305
            %v307 = vld [vmem:[%s279 + $0xc8] sm:%s272]
            %308 = vst [vmem:[%s280 + $0x68] sm:%s272] %v307
            %v309 = vld [vmem:[%s279 + $0xe0] sm:%s272]
            %310 = vst [vmem:[%s280 + $0x70] sm:%s272] %v309
            %v311 = vld [vmem:[%s279 + $0xe8] sm:%s272]
            %312 = vst [vmem:[%s280 + $0x78] sm:%s272] %v311
            %v313 = vld [vmem:[%s279 + $0x100] sm:%s272]
            %314 = vst [vmem:[%s280 + $0x80] sm:%s272] %v313
            %v315 = vld [vmem:[%s279 + $0x108] sm:%s272]
            %316 = vst [vmem:[%s280 + $0x88] sm:%s272] %v315
            %v317 = vld [vmem:[%s279 + $0x120] sm:%s272]
            %318 = vst [vmem:[%s280 + $0x90] sm:%s272] %v317
            %v319 = vld [vmem:[%s279 + $0x128] sm:%s272]
            %320 = vst [vmem:[%s280 + $0x98] sm:%s272] %v319
            %v321 = vld [vmem:[%s279 + $0x140] sm:%s272]
            %322 = vst [vmem:[%s280 + $0xa0] sm:%s272] %v321
            %v323 = vld [vmem:[%s279 + $0x148] sm:%s272]
            %324 = vst [vmem:[%s280 + $0xa8] sm:%s272] %v323
            %v325 = vld [vmem:[%s279 + $0x160] sm:%s272]
            %326 = vst [vmem:[%s280 + $0xb0] sm:%s272] %v325
            %v327 = vld [vmem:[%s279 + $0x168] sm:%s272]
            %328 = vst [vmem:[%s280 + $0xb8] sm:%s272] %v327
            %v329 = vld [vmem:[%s279 + $0x180] sm:%s272]
            %330 = vst [vmem:[%s280 + $0xc0] sm:%s272] %v329
            %v331 = vld [vmem:[%s279 + $0x188] sm:%s272]
            %332 = vst [vmem:[%s280 + $0xc8] sm:%s272] %v331
            %v333 = vld [vmem:[%s279 + $0x1a0] sm:%s272]
            %334 = vst [vmem:[%s280 + $0xd0] sm:%s272] %v333
            %v335 = vld [vmem:[%s279 + $0x1a8] sm:%s272]
            %336 = vst [vmem:[%s280 + $0xd8] sm:%s272] %v335
            %v337 = vld [vmem:[%s279 + $0x1c0] sm:%s272]
            %338 = vst [vmem:[%s280 + $0xe0] sm:%s272] %v337
            %v339 = vld [vmem:[%s279 + $0x1c8] sm:%s272]
            %340 = vst [vmem:[%s280 + $0xe8] sm:%s272] %v339
            %v341 = vld [vmem:[%s279 + $0x1e0] sm:%s272]
            %342 = vst [vmem:[%s280 + $0xf0] sm:%s272] %v341
            %v343 = vld [vmem:[%s279 + $0x1e8] sm:%s272]
            %344 = vst [vmem:[%s280 + $0xf8] sm:%s272] %v343
            %v345 = vld [vmem:[%s279 + $0x200] sm:%s272]
            %346 = vst [vmem:[%s280 + $0x100] sm:%s272] %v345
            %v347 = vld [vmem:[%s279 + $0x208] sm:%s272]
            %348 = vst [vmem:[%s280 + $0x108] sm:%s272] %v347
            %v349 = vld [vmem:[%s279 + $0x220] sm:%s272]
            %350 = vst [vmem:[%s280 + $0x110] sm:%s272] %v349
            %v351 = vld [vmem:[%s279 + $0x228] sm:%s272]
            %352 = vst [vmem:[%s280 + $0x118] sm:%s272] %v351
            %v353 = vld [vmem:[%s279 + $0x240] sm:%s272]
            %354 = vst [vmem:[%s280 + $0x120] sm:%s272] %v353
            %v355 = vld [vmem:[%s279 + $0x248] sm:%s272]
            %356 = vst [vmem:[%s280 + $0x128] sm:%s272] %v355
            %v357 = vld [vmem:[%s279 + $0x260] sm:%s272]
            %358 = vst [vmem:[%s280 + $0x130] sm:%s272] %v357
            %v359 = vld [vmem:[%s279 + $0x268] sm:%s272]
            %360 = vst [vmem:[%s280 + $0x138] sm:%s272] %v359
            %v361 = vld [vmem:[%s279 + $0x280] sm:%s272]
            %362 = vst [vmem:[%s280 + $0x140] sm:%s272] %v361
            %v363 = vld [vmem:[%s279 + $0x288] sm:%s272]
            %364 = vst [vmem:[%s280 + $0x148] sm:%s272] %v363
            %v365 = vld [vmem:[%s279 + $0x2a0] sm:%s272]
            %366 = vst [vmem:[%s280 + $0x150] sm:%s272] %v365
            %v367 = vld [vmem:[%s279 + $0x2a8] sm:%s272]
            %368 = vst [vmem:[%s280 + $0x158] sm:%s272] %v367
            %v369 = vld [vmem:[%s279 + $0x2c0] sm:%s272]
            %370 = vst [vmem:[%s280 + $0x160] sm:%s272] %v369
            %v371 = vld [vmem:[%s279 + $0x2c8] sm:%s272]
            %372 = vst [vmem:[%s280 + $0x168] sm:%s272] %v371
            %v373 = vld [vmem:[%s279 + $0x2e0] sm:%s272]
            %374 = vst [vmem:[%s280 + $0x170] sm:%s272] %v373
            %v375 = vld [vmem:[%s279 + $0x2e8] sm:%s272]
            %376 = vst [vmem:[%s280 + $0x178] sm:%s272] %v375
            %v377 = vld [vmem:[%s279 + $0x300] sm:%s272]
            %378 = vst [vmem:[%s280 + $0x180] sm:%s272] %v377
            %v379 = vld [vmem:[%s279 + $0x308] sm:%s272]
            %380 = vst [vmem:[%s280 + $0x188] sm:%s272] %v379
            %v381 = vld [vmem:[%s279 + $0x320] sm:%s272]
            %382 = vst [vmem:[%s280 + $0x190] sm:%s272] %v381
            %v383 = vld [vmem:[%s279 + $0x328] sm:%s272]
            %384 = vst [vmem:[%s280 + $0x198] sm:%s272] %v383
            %v385 = vld [vmem:[%s279 + $0x340] sm:%s272]
            %386 = vst [vmem:[%s280 + $0x1a0] sm:%s272] %v385
            %v387 = vld [vmem:[%s279 + $0x348] sm:%s272]
            %388 = vst [vmem:[%s280 + $0x1a8] sm:%s272] %v387
            %v389 = vld [vmem:[%s279 + $0x360] sm:%s272]
            %390 = vst [vmem:[%s280 + $0x1b0] sm:%s272] %v389
            %v391 = vld [vmem:[%s279 + $0x368] sm:%s272]
            %392 = vst [vmem:[%s280 + $0x1b8] sm:%s272] %v391
          $region60: #{net_forward.6} parent=54 // loop_footer
            %s278 = sadd.s32 1, %s274
          $region61: #{net_forward.6} parent=54 // loop_footer_branch
            %273 = sbr.rel target = $region57
          $region62: #{net_forward.6} parent=54 // loop_exit
            _
        $region55: #{net_forward.6} parent=46 // pred_fallthru
          _
      $region47: #{net_forward.6} parent=42 // pred_fallthru
        _
      %517 = vnop
    $region43: #{net_forward.6} parent=1 // pred_fallthru
      _
    // Predicated region
    $region78: #{net_forward.6} parent=1 // pred_check
      _
    $region79: #{net_forward.6} parent=1 // pred_check_branch
      %519 = sbr.rel (0) target = $region81
    $region80: #{net_forward.6} parent=1 // pred_region
      _
    $region81: #{net_forward.6} parent=1 // pred_fallthru
      _
    // Predicated region
    $region82: #{net_forward.6} parent=1 // pred_check
      _
    $region83: #{net_forward.6} parent=1 // pred_check_branch
      %521 = sbr.rel (0) target = $region85
    $region84: #{net_forward.6} parent=1 // pred_region
      _
    $region85: #{net_forward.6} parent=1 // pred_fallthru
      _
    %v522 = vld [vmem:[#allocation2] sm:$0xff]
    %v523 = vld [vmem:[#allocation2 + $0x8] sm:$0x77]
    %v524 = vld [vmem:[#allocation2 + $0x10] sm:$0xff]
    %v525 = vld [vmem:[#allocation2 + $0x18] sm:$0x77]
    %v526 = vld [vmem:[#allocation2 + $0x20] sm:$0xff]
    %v527 = vld [vmem:[#allocation2 + $0x28] sm:$0x77]
    %v528 = vld [vmem:[#allocation2 + $0x30] sm:$0xff]
    %v529 = vld [vmem:[#allocation2 + $0x38] sm:$0x77]
    %v530 = vld [vmem:[#allocation2 + $0x40] sm:$0xff]
    %v531 = vld [vmem:[#allocation2 + $0x48] sm:$0x77]
    %v532 = vld [vmem:[#allocation2 + $0x50] sm:$0xff]
    %v533 = vld [vmem:[#allocation2 + $0x58] sm:$0x77]
    %v534 = vld [vmem:[#allocation2 + $0x60] sm:$0xff]
    %v535 = vld [vmem:[#allocation2 + $0x68] sm:$0x77]
    %v536 = vld [vmem:[#allocation2 + $0x70] sm:$0xff]
    %v537 = vld [vmem:[#allocation2 + $0x78] sm:$0x77]
    %v538 = vld [vmem:[#allocation2 + $0x80] sm:$0xff]
    %v539 = vld [vmem:[#allocation2 + $0x88] sm:$0x77]
    %v540 = vld [vmem:[#allocation2 + $0x90] sm:$0xff]
    %v541 = vld [vmem:[#allocation2 + $0x98] sm:$0x77]
    %v542 = vld [vmem:[#allocation2 + $0xa0] sm:$0xff]
    %v543 = vld [vmem:[#allocation2 + $0xa8] sm:$0x77]
    %v544 = vld [vmem:[#allocation2 + $0xb0] sm:$0xff]
    %v545 = vld [vmem:[#allocation2 + $0xb8] sm:$0x77]
    %v546 = vld [vmem:[#allocation2 + $0xc0] sm:$0xff]
    %v547 = vld [vmem:[#allocation2 + $0xc8] sm:$0x77]
    %v548 = vld [vmem:[#allocation2 + $0xd0] sm:$0xff]
    %v549 = vld [vmem:[#allocation2 + $0xd8] sm:$0x77]
    %v550 = vld [vmem:[#allocation2 + $0xe0] sm:$0xff]
    %v551 = vld [vmem:[#allocation2 + $0xe8] sm:$0x77]
    %v552 = vld [vmem:[#allocation2 + $0xf0] sm:$0xff]
    %v553 = vld [vmem:[#allocation2 + $0xf8] sm:$0x77]
    %v554 = vld [vmem:[#allocation2 + $0x100] sm:$0xff]
    %v555 = vld [vmem:[#allocation2 + $0x108] sm:$0x77]
    %v556 = vld [vmem:[#allocation2 + $0x110] sm:$0xff]
    %v557 = vld [vmem:[#allocation2 + $0x118] sm:$0x77]
    %v558 = vld [vmem:[#allocation2 + $0x120] sm:$0xff]
    %v559 = vld [vmem:[#allocation2 + $0x128] sm:$0x77]
    %v560 = vld [vmem:[#allocation2 + $0x130] sm:$0xff]
    %v561 = vld [vmem:[#allocation2 + $0x138] sm:$0x77]
    %v562 = vld [vmem:[#allocation2 + $0x140] sm:$0xff]
    %v563 = vld [vmem:[#allocation2 + $0x148] sm:$0x77]
    %v564 = vld [vmem:[#allocation2 + $0x150] sm:$0xff]
    %v565 = vld [vmem:[#allocation2 + $0x158] sm:$0x77]
    %v566 = vld [vmem:[#allocation2 + $0x160] sm:$0xff]
    %v567 = vld [vmem:[#allocation2 + $0x168] sm:$0x77]
    %v568 = vld [vmem:[#allocation2 + $0x170] sm:$0xff]
    %v569 = vld [vmem:[#allocation2 + $0x178] sm:$0x77]
    %v570 = vld [vmem:[#allocation2 + $0x180] sm:$0xff]
    %v571 = vld [vmem:[#allocation2 + $0x188] sm:$0x77]
    %v572 = vld [vmem:[#allocation2 + $0x190] sm:$0xff]
    %v573 = vld [vmem:[#allocation2 + $0x198] sm:$0x77]
    %v574 = vld [vmem:[#allocation2 + $0x1a0] sm:$0xff]
    %v575 = vld [vmem:[#allocation2 + $0x1a8] sm:$0x77]
    %v576 = vld [vmem:[#allocation2 + $0x1b0] sm:$0xff]
    %v577 = vld [vmem:[#allocation2 + $0x1b8] sm:$0x77]
    %v578 = vld [vmem:[#allocation3] sm:$0xff]
    %v579 = vld [vmem:[#allocation3 + $0x8] sm:$0x77]
    %v580 = vld [vmem:[#allocation3 + $0x10] sm:$0xff]
    %v581 = vld [vmem:[#allocation3 + $0x18] sm:$0x77]
    %v582 = vld [vmem:[#allocation3 + $0x20] sm:$0xff]
    %v583 = vld [vmem:[#allocation3 + $0x28] sm:$0x77]
    %v584 = vld [vmem:[#allocation3 + $0x30] sm:$0xff]
    %v585 = vld [vmem:[#allocation3 + $0x38] sm:$0x77]
    %v586 = vld [vmem:[#allocation3 + $0x40] sm:$0xff]
    %v587 = vld [vmem:[#allocation3 + $0x48] sm:$0x77]
    %v588 = vld [vmem:[#allocation3 + $0x50] sm:$0xff]
    %v589 = vld [vmem:[#allocation3 + $0x58] sm:$0x77]
    %v590 = vld [vmem:[#allocation3 + $0x60] sm:$0xff]
    %v591 = vld [vmem:[#allocation3 + $0x68] sm:$0x77]
    %v592 = vld [vmem:[#allocation3 + $0x70] sm:$0xff]
    %v593 = vld [vmem:[#allocation3 + $0x78] sm:$0x77]
    %v594 = vld [vmem:[#allocation3 + $0x80] sm:$0xff]
    %v595 = vld [vmem:[#allocation3 + $0x88] sm:$0x77]
    %v596 = vld [vmem:[#allocation3 + $0x90] sm:$0xff]
    %v597 = vld [vmem:[#allocation3 + $0x98] sm:$0x77]
    %v598 = vld [vmem:[#allocation3 + $0xa0] sm:$0xff]
    %v599 = vld [vmem:[#allocation3 + $0xa8] sm:$0x77]
    %v600 = vld [vmem:[#allocation3 + $0xb0] sm:$0xff]
    %v601 = vld [vmem:[#allocation3 + $0xb8] sm:$0x77]
    %v602 = vld [vmem:[#allocation3 + $0xc0] sm:$0xff]
    %v603 = vld [vmem:[#allocation3 + $0xc8] sm:$0x77]
    %v604 = vld [vmem:[#allocation3 + $0xd0] sm:$0xff]
    %v605 = vld [vmem:[#allocation3 + $0xd8] sm:$0x77]
    %v606 = vld [vmem:[#allocation3 + $0xe0] sm:$0xff]
    %v607 = vld [vmem:[#allocation3 + $0xe8] sm:$0x77]
    %v608 = vld [vmem:[#allocation3 + $0xf0] sm:$0xff]
    %v609 = vld [vmem:[#allocation3 + $0xf8] sm:$0x77]
    %v610 = vld [vmem:[#allocation3 + $0x100] sm:$0xff]
    %v611 = vld [vmem:[#allocation3 + $0x108] sm:$0x77]
    %v612 = vld [vmem:[#allocation3 + $0x110] sm:$0xff]
    %v613 = vld [vmem:[#allocation3 + $0x118] sm:$0x77]
    %v614 = vld [vmem:[#allocation3 + $0x120] sm:$0xff]
    %v615 = vld [vmem:[#allocation3 + $0x128] sm:$0x77]
    %v616 = vld [vmem:[#allocation3 + $0x130] sm:$0xff]
    %v617 = vld [vmem:[#allocation3 + $0x138] sm:$0x77]
    %v618 = vld [vmem:[#allocation3 + $0x140] sm:$0xff]
    %v619 = vld [vmem:[#allocation3 + $0x148] sm:$0x77]
    %v620 = vld [vmem:[#allocation3 + $0x150] sm:$0xff]
    %v621 = vld [vmem:[#allocation3 + $0x158] sm:$0x77]
    %v622 = vld [vmem:[#allocation3 + $0x160] sm:$0xff]
    %v623 = vld [vmem:[#allocation3 + $0x168] sm:$0x77]
    %v624 = vld [vmem:[#allocation3 + $0x170] sm:$0xff]
    %v625 = vld [vmem:[#allocation3 + $0x178] sm:$0x77]
    %v626 = vld [vmem:[#allocation3 + $0x180] sm:$0xff]
    %v627 = vld [vmem:[#allocation3 + $0x188] sm:$0x77]
    %v628 = vld [vmem:[#allocation3 + $0x190] sm:$0xff]
    %v629 = vld [vmem:[#allocation3 + $0x198] sm:$0x77]
    %v630 = vld [vmem:[#allocation3 + $0x1a0] sm:$0xff]
    %v631 = vld [vmem:[#allocation3 + $0x1a8] sm:$0x77]
    %v632 = vld [vmem:[#allocation3 + $0x1b0] sm:$0xff]
    %v633 = vld [vmem:[#allocation3 + $0x1b8] sm:$0x77]
    %v634 = vmax.bf16 %v522, %v578
    %v635 = vmax.bf16 %v523, %v579
    %v636 = vmax.bf16 %v524, %v580
    %v637 = vmax.bf16 %v525, %v581
    %v638 = vmax.bf16 %v526, %v582
    %v639 = vmax.bf16 %v527, %v583
    %v640 = vmax.bf16 %v528, %v584
    %v641 = vmax.bf16 %v529, %v585
    %v642 = vmax.bf16 %v530, %v586
    %v643 = vmax.bf16 %v531, %v587
    %v644 = vmax.bf16 %v532, %v588
    %v645 = vmax.bf16 %v533, %v589
    %v646 = vmax.bf16 %v534, %v590
    %v647 = vmax.bf16 %v535, %v591
    %v648 = vmax.bf16 %v536, %v592
    %v649 = vmax.bf16 %v537, %v593
    %v650 = vmax.bf16 %v538, %v594
    %v651 = vmax.bf16 %v539, %v595
    %v652 = vmax.bf16 %v540, %v596
    %v653 = vmax.bf16 %v541, %v597
    %v654 = vmax.bf16 %v542, %v598
    %v655 = vmax.bf16 %v543, %v599
    %v656 = vmax.bf16 %v544, %v600
    %v657 = vmax.bf16 %v545, %v601
    %v658 = vmax.bf16 %v546, %v602
    %v659 = vmax.bf16 %v547, %v603
    %v660 = vmax.bf16 %v548, %v604
    %v661 = vmax.bf16 %v549, %v605
    %v662 = vmax.bf16 %v550, %v606
    %v663 = vmax.bf16 %v551, %v607
    %v664 = vmax.bf16 %v552, %v608
    %v665 = vmax.bf16 %v553, %v609
    %v666 = vmax.bf16 %v554, %v610
    %v667 = vmax.bf16 %v555, %v611
    %v668 = vmax.bf16 %v556, %v612
    %v669 = vmax.bf16 %v557, %v613
    %v670 = vmax.bf16 %v558, %v614
    %v671 = vmax.bf16 %v559, %v615
    %v672 = vmax.bf16 %v560, %v616
    %v673 = vmax.bf16 %v561, %v617
    %v674 = vmax.bf16 %v562, %v618
    %v675 = vmax.bf16 %v563, %v619
    %v676 = vmax.bf16 %v564, %v620
    %v677 = vmax.bf16 %v565, %v621
    %v678 = vmax.bf16 %v566, %v622
    %v679 = vmax.bf16 %v567, %v623
    %v680 = vmax.bf16 %v568, %v624
    %v681 = vmax.bf16 %v569, %v625
    %v682 = vmax.bf16 %v570, %v626
    %v683 = vmax.bf16 %v571, %v627
    %v684 = vmax.bf16 %v572, %v628
    %v685 = vmax.bf16 %v573, %v629
    %v686 = vmax.bf16 %v574, %v630
    %v687 = vmax.bf16 %v575, %v631
    %v688 = vmax.bf16 %v576, %v632
    %v689 = vmax.bf16 %v577, %v633
    %v746 = vrot.slane %v634, 4
    %v747 = vrot.slane %v635, 4
    %v748 = vrot.slane %v636, 4
    %v749 = vrot.slane %v637, 4
    %v750 = vrot.slane %v638, 4
    %v751 = vrot.slane %v639, 4
    %v752 = vrot.slane %v640, 4
    %v753 = vrot.slane %v641, 4
    %v754 = vrot.slane %v642, 4
    %v755 = vrot.slane %v643, 4
    %v756 = vrot.slane %v644, 4
    %v757 = vrot.slane %v645, 4
    %v758 = vrot.slane %v646, 4
    %v759 = vrot.slane %v647, 4
    %v760 = vrot.slane %v648, 4
    %v761 = vrot.slane %v649, 4
    %v762 = vrot.slane %v650, 4
    %v763 = vrot.slane %v651, 4
    %v764 = vrot.slane %v652, 4
    %v765 = vrot.slane %v653, 4
    %v766 = vrot.slane %v654, 4
    %v767 = vrot.slane %v655, 4
    %v768 = vrot.slane %v656, 4
    %v769 = vrot.slane %v657, 4
    %v770 = vrot.slane %v658, 4
    %v771 = vrot.slane %v659, 4
    %v772 = vrot.slane %v660, 4
    %v773 = vrot.slane %v661, 4
    %v774 = vrot.slane %v662, 4
    %v775 = vrot.slane %v663, 4
    %v776 = vrot.slane %v664, 4
    %v777 = vrot.slane %v665, 4
    %v778 = vrot.slane %v666, 4
    %v779 = vrot.slane %v667, 4
    %v780 = vrot.slane %v668, 4
    %v781 = vrot.slane %v669, 4
    %v782 = vrot.slane %v670, 4
    %v783 = vrot.slane %v671, 4
    %v784 = vrot.slane %v672, 4
    %v785 = vrot.slane %v673, 4
    %v786 = vrot.slane %v674, 4
    %v787 = vrot.slane %v675, 4
    %v788 = vrot.slane %v676, 4
    %v789 = vrot.slane %v677, 4
    %v790 = vrot.slane %v678, 4
    %v791 = vrot.slane %v679, 4
    %v792 = vrot.slane %v680, 4
    %v793 = vrot.slane %v681, 4
    %v794 = vrot.slane %v682, 4
    %v795 = vrot.slane %v683, 4
    %v796 = vrot.slane %v684, 4
    %v797 = vrot.slane %v685, 4
    %v798 = vrot.slane %v686, 4
    %v799 = vrot.slane %v687, 4
    %v800 = vrot.slane %v688, 4
    %v801 = vrot.slane %v689, 4
    %v858 = vmax.bf16 %v634, %v746
    %v859 = vmax.bf16 %v635, %v747
    %v860 = vmax.bf16 %v636, %v748
    %v861 = vmax.bf16 %v637, %v749
    %v862 = vmax.bf16 %v638, %v750
    %v863 = vmax.bf16 %v639, %v751
    %v864 = vmax.bf16 %v640, %v752
    %v865 = vmax.bf16 %v641, %v753
    %v866 = vmax.bf16 %v642, %v754
    %v867 = vmax.bf16 %v643, %v755
    %v868 = vmax.bf16 %v644, %v756
    %v869 = vmax.bf16 %v645, %v757
    %v870 = vmax.bf16 %v646, %v758
    %v871 = vmax.bf16 %v647, %v759
    %v872 = vmax.bf16 %v648, %v760
    %v873 = vmax.bf16 %v649, %v761
    %v874 = vmax.bf16 %v650, %v762
    %v875 = vmax.bf16 %v651, %v763
    %v876 = vmax.bf16 %v652, %v764
    %v877 = vmax.bf16 %v653, %v765
    %v878 = vmax.bf16 %v654, %v766
    %v879 = vmax.bf16 %v655, %v767
    %v880 = vmax.bf16 %v656, %v768
    %v881 = vmax.bf16 %v657, %v769
    %v882 = vmax.bf16 %v658, %v770
    %v883 = vmax.bf16 %v659, %v771
    %v884 = vmax.bf16 %v660, %v772
    %v885 = vmax.bf16 %v661, %v773
    %v886 = vmax.bf16 %v662, %v774
    %v887 = vmax.bf16 %v663, %v775
    %v888 = vmax.bf16 %v664, %v776
    %v889 = vmax.bf16 %v665, %v777
    %v890 = vmax.bf16 %v666, %v778
    %v891 = vmax.bf16 %v667, %v779
    %v892 = vmax.bf16 %v668, %v780
    %v893 = vmax.bf16 %v669, %v781
    %v894 = vmax.bf16 %v670, %v782
    %v895 = vmax.bf16 %v671, %v783
    %v896 = vmax.bf16 %v672, %v784
    %v897 = vmax.bf16 %v673, %v785
    %v898 = vmax.bf16 %v674, %v786
    %v899 = vmax.bf16 %v675, %v787
    %v900 = vmax.bf16 %v676, %v788
    %v901 = vmax.bf16 %v677, %v789
    %v902 = vmax.bf16 %v678, %v790
    %v903 = vmax.bf16 %v679, %v791
    %v904 = vmax.bf16 %v680, %v792
    %v905 = vmax.bf16 %v681, %v793
    %v906 = vmax.bf16 %v682, %v794
    %v907 = vmax.bf16 %v683, %v795
    %v908 = vmax.bf16 %v684, %v796
    %v909 = vmax.bf16 %v685, %v797
    %v910 = vmax.bf16 %v686, %v798
    %v911 = vmax.bf16 %v687, %v799
    %v912 = vmax.bf16 %v688, %v800
    %v913 = vmax.bf16 %v689, %v801
    %914 = vst [vmem:[%s2] sm:$0xf] %v858
    %915 = vst [vmem:[%s2 + $0x4] sm:$0x7] %v859
    %916 = vst [vmem:[%s2 + $0x8] sm:$0xf] %v860
    %917 = vst [vmem:[%s2 + $0xc] sm:$0x7] %v861
    %918 = vst [vmem:[%s2 + $0x10] sm:$0xf] %v862
    %919 = vst [vmem:[%s2 + $0x14] sm:$0x7] %v863
    %920 = vst [vmem:[%s2 + $0x18] sm:$0xf] %v864
    %921 = vst [vmem:[%s2 + $0x1c] sm:$0x7] %v865
    %922 = vst [vmem:[%s2 + $0x20] sm:$0xf] %v866
    %923 = vst [vmem:[%s2 + $0x24] sm:$0x7] %v867
    %924 = vst [vmem:[%s2 + $0x28] sm:$0xf] %v868
    %925 = vst [vmem:[%s2 + $0x2c] sm:$0x7] %v869
    %926 = vst [vmem:[%s2 + $0x30] sm:$0xf] %v870
    %927 = vst [vmem:[%s2 + $0x34] sm:$0x7] %v871
    %928 = vst [vmem:[%s2 + $0x38] sm:$0xf] %v872
    %929 = vst [vmem:[%s2 + $0x3c] sm:$0x7] %v873
    %930 = vst [vmem:[%s2 + $0x40] sm:$0xf] %v874
    %931 = vst [vmem:[%s2 + $0x44] sm:$0x7] %v875
    %932 = vst [vmem:[%s2 + $0x48] sm:$0xf] %v876
    %933 = vst [vmem:[%s2 + $0x4c] sm:$0x7] %v877
    %934 = vst [vmem:[%s2 + $0x50] sm:$0xf] %v878
    %935 = vst [vmem:[%s2 + $0x54] sm:$0x7] %v879
    %936 = vst [vmem:[%s2 + $0x58] sm:$0xf] %v880
    %937 = vst [vmem:[%s2 + $0x5c] sm:$0x7] %v881
    %938 = vst [vmem:[%s2 + $0x60] sm:$0xf] %v882
    %939 = vst [vmem:[%s2 + $0x64] sm:$0x7] %v883
    %940 = vst [vmem:[%s2 + $0x68] sm:$0xf] %v884
    %941 = vst [vmem:[%s2 + $0x6c] sm:$0x7] %v885
    %942 = vst [vmem:[%s2 + $0x70] sm:$0xf] %v886
    %943 = vst [vmem:[%s2 + $0x74] sm:$0x7] %v887
    %944 = vst [vmem:[%s2 + $0x78] sm:$0xf] %v888
    %945 = vst [vmem:[%s2 + $0x7c] sm:$0x7] %v889
    %946 = vst [vmem:[%s2 + $0x80] sm:$0xf] %v890
    %947 = vst [vmem:[%s2 + $0x84] sm:$0x7] %v891
    %948 = vst [vmem:[%s2 + $0x88] sm:$0xf] %v892
    %949 = vst [vmem:[%s2 + $0x8c] sm:$0x7] %v893
    %950 = vst [vmem:[%s2 + $0x90] sm:$0xf] %v894
    %951 = vst [vmem:[%s2 + $0x94] sm:$0x7] %v895
    %952 = vst [vmem:[%s2 + $0x98] sm:$0xf] %v896
    %953 = vst [vmem:[%s2 + $0x9c] sm:$0x7] %v897
    %954 = vst [vmem:[%s2 + $0xa0] sm:$0xf] %v898
    %955 = vst [vmem:[%s2 + $0xa4] sm:$0x7] %v899
    %956 = vst [vmem:[%s2 + $0xa8] sm:$0xf] %v900
    %957 = vst [vmem:[%s2 + $0xac] sm:$0x7] %v901
    %958 = vst [vmem:[%s2 + $0xb0] sm:$0xf] %v902
    %959 = vst [vmem:[%s2 + $0xb4] sm:$0x7] %v903
    %960 = vst [vmem:[%s2 + $0xb8] sm:$0xf] %v904
    %961 = vst [vmem:[%s2 + $0xbc] sm:$0x7] %v905
    %962 = vst [vmem:[%s2 + $0xc0] sm:$0xf] %v906
    %963 = vst [vmem:[%s2 + $0xc4] sm:$0x7] %v907
    %964 = vst [vmem:[%s2 + $0xc8] sm:$0xf] %v908
    %965 = vst [vmem:[%s2 + $0xcc] sm:$0x7] %v909
    %966 = vst [vmem:[%s2 + $0xd0] sm:$0xf] %v910
    %967 = vst [vmem:[%s2 + $0xd4] sm:$0x7] %v911
    %968 = vst [vmem:[%s2 + $0xd8] sm:$0xf] %v912
    %969 = vst [vmem:[%s2 + $0xdc] sm:$0x7] %v913
    // Predicated region
    $region86: #{net_forward.6} parent=1 // pred_check
      _
    $region87: #{net_forward.6} parent=1 // pred_check_branch
      %971 = sbr.rel (0) target = $region89
    $region88: #{net_forward.6} parent=1 // pred_region
      _
    $region89: #{net_forward.6} parent=1 // pred_fallthru
      _
    // Predicated region
    $region90: #{net_forward.6} parent=1 // pred_check
      _
    $region91: #{net_forward.6} parent=1 // pred_check_branch
      %973 = sbr.rel (0) target = $region93
    $region92: #{net_forward.6} parent=1 // pred_region
      _
    $region93: #{net_forward.6} parent=1 // pred_fallthru
      _

// kernel: net_forward.7
$region0: #{net_forward.7}
  #allocation0 [shape = 'u32[]', space=smem, size = 0x4, offset = 0x4, fixed_abs, tag = 'smem constant byte address 0x4 - core index']
  #allocation1 [shape = 'u32[144,128]{1,0:T(1,128)}', space=vmem, size = 0x12000, scoped, tag = 'internal scratch']
  %s0 = inlined_call_operand.vmem [shape: bf16[200,256], index: 0, kind: input, shape index: {}]
  %s1 = inlined_call_operand.vmem [shape: bf16[256,128], index: 1, kind: input, shape index: {}]
  %s2 = inlined_call_operand.vmem [shape: f32[1,128], index: 2, kind: input, shape index: {}]
  %s3 = inlined_call_operand.vmem [shape: bf16[200,128], index: 3, kind: output, shape index: {}]
  %s4 = sld [smem:[#allocation0]]
  $region89: #{net_forward.7} parent=0
    _
  %s6 = ssub.s32 1, %s4
  %s7 = scalar_select 0, %s6, %s4
  $region1: #{net_forward.7} parent=0
    #allocation2 [shape = 'u8[53248]{0}', space=vmem, size = 0xd000, scoped, tag = 'output window, operand 0']
    loop: start=0, step=1, limit=4
    $region2: #{net_forward.7} parent=1 // loop_pre_header
      _
    $region3: #{net_forward.7} parent=1 // loop_header
      %s9 = sphi 0, %s13
      %p10 = scmp.ge.s32.totalorder %s9, 4
      %s19 = sphi 0, %s21
      %s22 = sphi 0, %s19
      %s23 = sphi 0, %s22
      %s39 = sphi 0, %s23
      %s43 = sphi 0, %s43
      %s45 = sphi 0, %s43
      %s46 = sphi 0, %s45
      %s60 = sphi 0, %s46
      %s64 = sphi 0, %s64
      %s66 = sphi 0, %s64
      %s67 = sphi 0, %s66
      %s81 = sphi 0, %s67
      %s87 = sphi 0, %s89
      %s90 = sphi 0, %s87
      %s91 = sphi 0, %s90
      %s107 = sphi 0, %s91
    $region4: #{net_forward.7} parent=1 // loop_header_branch
      %12 = sbr.rel (%p10) target = $region8
    $region5: #{net_forward.7} parent=1 // loop_body
      %s14 = ssub.s32 %s9, 1
      %s15 = ssub.s32 %s9, 2
      %s16 = sadd.s32 %s9, 1
      %s17 = ssub.s32 %s9, %s16
      %p18 = scmp.eq.s32.totalorder %s17, 0
      %s20 = sadd.s32 %s19, 1
      %s21 = scalar_select %p18, %s19, %s20
      %p24 = pneg %p18
      %p25 = scmp.eq.s32.totalorder %s9, 1
      %p26 = por %p24, %p25
      %p27 = scmp.ne.s32.totalorder %s19, %s22
      %p28 = scmp.eq.s32.totalorder %s9, 0
      %p29 = por %p27, %p28
      %p30 = scmp.ne.s32.totalorder %s19, %s22
      %p31 = scmp.eq.s32.totalorder %s14, 1
      %p32 = por %p30, %p31
      %p33 = scmp.ne.s32.totalorder %s22, %s23
      %p34 = scmp.eq.s32.totalorder %s14, 0
      %p35 = por %p33, %p34
      %p36 = scmp.ne.s32.totalorder %s22, %s23
      %p37 = scmp.eq.s32.totalorder %s15, 1
      %p38 = por %p36, %p37
      %p40 = scmp.ne.s32.totalorder %s23, %s39
      %p41 = scmp.eq.s32.totalorder %s15, 0
      %p42 = por %p40, %p41
      %s44 = sadd.s32 %s43, 1
      %p47 = scmp.eq.s32.totalorder %s9, 1
      %p48 = scmp.ne.s32.totalorder %s43, %s45
      %p49 = scmp.eq.s32.totalorder %s9, 0
      %p50 = por %p48, %p49
      %p51 = scmp.ne.s32.totalorder %s43, %s45
      %p52 = scmp.eq.s32.totalorder %s14, 1
      %p53 = por %p51, %p52
      %p54 = scmp.ne.s32.totalorder %s45, %s46
      %p55 = scmp.eq.s32.totalorder %s14, 0
      %p56 = por %p54, %p55
      %p57 = scmp.ne.s32.totalorder %s45, %s46
      %p58 = scmp.eq.s32.totalorder %s15, 1
      %p59 = por %p57, %p58
      %p61 = scmp.ne.s32.totalorder %s46, %s60
      %p62 = scmp.eq.s32.totalorder %s15, 0
      %p63 = por %p61, %p62
      %s65 = sadd.s32 %s64, 1
      %p68 = scmp.eq.s32.totalorder %s9, 1
      %p69 = scmp.ne.s32.totalorder %s64, %s66
      %p70 = scmp.eq.s32.totalorder %s9, 0
      %p71 = por %p69, %p70
      %p72 = scmp.ne.s32.totalorder %s64, %s66
      %p73 = scmp.eq.s32.totalorder %s14, 1
      %p74 = por %p72, %p73
      %p75 = scmp.ne.s32.totalorder %s66, %s67
      %p76 = scmp.eq.s32.totalorder %s14, 0
      %p77 = por %p75, %p76
      %p78 = scmp.ne.s32.totalorder %s66, %s67
      %p79 = scmp.eq.s32.totalorder %s15, 1
      %p80 = por %p78, %p79
      %p82 = scmp.ne.s32.totalorder %s67, %s81
      %p83 = scmp.eq.s32.totalorder %s15, 0
      %p84 = por %p82, %p83
      %s85 = ssub.s32 %s9, %s16
      %p86 = scmp.eq.s32.totalorder %s85, 0
      %s88 = sadd.s32 %s87, 1
      %s89 = scalar_select %p86, %s87, %s88
      %p92 = pneg %p86
      %p93 = scmp.eq.s32.totalorder %s9, 1
      %p94 = por %p92, %p93
      %p95 = scmp.ne.s32.totalorder %s87, %s90
      %p96 = scmp.eq.s32.totalorder %s9, 0
      %p97 = por %p95, %p96
      %p98 = scmp.ne.s32.totalorder %s87, %s90
      %p99 = scmp.eq.s32.totalorder %s14, 1
      %p100 = por %p98, %p99
      %p101 = scmp.ne.s32.totalorder %s90, %s91
      %p102 = scmp.eq.s32.totalorder %s14, 0
      %p103 = por %p101, %p102
      %p104 = scmp.ne.s32.totalorder %s90, %s91
      %p105 = scmp.eq.s32.totalorder %s15, 1
      %p106 = por %p104, %p105
      %p108 = scmp.ne.s32.totalorder %s91, %s107
      %p109 = scmp.eq.s32.totalorder %s15, 0
      %p110 = por %p108, %p109
      %p111 = scmp.le.s32.totalorder 1, %s9
      %p112 = scmp.lt.s32.totalorder %s9, 3
      %p113 = pnand %p111, %p112
      %p114 = pneg %p113
      // Predicated region
      $region9: #{net_forward.7} parent=5 // pred_check
        _
      $region10: #{net_forward.7} parent=5 // pred_check_branch
        %116 = sbr.rel (%p113) target = $region12
      $region11: #{net_forward.7} parent=5 // pred_region
        %s117 = ssub.s32 %s9, 1
        // Predicated region
        $region13: #{net_forward.7} parent=11 // pred_check
          %p118 = pneg %p56
        $region14: #{net_forward.7} parent=11 // pred_check_branch
          %120 = sbr.rel (%p118) target = $region16
        $region15: #{net_forward.7} parent=11 // pred_region
          _
        $region16: #{net_forward.7} parent=11 // pred_fallthru
          _
        // Predicated region
        $region17: #{net_forward.7} parent=11 // pred_check
          %p121 = pneg %p77
        $region18: #{net_forward.7} parent=11 // pred_check_branch
          %123 = sbr.rel (%p121) target = $region20
        $region19: #{net_forward.7} parent=11 // pred_region
          _
        $region20: #{net_forward.7} parent=11 // pred_fallthru
          _
      $region12: #{net_forward.7} parent=5 // pred_fallthru
        _
      %p124 = scmp.lt.s32.totalorder %s9, 2
      // Predicated region
      $region21: #{net_forward.7} parent=5 // pred_check
        %p125 = pneg %p124
      $region22: #{net_forward.7} parent=5 // pred_check_branch
        %127 = sbr.rel (%p125) target = $region24
      $region23: #{net_forward.7} parent=5 // pred_region
        // Predicated region
        $region25: #{net_forward.7} parent=23 // pred_check
          %p128 = pneg %p29
        $region26: #{net_forward.7} parent=23 // pred_check_branch
          %130 = sbr.rel (%p128) target = $region28
        $region27: #{net_forward.7} parent=23 // pred_region
          %s131 = smul.u32 13, %s9
          %s132 = ssub.s32 25, %s131
          %p133 = scmp.lt.s32.totalorder %s132, 13
          %s134 = scalar_select %p133, %s132, 13
          %s135 = smul.u32 64, %s134
          %s136 = smul.u32 %s135, 2
          %p137 = scmp.lt.s32.totalorder %s131, 24
          %s138 = scalar_select %p137, %s131, 24
          %s139 = smul.addr %s138, 2
          %s140 = smul.addr %s139, 4
          %s141 = scalar_lea.vmem %s0, %s140
          %s142 = smul.u32 13, %s9
          %s143 = ssub.s32 25, %s142
          %p144 = scmp.lt.s32.totalorder %s143, 13
          %s145 = scalar_select %p144, %s143, 13
          %s146 = smul.u32 64, %s145
          %s147 = smul.u32 %s146, 2
        $region28: #{net_forward.7} parent=23 // pred_fallthru
          _
      $region24: #{net_forward.7} parent=5 // pred_fallthru
        _
      %p148 = scmp.le.s32.totalorder 1, %s9
      %p149 = scmp.lt.s32.totalorder %s9, 3
      %p150 = pnand %p148, %p149
      %p151 = pneg %p150
      // Predicated region
      $region29: #{net_forward.7} parent=5 // pred_check
        _
      $region30: #{net_forward.7} parent=5 // pred_check_branch
        %153 = sbr.rel (%p150) target = $region32
      $region31: #{net_forward.7} parent=5 // pred_region
        %s154 = ssub.s32 %s9, 1
        %s155 = smul.u32 13, %s14
        %s156 = ssub.s32 25, %s155
        %p157 = scmp.lt.s32.totalorder %s156, 13
        %s158 = scalar_select %p157, %s156, 13
        %s159 = smul.u32 64, %s158
        %s160 = smul.u32 %s159, 2
        %p161 = scmp.lt.s32.totalorder %s155, 24
        %s162 = scalar_select %p161, %s155, 24
        %s163 = smul.addr %s162, 2
        %s164 = smul.addr %s163, 4
        %s165 = scalar_lea.vmem %s0, %s164
        %p166 = pneg %p35
        %p167 = pneg %p32
        %p168 = pneg %p56
        %p169 = pneg %p53
        %p170 = pneg %p77
        %p171 = pneg %p74
        %p172 = pneg %p103
        %p173 = pneg %p100
        %s174 = sand.u32 %s90, 1
        %s175 = sand.u32 %s90, 1
        %s176 = smul.addr %s175, 52
        %s177 = scalar_lea.vmem [#allocation2], %s176
        %s178 = smul.u32 13, %s14
        %s179 = ssub.s32 25, %s178
        %p180 = scmp.lt.s32.totalorder %s179, 13
        %s181 = scalar_select %p180, %s179, 13
        %s182 = smul.u32 64, %s181
        %s183 = smul.u32 %s182, 2
        %p184 = scmp.lt.s32.totalorder %s178, 24
        %s185 = scalar_select %p184, %s178, 24
        %s186 = smul.addr %s185, 2
        %s187 = smul.addr %s186, 4
        %s188 = scalar_lea.vmem %s0, %s187
        %s189 = smul.u32 13, %s14
        %s190 = ssub.s32 25, %s189
        %p191 = scmp.lt.s32.totalorder %s190, 13
        %s192 = scalar_select %p191, %s190, 13
        %s193 = smul.u32 64, %s192
        %s194 = smul.u32 %s193, 2
        %s195 = smul.u32 13, %s14
        %s196 = ssub.s32 25, %s195
        %p197 = scmp.lt.s32.totalorder %s196, 13
        %s198 = scalar_select %p197, %s196, 13
        %s199 = smul.u32 64, %s198
        %v201 = vld [vmem:[%s188] sm:$0xff]
        %v202 = vld [vmem:[%s188 + $0x8] sm:$0xff]
        %v203 = vld [vmem:[%s188 + $0x10] sm:$0xff]
        %v204 = vld [vmem:[%s188 + $0x18] sm:$0xff]
        %v205 = vld [vmem:[%s188 + $0x20] sm:$0xff]
        %v206 = vld [vmem:[%s188 + $0x28] sm:$0xff]
        %v207 = vld [vmem:[%s188 + $0x30] sm:$0xff]
        %v208 = vld [vmem:[%s188 + $0x38] sm:$0xff]
        %v209 = vld [vmem:[%s188 + $0x40] sm:$0xff]
        %v210 = vld [vmem:[%s188 + $0x48] sm:$0xff]
        %v211 = vld [vmem:[%s188 + $0x50] sm:$0xff]
        %v212 = vld [vmem:[%s188 + $0x58] sm:$0xff]
        %v213 = vld [vmem:[%s188 + $0x60] sm:$0xff]
        %v214 = vld [vmem:[%s1] sm:$0xf]
        %v215 = vld [vmem:[%s1 + $0x4] sm:$0xf]
        %v216 = vld [vmem:[%s1 + $0x8] sm:$0xf]
        %v217 = vld [vmem:[%s1 + $0xc] sm:$0xf]
        %v218 = vld [vmem:[%s1 + $0x10] sm:$0xf]
        %v219 = vld [vmem:[%s1 + $0x14] sm:$0xf]
        %v220 = vld [vmem:[%s1 + $0x18] sm:$0xf]
        %v221 = vld [vmem:[%s1 + $0x1c] sm:$0xf]
        %v222 = vld [vmem:[%s1 + $0x20] sm:$0xf]
        %v223 = vld [vmem:[%s1 + $0x24] sm:$0xf]
        %v224 = vld [vmem:[%s1 + $0x28] sm:$0xf]
        %v225 = vld [vmem:[%s1 + $0x2c] sm:$0xf]
        %v226 = vld [vmem:[%s1 + $0x30] sm:$0xf]
        %v227 = vld [vmem:[%s1 + $0x34] sm:$0xf]
        %v228 = vld [vmem:[%s1 + $0x38] sm:$0xf]
        %v229 = vld [vmem:[%s1 + $0x3c] sm:$0xf]
        %v230 = vld [vmem:[%s1 + $0x40] sm:$0xf]
        %v231 = vld [vmem:[%s1 + $0x44] sm:$0xf]
        %v232 = vld [vmem:[%s1 + $0x48] sm:$0xf]
        %v233 = vld [vmem:[%s1 + $0x4c] sm:$0xf]
        %v234 = vld [vmem:[%s1 + $0x50] sm:$0xf]
        %v235 = vld [vmem:[%s1 + $0x54] sm:$0xf]
        %v236 = vld [vmem:[%s1 + $0x58] sm:$0xf]
        %v237 = vld [vmem:[%s1 + $0x5c] sm:$0xf]
        %v238 = vld [vmem:[%s1 + $0x60] sm:$0xf]
        %v239 = vld [vmem:[%s1 + $0x64] sm:$0xf]
        %v240 = vld [vmem:[%s1 + $0x68] sm:$0xf]
        %v241 = vld [vmem:[%s1 + $0x6c] sm:$0xf]
        %v242 = vld [vmem:[%s1 + $0x70] sm:$0xf]
        %v243 = vld [vmem:[%s1 + $0x74] sm:$0xf]
        %v244 = vld [vmem:[%s1 + $0x78] sm:$0xf]
        %v245 = vld [vmem:[%s1 + $0x7c] sm:$0xf]
        %v246 = vld [vmem:[%s2] sm:$0x1]
        %v248 = vlaneseq
        %v249 = vshrl.u32 %v248, 7
        %v250 = vsub.s32 0, %v249
        %v251 = vrot.slane %v246, %v250
        %v266 = vunpack.c.l.b16 %v201
        %v267 = vunpack.c.h.b16 %v201
        %v268 = vunpack.c.l.b16 %v202
        %v269 = vunpack.c.h.b16 %v202
        %v270 = vunpack.c.l.b16 %v203
        %v271 = vunpack.c.h.b16 %v203
        %v272 = vunpack.c.l.b16 %v204
        %v273 = vunpack.c.h.b16 %v204
        %v274 = vunpack.c.l.b16 %v205
        %v275 = vunpack.c.h.b16 %v205
        %v276 = vunpack.c.l.b16 %v206
        %v277 = vunpack.c.h.b16 %v206
        %v278 = vunpack.c.l.b16 %v207
        %v279 = vunpack.c.h.b16 %v207
        %v280 = vunpack.c.l.b16 %v208
        %v281 = vunpack.c.h.b16 %v208
        %v282 = vunpack.c.l.b16 %v209
        %v283 = vunpack.c.h.b16 %v209
        %v284 = vunpack.c.l.b16 %v210
        %v285 = vunpack.c.h.b16 %v210
        %v286 = vunpack.c.l.b16 %v211
        %v287 = vunpack.c.h.b16 %v211
        %v288 = vunpack.c.l.b16 %v212
        %v289 = vunpack.c.h.b16 %v212
        %v290 = vunpack.c.l.b16 %v213
        %v291 = vunpack.c.h.b16 %v213
        %v292 = vpack.c.b16 %v268, %v266
        %v293 = vpack.c.b16 %v269, %v267
        %v294 = vpack.c.b16 %v272, %v270
        %v295 = vpack.c.b16 %v273, %v271
        %v296 = vpack.c.b16 %v276, %v274
        %v297 = vpack.c.b16 %v277, %v275
        %v298 = vpack.c.b16 %v280, %v278
        %v299 = vpack.c.b16 %v281, %v279
        %v300 = vpack.c.b16 %v284, %v282
        %v301 = vpack.c.b16 %v285, %v283
        %v302 = vpack.c.b16 %v288, %v286
        %v303 = vpack.c.b16 %v289, %v287
        %v304 = vpack.c.b16 %v290, %v290
        %v305 = vpack.c.b16 %v291, %v291
        %v352 = vunpack.c.l.b16 %v214
        %v353 = vunpack.c.l.b16 %v215
        %v354 = vunpack.c.l.b16 %v216
        %v355 = vunpack.c.l.b16 %v217
        %v356 = vunpack.c.l.b16 %v218
        %v357 = vunpack.c.l.b16 %v219
        %v358 = vunpack.c.l.b16 %v220
        %v359 = vunpack.c.l.b16 %v221
        %v360 = vunpack.c.l.b16 %v222
        %v361 = vunpack.c.l.b16 %v223
        %v362 = vunpack.c.l.b16 %v224
        %v363 = vunpack.c.l.b16 %v225
        %v364 = vunpack.c.l.b16 %v226
        %v365 = vunpack.c.l.b16 %v227
        %v366 = vunpack.c.l.b16 %v228
        %v367 = vunpack.c.l.b16 %v229
        %v368 = vunpack.c.l.b16 %v230
        %v369 = vunpack.c.l.b16 %v231
        %v370 = vunpack.c.l.b16 %v232
        %v371 = vunpack.c.l.b16 %v233
        %v372 = vunpack.c.l.b16 %v234
        %v373 = vunpack.c.l.b16 %v235
        %v374 = vunpack.c.l.b16 %v236
        %v375 = vunpack.c.l.b16 %v237
        %v376 = vunpack.c.l.b16 %v238
        %v377 = vunpack.c.l.b16 %v239
        %v378 = vunpack.c.l.b16 %v240
        %v379 = vunpack.c.l.b16 %v241
        %v380 = vunpack.c.l.b16 %v242
        %v381 = vunpack.c.l.b16 %v243
        %v382 = vunpack.c.l.b16 %v244
        %v383 = vunpack.c.l.b16 %v245
        %v384 = vpack.c.b16 %v353, %v352
        %v385 = vpack.c.b16 %v355, %v354
        %v386 = vpack.c.b16 %v357, %v356
        %v387 = vpack.c.b16 %v359, %v358
        %v388 = vpack.c.b16 %v361, %v360
        %v389 = vpack.c.b16 %v363, %v362
        %v390 = vpack.c.b16 %v365, %v364
        %v391 = vpack.c.b16 %v367, %v366
        %v392 = vpack.c.b16 %v369, %v368
        %v393 = vpack.c.b16 %v371, %v370
        %v394 = vpack.c.b16 %v373, %v372
        %v395 = vpack.c.b16 %v375, %v374
        %v396 = vpack.c.b16 %v377, %v376
        %v397 = vpack.c.b16 %v379, %v378
        %v398 = vpack.c.b16 %v381, %v380
        %v399 = vpack.c.b16 %v383, %v382
        %416 = vmatprep.subr.bf16.mxu0 0
        %417 = vmatpush1.bf16.msra.mxu0 %v391
        %418 = vmatprep.subr.bf16.mxu0 0
        %419 = vmatpush1.bf16.msra.mxu0 %v390
        %420 = vmatprep.subr.bf16.mxu0 0
        %421 = vmatpush1.bf16.msra.mxu0 %v389
        %422 = vmatprep.subr.bf16.mxu0 0
        %423 = vmatpush1.bf16.msra.mxu0 %v388
        %424 = vmatprep.subr.bf16.mxu0 0
        %425 = vmatpush1.bf16.msra.mxu0 %v387
        %426 = vmatprep.subr.bf16.mxu0 0
        %427 = vmatpush1.bf16.msra.mxu0 %v386
        %428 = vmatprep.subr.bf16.mxu0 0
        %429 = vmatpush1.bf16.msra.mxu0 %v385
        %430 = vmatprep.subr.bf16.mxu0 0
        %431 = vmatpush1.bf16.msra.mxu0 %v384
        %432 = vmatprep.subr.bf16.mxu0 0
        %433 = vmatpush2.bf16.msra.mxu0 %v399
        %434 = vmatprep.subr.bf16.mxu0 0
        %435 = vmatpush2.bf16.msra.mxu0 %v398
        %436 = vmatprep.subr.bf16.mxu0 0
        %437 = vmatpush2.bf16.msra.mxu0 %v397
        %438 = vmatprep.subr.bf16.mxu0 0
        %439 = vmatpush2.bf16.msra.mxu0 %v396
        %440 = vmatprep.subr.bf16.mxu0 0
        %441 = vmatpush2.bf16.msra.mxu0 %v395
        %442 = vmatprep.subr.bf16.mxu0 0
        %443 = vmatpush2.bf16.msra.mxu0 %v394
        %444 = vmatprep.subr.bf16.mxu0 0
        %445 = vmatpush2.bf16.msra.mxu0 %v393
        %446 = vmatprep.subr.bf16.mxu0 0
        %447 = vmatpush2.bf16.msra.mxu0 %v392
        %448 = vmatprep.mubr.bf16.mxu0 %v293
        %449 = vmatmul.mubr.bf16.gmra.mxu0 %v292
        %v450 = vpop.f32.mrf.mxu0
        %v451 = vadd.f32 %v251, %v450
        %v452 = vpop.f32.mrf.mxu0
        %v453 = vpop.f32.mrf.mxu0
        %v454 = vadd.f32 %v251, %v453
        %v455 = vpop.f32.mrf.mxu0
        %456 = vmatprep.mubr.bf16.mxu0 %v295
        %457 = vmatmul.mubr.bf16.gmra.mxu0 %v294
        %v458 = vpop.f32.mrf.mxu0
        %v459 = vadd.f32 %v251, %v458
        %v460 = vpop.f32.mrf.mxu0
        %v461 = vpop.f32.mrf.mxu0
        %v462 = vadd.f32 %v251, %v461
        %v463 = vpop.f32.mrf.mxu0
        %464 = vmatprep.mubr.bf16.mxu0 %v297
        %465 = vmatmul.mubr.bf16.gmra.mxu0 %v296
        %v466 = vpop.f32.mrf.mxu0
        %v467 = vadd.f32 %v251, %v466
        %v468 = vpop.f32.mrf.mxu0
        %v469 = vpop.f32.mrf.mxu0
        %v470 = vadd.f32 %v251, %v469
        %v471 = vpop.f32.mrf.mxu0
        %472 = vmatprep.mubr.bf16.mxu0 %v299
        %473 = vmatmul.mubr.bf16.gmra.mxu0 %v298
        %v474 = vpop.f32.mrf.mxu0
        %v475 = vadd.f32 %v251, %v474
        %v476 = vpop.f32.mrf.mxu0
        %v477 = vpop.f32.mrf.mxu0
        %v478 = vadd.f32 %v251, %v477
        %v479 = vpop.f32.mrf.mxu0
        %480 = vmatprep.mubr.bf16.mxu0 %v301
        %481 = vmatmul.mubr.bf16.gmra.mxu0 %v300
        %v482 = vpop.f32.mrf.mxu0
        %v483 = vadd.f32 %v251, %v482
        %v484 = vpop.f32.mrf.mxu0
        %v485 = vpop.f32.mrf.mxu0
        %v486 = vadd.f32 %v251, %v485
        %v487 = vpop.f32.mrf.mxu0
        %488 = vmatprep.mubr.bf16.mxu0 %v303
        %489 = vmatmul.mubr.bf16.gmra.mxu0 %v302
        %v490 = vpop.f32.mrf.mxu0
        %v491 = vadd.f32 %v251, %v490
        %v492 = vpop.f32.mrf.mxu0
        %v493 = vpop.f32.mrf.mxu0
        %v494 = vadd.f32 %v251, %v493
        %v495 = vpop.f32.mrf.mxu0
        %496 = vmatprep.mubr.bf16.mxu0 %v305
        %497 = vmatmul.mubr.bf16.gmra.mxu0 %v304
        %v498 = vpop.f32.mrf.mxu0
        %v499 = vadd.f32 %v251, %v498
        %v500 = vpop.f32.mrf.mxu0
        %v501 = vpop.f32.mrf.mxu0
        %v502 = vpop.f32.mrf.mxu0
        %503 = vdwg.mxu0
        %v504 = vmax.f32 %v451, 0.0
        %v505 = vmax.f32 %v454, 0.0
        %v506 = vmax.f32 %v459, 0.0
        %v507 = vmax.f32 %v462, 0.0
        %v508 = vmax.f32 %v467, 0.0
        %v509 = vmax.f32 %v470, 0.0
        %v510 = vmax.f32 %v475, 0.0
        %v511 = vmax.f32 %v478, 0.0
        %v512 = vmax.f32 %v483, 0.0
        %v513 = vmax.f32 %v486, 0.0
        %v514 = vmax.f32 %v491, 0.0
        %v515 = vmax.f32 %v494, 0.0
        %v516 = vmax.f32 %v499, 0.0
        %v517 = vpack.c.bf16 %v505, %v504
        %v518 = vpack.c.bf16 %v507, %v506
        %v519 = vpack.c.bf16 %v509, %v508
        %v520 = vpack.c.bf16 %v511, %v510
        %v521 = vpack.c.bf16 %v513, %v512
        %v522 = vpack.c.bf16 %v515, %v514
        %v523 = vpack.c.bf16 %v516, %v516
        %v531 = vunpack.c.l.b16 %v517
        %v532 = vunpack.c.h.b16 %v517
        %v533 = vunpack.c.l.b16 %v518
        %v534 = vunpack.c.h.b16 %v518
        %v535 = vunpack.c.l.b16 %v519
        %v536 = vunpack.c.h.b16 %v519
        %v537 = vunpack.c.l.b16 %v520
        %v538 = vunpack.c.h.b16 %v520
        %v539 = vunpack.c.l.b16 %v521
        %v540 = vunpack.c.h.b16 %v521
        %v541 = vunpack.c.l.b16 %v522
        %v542 = vunpack.c.h.b16 %v522
        %v543 = vunpack.c.l.b16 %v523
        %v544 = vpack.c.b16 %v531, %v531
        %v545 = vpack.c.b16 %v532, %v532
        %v546 = vpack.c.b16 %v533, %v533
        %v547 = vpack.c.b16 %v534, %v534
        %v548 = vpack.c.b16 %v535, %v535
        %v549 = vpack.c.b16 %v536, %v536
        %v550 = vpack.c.b16 %v537, %v537
        %v551 = vpack.c.b16 %v538, %v538
        %v552 = vpack.c.b16 %v539, %v539
        %v553 = vpack.c.b16 %v540, %v540
        %v554 = vpack.c.b16 %v541, %v541
        %v555 = vpack.c.b16 %v542, %v542
        %v556 = vpack.c.b16 %v543, %v543
        %570 = vst [vmem:[%s177] sm:$0xf] %v544
        %571 = vst [vmem:[%s177 + $0x4] sm:$0xf] %v545
        %572 = vst [vmem:[%s177 + $0x8] sm:$0xf] %v546
        %573 = vst [vmem:[%s177 + $0xc] sm:$0xf] %v547
        %574 = vst [vmem:[%s177 + $0x10] sm:$0xf] %v548
        %575 = vst [vmem:[%s177 + $0x14] sm:$0xf] %v549
        %576 = vst [vmem:[%s177 + $0x18] sm:$0xf] %v550
        %577 = vst [vmem:[%s177 + $0x1c] sm:$0xf] %v551
        %578 = vst [vmem:[%s177 + $0x20] sm:$0xf] %v552
        %579 = vst [vmem:[%s177 + $0x24] sm:$0xf] %v553
        %580 = vst [vmem:[%s177 + $0x28] sm:$0xf] %v554
        %581 = vst [vmem:[%s177 + $0x2c] sm:$0xf] %v555
        %582 = vst [vmem:[%s177 + $0x30] sm:$0xf] %v556
        %s583 = sand.u32 %s90, 1
        %s584 = sand.u32 %s90, 1
        %s585 = smul.addr %s584, 52
        %s586 = scalar_lea.vmem [#allocation2], %s585
        // Predicated region
        $region33: #{net_forward.7} parent=31 // pred_check
          %p587 = pneg %p100
        $region34: #{net_forward.7} parent=31 // pred_check_branch
          %589 = sbr.rel (%p587) target = $region36
        $region35: #{net_forward.7} parent=31 // pred_region
          %s590 = smul.u32 13, %s14
          %s591 = ssub.s32 25, %s590
          %p592 = scmp.lt.s32.totalorder %s591, 13
          %s593 = scalar_select %p592, %s591, 13
          %s594 = smul.u32 64, %s593
          %p595 = scmp.ne.s32.totalorder 0, %s594
          %s596 = smul.addr %s590, 4
          %s597 = scalar_lea.vmem %s3, %s596
          // Predicated region
          $region37: #{net_forward.7} parent=35 // pred_check
            %p598 = pneg %p595
          $region38: #{net_forward.7} parent=35 // pred_check_branch
            %600 = sbr.rel (%p598) target = $region40
          $region39: #{net_forward.7} parent=35 // pred_region
            // Predicated region
            $region41: #{net_forward.7} parent=39 // pred_check
              _
            $region42: #{net_forward.7} parent=39 // pred_check_branch
              %602 = sbr.rel target = $region44
            $region43: #{net_forward.7} parent=39 // pred_region
              // Predicated region
              $region63: #{net_forward.7} parent=43 // pred_check
                _
              $region64: #{net_forward.7} parent=43 // pred_check_branch
                %677 = sbr.rel (0) target = $region66
              $region65: #{net_forward.7} parent=43 // pred_region
                %s679 = ssub.s32 16, 1
                %s680 = sdiv.u32.pop %s593, 13
                %s681 = srem.u32.pop %s593, 13
                // While loop
                $region67: #{net_forward.7} parent=65 // loop_pre_header
                  _
                $region68: #{net_forward.7} parent=65 // loop_header
                  %s683 = sphi 0, %s685
                  %p684 = scmp.ge.s32.totalorder %s683, %s680
                  %s688 = sphi 0, %s719
                  %s689 = sphi %s586, %s722
                  %s690 = sphi %s597, %s723
                $region69: #{net_forward.7} parent=65 // loop_header_branch
                  %687 = sbr.rel (%p684) target = $region73
                $region70: #{net_forward.7} parent=65 // loop_body
                  %v691 = vld [vmem:[%s689] sm:%s679]
                  %692 = vst [vmem:[%s690] sm:%s679] %v691
                  %v693 = vld [vmem:[%s689 + $0x4] sm:%s679]
                  %694 = vst [vmem:[%s690 + $0x4] sm:%s679] %v693
                  %v695 = vld [vmem:[%s689 + $0x8] sm:%s679]
                  %696 = vst [vmem:[%s690 + $0x8] sm:%s679] %v695
                  %v697 = vld [vmem:[%s689 + $0xc] sm:%s679]
                  %698 = vst [vmem:[%s690 + $0xc] sm:%s679] %v697
                  %v699 = vld [vmem:[%s689 + $0x10] sm:%s679]
                  %700 = vst [vmem:[%s690 + $0x10] sm:%s679] %v699
                  %v701 = vld [vmem:[%s689 + $0x14] sm:%s679]
                  %702 = vst [vmem:[%s690 + $0x14] sm:%s679] %v701
                  %v703 = vld [vmem:[%s689 + $0x18] sm:%s679]
                  %704 = vst [vmem:[%s690 + $0x18] sm:%s679] %v703
                  %v705 = vld [vmem:[%s689 + $0x1c] sm:%s679]
                  %706 = vst [vmem:[%s690 + $0x1c] sm:%s679] %v705
                  %v707 = vld [vmem:[%s689 + $0x20] sm:%s679]
                  %708 = vst [vmem:[%s690 + $0x20] sm:%s679] %v707
                  %v709 = vld [vmem:[%s689 + $0x24] sm:%s679]
                  %710 = vst [vmem:[%s690 + $0x24] sm:%s679] %v709
                  %v711 = vld [vmem:[%s689 + $0x28] sm:%s679]
                  %712 = vst [vmem:[%s690 + $0x28] sm:%s679] %v711
                  %v713 = vld [vmem:[%s689 + $0x2c] sm:%s679]
                  %714 = vst [vmem:[%s690 + $0x2c] sm:%s679] %v713
                  %v715 = vld [vmem:[%s689 + $0x30] sm:%s679]
                  %716 = vst [vmem:[%s690 + $0x30] sm:%s679] %v715
                  %s717 = sadd.s32 1, %s688
                  %p718 = scmp.ge.s32.totalorder %s717, %s680
                  %s719 = scalar_select %p718, 0, %s717
                  %s720 = smul.u32 %s719, 52
                  %s721 = smul.u32 %s719, 52
                  %s722 = scalar_lea.vmem %s586, %s720 [#allocation2]
                  %s723 = scalar_lea.vmem %s597, %s721
                $region71: #{net_forward.7} parent=65 // loop_footer
                  %s685 = sadd.s32 %s683, 1
                $region72: #{net_forward.7} parent=65 // loop_footer_branch
                  %682 = sbr.rel target = $region68
                $region73: #{net_forward.7} parent=65 // loop_exit
                  _
                %s724 = sdiv.u32.pop %s593, 13
                %s725 = srem.u32.pop %s593, 13
                %s726 = smul.u32 %s724, 13
                %s727 = smul.u32 4, %s726
                %s728 = scalar_lea.vmem %s586, %s727 [#allocation2]
                %s729 = smul.u32 4, %s726
                %s730 = scalar_lea.vmem %s597, %s729
                // While loop
                $region74: #{net_forward.7} parent=65 // loop_pre_header
                  _
                $region75: #{net_forward.7} parent=65 // loop_header
                  %s732 = sphi 0, %s734
                  %p733 = scmp.ge.s32.totalorder %s732, %s725
                  %s737 = sphi 0, %s744
                  %s738 = sphi %s728, %s747
                  %s739 = sphi %s730, %s748
                $region76: #{net_forward.7} parent=65 // loop_header_branch
                  %736 = sbr.rel (%p733) target = $region80
                $region77: #{net_forward.7} parent=65 // loop_body
                  %v740 = vld [vmem:[%s738] sm:%s679]
                  %741 = vst [vmem:[%s739] sm:%s679] %v740
                  %s742 = sadd.s32 1, %s737
                  %p743 = scmp.ge.s32.totalorder %s742, %s725
                  %s744 = scalar_select %p743, 0, %s742
                  %s745 = smul.u32 %s744, 4
                  %s746 = smul.u32 %s744, 4
                  %s747 = scalar_lea.vmem %s728, %s745 [#allocation2]
                  %s748 = scalar_lea.vmem %s730, %s746
                $region78: #{net_forward.7} parent=65 // loop_footer
                  %s734 = sadd.s32 %s732, 1
                $region79: #{net_forward.7} parent=65 // loop_footer_branch
                  %731 = sbr.rel target = $region75
                $region80: #{net_forward.7} parent=65 // loop_exit
                  _
              $region66: #{net_forward.7} parent=43 // pred_fallthru
                _
            $region44: #{net_forward.7} parent=39 // pred_fallthru
              _
            // Predicated region
            $region45: #{net_forward.7} parent=39 // pred_check
              _
            $region46: #{net_forward.7} parent=39 // pred_check_branch
              %604 = sbr.rel (0) target = $region48
            $region47: #{net_forward.7} parent=39 // pred_region
              %s606 = ssub.s32 16, 1
              %s607 = sdiv.u32.pop %s593, 13
              %s608 = srem.u32.pop %s593, 13
              // While loop
              $region49: #{net_forward.7} parent=47 // loop_pre_header
                _
              $region50: #{net_forward.7} parent=47 // loop_header
                %s610 = sphi 0, %s612
                %p611 = scmp.ge.s32.totalorder %s610, %s607
                %s615 = sphi 0, %s646
                %s616 = sphi %s586, %s649
                %s617 = sphi %s597, %s650
              $region51: #{net_forward.7} parent=47 // loop_header_branch
                %614 = sbr.rel (%p611) target = $region55
              $region52: #{net_forward.7} parent=47 // loop_body
                %v618 = vld [vmem:[%s616] sm:%s606]
                %619 = vst [vmem:[%s617] sm:%s606] %v618
                %v620 = vld [vmem:[%s616 + $0x4] sm:%s606]
                %621 = vst [vmem:[%s617 + $0x4] sm:%s606] %v620
                %v622 = vld [vmem:[%s616 + $0x8] sm:%s606]
                %623 = vst [vmem:[%s617 + $0x8] sm:%s606] %v622
                %v624 = vld [vmem:[%s616 + $0xc] sm:%s606]
                %625 = vst [vmem:[%s617 + $0xc] sm:%s606] %v624
                %v626 = vld [vmem:[%s616 + $0x10] sm:%s606]
                %627 = vst [vmem:[%s617 + $0x10] sm:%s606] %v626
                %v628 = vld [vmem:[%s616 + $0x14] sm:%s606]
                %629 = vst [vmem:[%s617 + $0x14] sm:%s606] %v628
                %v630 = vld [vmem:[%s616 + $0x18] sm:%s606]
                %631 = vst [vmem:[%s617 + $0x18] sm:%s606] %v630
                %v632 = vld [vmem:[%s616 + $0x1c] sm:%s606]
                %633 = vst [vmem:[%s617 + $0x1c] sm:%s606] %v632
                %v634 = vld [vmem:[%s616 + $0x20] sm:%s606]
                %635 = vst [vmem:[%s617 + $0x20] sm:%s606] %v634
                %v636 = vld [vmem:[%s616 + $0x24] sm:%s606]
                %637 = vst [vmem:[%s617 + $0x24] sm:%s606] %v636
                %v638 = vld [vmem:[%s616 + $0x28] sm:%s606]
                %639 = vst [vmem:[%s617 + $0x28] sm:%s606] %v638
                %v640 = vld [vmem:[%s616 + $0x2c] sm:%s606]
                %641 = vst [vmem:[%s617 + $0x2c] sm:%s606] %v640
                %v642 = vld [vmem:[%s616 + $0x30] sm:%s606]
                %643 = vst [vmem:[%s617 + $0x30] sm:%s606] %v642
                %s644 = sadd.s32 1, %s615
                %p645 = scmp.ge.s32.totalorder %s644, %s607
                %s646 = scalar_select %p645, 0, %s644
                %s647 = smul.u32 %s646, 52
                %s648 = smul.u32 %s646, 52
                %s649 = scalar_lea.vmem %s586, %s647 [#allocation2]
                %s650 = scalar_lea.vmem %s597, %s648
              $region53: #{net_forward.7} parent=47 // loop_footer
                %s612 = sadd.s32 %s610, 1
              $region54: #{net_forward.7} parent=47 // loop_footer_branch
                %609 = sbr.rel target = $region50
              $region55: #{net_forward.7} parent=47 // loop_exit
                _
              %s651 = sdiv.u32.pop %s593, 13
              %s652 = srem.u32.pop %s593, 13
              %s653 = smul.u32 %s651, 13
              %s654 = smul.u32 4, %s653
              %s655 = scalar_lea.vmem %s586, %s654 [#allocation2]
              %s656 = smul.u32 4, %s653
              %s657 = scalar_lea.vmem %s597, %s656
              // While loop
              $region56: #{net_forward.7} parent=47 // loop_pre_header
                _
              $region57: #{net_forward.7} parent=47 // loop_header
                %s659 = sphi 0, %s661
                %p660 = scmp.ge.s32.totalorder %s659, %s652
                %s664 = sphi 0, %s671
                %s665 = sphi %s655, %s674
                %s666 = sphi %s657, %s675
              $region58: #{net_forward.7} parent=47 // loop_header_branch
                %663 = sbr.rel (%p660) target = $region62
              $region59: #{net_forward.7} parent=47 // loop_body
                %v667 = vld [vmem:[%s665] sm:%s606]
                %668 = vst [vmem:[%s666] sm:%s606] %v667
                %s669 = sadd.s32 1, %s664
                %p670 = scmp.ge.s32.totalorder %s669, %s652
                %s671 = scalar_select %p670, 0, %s669
                %s672 = smul.u32 %s671, 4
                %s673 = smul.u32 %s671, 4
                %s674 = scalar_lea.vmem %s655, %s672 [#allocation2]
                %s675 = scalar_lea.vmem %s657, %s673
              $region60: #{net_forward.7} parent=47 // loop_footer
                %s661 = sadd.s32 %s659, 1
              $region61: #{net_forward.7} parent=47 // loop_footer_branch
                %658 = sbr.rel target = $region57
              $region62: #{net_forward.7} parent=47 // loop_exit
                _
            $region48: #{net_forward.7} parent=39 // pred_fallthru
              _
          $region40: #{net_forward.7} parent=35 // pred_fallthru
            _
          %749 = vnop
        $region36: #{net_forward.7} parent=31 // pred_fallthru
          _
      $region32: #{net_forward.7} parent=5 // pred_fallthru
        _
      %p750 = scmp.le.s32.totalorder 2, %s9
      // Predicated region
      $region81: #{net_forward.7} parent=5 // pred_check
        %p751 = pneg %p750
      $region82: #{net_forward.7} parent=5 // pred_check_branch
        %753 = sbr.rel (%p751) target = $region84
      $region83: #{net_forward.7} parent=5 // pred_region
        %s754 = ssub.s32 %s9, 2
        // Predicated region
        $region85: #{net_forward.7} parent=83 // pred_check
          %p755 = pneg %p106
        $region86: #{net_forward.7} parent=83 // pred_check_branch
          %757 = sbr.rel (%p755) target = $region88
        $region87: #{net_forward.7} parent=83 // pred_region
          %s758 = sand.u32 %s91, 1
          %s759 = sand.u32 %s91, 1
          %s760 = smul.addr %s759, 52
          %s761 = scalar_lea.vmem [#allocation2], %s760
        $region88: #{net_forward.7} parent=83 // pred_fallthru
          _
      $region84: #{net_forward.7} parent=5 // pred_fallthru
        _
    $region6: #{net_forward.7} parent=1 // loop_footer
      %s13 = sadd.s32 1, %s9
    $region7: #{net_forward.7} parent=1 // loop_footer_branch
      %8 = sbr.rel target = $region3
    $region8: #{net_forward.7} parent=1 // loop_exit
      _

// kernel: net_forward.8
$region0: #{net_forward.8}
  #allocation0 [shape = 'u32[]', space=smem, size = 0x4, offset = 0x4, fixed_abs, tag = 'smem constant byte address 0x4 - core index']
  #allocation1 [shape = 'u32[144,128]{1,0:T(1,128)}', space=vmem, size = 0x12000, scoped, tag = 'internal scratch']
  %s0 = inlined_call_operand.vmem [shape: bf16[2,5,2,5,32], index: 0, kind: input, shape index: {}, may-alias: {0,1}]
  %s1 = inlined_call_operand.vmem [shape: bf16[2,5,2,5,32], index: 1, kind: input, shape index: {}, may-alias: {0,1}]
  %s2 = inlined_call_operand.vmem [shape: bf16[2,5,5,16], index: 2, kind: output, shape index: {}]
  %s3 = sld [smem:[#allocation0]]
  $region100: #{net_forward.8} parent=0
    _
  %s5 = ssub.s32 1, %s3
  %s6 = scalar_select 0, %s5, %s3
  $region1: #{net_forward.8} parent=0
    #allocation2 [shape = 'u8[20480]{0}', space=vmem, size = 0x5000, scoped, tag = 'input window, operand 0, single buffered']
    #allocation3 [shape = 'u8[20480]{0}', space=vmem, size = 0x5000, scoped, tag = 'input window, operand 1, single buffered']
    // Predicated region
    $region2: #{net_forward.8} parent=1 // pred_check
      _
    $region3: #{net_forward.8} parent=1 // pred_check_branch
      %8 = sbr.rel (0) target = $region5
    $region4: #{net_forward.8} parent=1 // pred_region
      // Predicated region
      $region6: #{net_forward.8} parent=4 // pred_check
        _
      $region7: #{net_forward.8} parent=4 // pred_check_branch
        %10 = sbr.rel (0) target = $region9
      $region8: #{net_forward.8} parent=4 // pred_region
        // Predicated region
        $region10: #{net_forward.8} parent=8 // pred_check
          _
        $region11: #{net_forward.8} parent=8 // pred_check_branch
          %12 = sbr.rel target = $region13
        $region12: #{net_forward.8} parent=8 // pred_region
          // Predicated region
          $region25: #{net_forward.8} parent=12 // pred_check
            _
          $region26: #{net_forward.8} parent=12 // pred_check_branch
            %46 = sbr.rel (0) target = $region28
          $region27: #{net_forward.8} parent=12 // pred_region
            loop: start=0, step=1, limit=1
            $region29: #{net_forward.8} parent=27 // loop_pre_header
              _
            $region30: #{net_forward.8} parent=27 // loop_header
              %s48 = sphi 0, %s52
              %p49 = scmp.ge.s32.totalorder %s48, 1
              %s53 = sphi %s0, %s0
              %s54 = sphi [#allocation2], [#allocation2]
            $region31: #{net_forward.8} parent=27 // loop_header_branch
              %51 = sbr.rel (%p49) target = $region35
            $region32: #{net_forward.8} parent=27 // loop_body
              _
            $region33: #{net_forward.8} parent=27 // loop_footer
              %s52 = sadd.s32 1, %s48
            $region34: #{net_forward.8} parent=27 // loop_footer_branch
              %47 = sbr.rel target = $region30
            $region35: #{net_forward.8} parent=27 // loop_exit
              _
            %s56 = ssub.s32 16, 1
            loop: start=0, step=1, limit=1
            $region36: #{net_forward.8} parent=27 // loop_pre_header
              _
            $region37: #{net_forward.8} parent=27 // loop_header
              %s58 = sphi 0, %s62
              %p59 = scmp.ge.s32.totalorder %s58, 1
              %s63 = sphi %s0, %s0
              %s64 = sphi [#allocation2], [#allocation2]
            $region38: #{net_forward.8} parent=27 // loop_header_branch
              %61 = sbr.rel (%p59) target = $region42
            $region39: #{net_forward.8} parent=27 // loop_body
              %v65 = vld [vmem:[%s63] sm:%s56]
              %66 = vst [vmem:[%s64] sm:%s56] %v65
              %v67 = vld [vmem:[%s63 + $0x8] sm:%s56]
              %68 = vst [vmem:[%s64 + $0x4] sm:%s56] %v67
              %v69 = vld [vmem:[%s63 + $0x10] sm:%s56]
              %70 = vst [vmem:[%s64 + $0x8] sm:%s56] %v69
              %v71 = vld [vmem:[%s63 + $0x18] sm:%s56]
              %72 = vst [vmem:[%s64 + $0xc] sm:%s56] %v71
              %v73 = vld [vmem:[%s63 + $0x20] sm:%s56]
              %74 = vst [vmem:[%s64 + $0x10] sm:%s56] %v73
              %v75 = vld [vmem:[%s63 + $0x28] sm:%s56]
              %76 = vst [vmem:[%s64 + $0x14] sm:%s56] %v75
              %v77 = vld [vmem:[%s63 + $0x30] sm:%s56]
              %78 = vst [vmem:[%s64 + $0x18] sm:%s56] %v77
              %v79 = vld [vmem:[%s63 + $0x38] sm:%s56]
              %80 = vst [vmem:[%s64 + $0x1c] sm:%s56] %v79
              %v81 = vld [vmem:[%s63 + $0x40] sm:%s56]
              %82 = vst [vmem:[%s64 + $0x20] sm:%s56] %v81
              %v83 = vld [vmem:[%s63 + $0x48] sm:%s56]
              %84 = vst [vmem:[%s64 + $0x24] sm:%s56] %v83
            $region40: #{net_forward.8} parent=27 // loop_footer
              %s62 = sadd.s32 1, %s58
            $region41: #{net_forward.8} parent=27 // loop_footer_branch
              %57 = sbr.rel target = $region37
            $region42: #{net_forward.8} parent=27 // loop_exit
              _
          $region28: #{net_forward.8} parent=12 // pred_fallthru
            _
        $region13: #{net_forward.8} parent=8 // pred_fallthru
          _
        // Predicated region
        $region14: #{net_forward.8} parent=8 // pred_check
          _
        $region15: #{net_forward.8} parent=8 // pred_check_branch
          %14 = sbr.rel (0) target = $region17
        $region16: #{net_forward.8} parent=8 // pred_region
          %s16 = ssub.s32 16, 1
          loop: start=0, step=1, limit=1
          $region18: #{net_forward.8} parent=16 // loop_pre_header
            _
          $region19: #{net_forward.8} parent=16 // loop_header
            %s18 = sphi 0, %s22
            %p19 = scmp.ge.s32.totalorder %s18, 1
            %s23 = sphi %s0, %s0
            %s24 = sphi [#allocation2], [#allocation2]
          $region20: #{net_forward.8} parent=16 // loop_header_branch
            %21 = sbr.rel (%p19) target = $region24
          $region21: #{net_forward.8} parent=16 // loop_body
            %v25 = vld [vmem:[%s23] sm:%s16]
            %26 = vst [vmem:[%s24] sm:%s16] %v25
            %v27 = vld [vmem:[%s23 + $0x8] sm:%s16]
            %28 = vst [vmem:[%s24 + $0x4] sm:%s16] %v27
            %v29 = vld [vmem:[%s23 + $0x10] sm:%s16]
            %30 = vst [vmem:[%s24 + $0x8] sm:%s16] %v29
            %v31 = vld [vmem:[%s23 + $0x18] sm:%s16]
            %32 = vst [vmem:[%s24 + $0xc] sm:%s16] %v31
            %v33 = vld [vmem:[%s23 + $0x20] sm:%s16]
            %34 = vst [vmem:[%s24 + $0x10] sm:%s16] %v33
            %v35 = vld [vmem:[%s23 + $0x28] sm:%s16]
            %36 = vst [vmem:[%s24 + $0x14] sm:%s16] %v35
            %v37 = vld [vmem:[%s23 + $0x30] sm:%s16]
            %38 = vst [vmem:[%s24 + $0x18] sm:%s16] %v37
            %v39 = vld [vmem:[%s23 + $0x38] sm:%s16]
            %40 = vst [vmem:[%s24 + $0x1c] sm:%s16] %v39
            %v41 = vld [vmem:[%s23 + $0x40] sm:%s16]
            %42 = vst [vmem:[%s24 + $0x20] sm:%s16] %v41
            %v43 = vld [vmem:[%s23 + $0x48] sm:%s16]
            %44 = vst [vmem:[%s24 + $0x24] sm:%s16] %v43
          $region22: #{net_forward.8} parent=16 // loop_footer
            %s22 = sadd.s32 1, %s18
          $region23: #{net_forward.8} parent=16 // loop_footer_branch
            %17 = sbr.rel target = $region19
          $region24: #{net_forward.8} parent=16 // loop_exit
            _
        $region17: #{net_forward.8} parent=8 // pred_fallthru
          _
      $region9: #{net_forward.8} parent=4 // pred_fallthru
        _
      %85 = vnop
    $region5: #{net_forward.8} parent=1 // pred_fallthru
      _
    // Predicated region
    $region43: #{net_forward.8} parent=1 // pred_check
      _
    $region44: #{net_forward.8} parent=1 // pred_check_branch
      %87 = sbr.rel (0) target = $region46
    $region45: #{net_forward.8} parent=1 // pred_region
      %s88 = scalar_lea.vmem %s1, 4
      // Predicated region
      $region47: #{net_forward.8} parent=45 // pred_check
        _
      $region48: #{net_forward.8} parent=45 // pred_check_branch
        %90 = sbr.rel (0) target = $region50
      $region49: #{net_forward.8} parent=45 // pred_region
        // Predicated region
        $region51: #{net_forward.8} parent=49 // pred_check
          _
        $region52: #{net_forward.8} parent=49 // pred_check_branch
          %92 = sbr.rel target = $region54
        $region53: #{net_forward.8} parent=49 // pred_region
          // Predicated region
          $region66: #{net_forward.8} parent=53 // pred_check
            _
          $region67: #{net_forward.8} parent=53 // pred_check_branch
            %126 = sbr.rel (0) target = $region69
          $region68: #{net_forward.8} parent=53 // pred_region
            loop: start=0, step=1, limit=1
            $region70: #{net_forward.8} parent=68 // loop_pre_header
              _
            $region71: #{net_forward.8} parent=68 // loop_header
              %s128 = sphi 0, %s132
              %p129 = scmp.ge.s32.totalorder %s128, 1
              %s133 = sphi %s88, %s88
              %s134 = sphi [#allocation3], [#allocation3]
            $region72: #{net_forward.8} parent=68 // loop_header_branch
              %131 = sbr.rel (%p129) target = $region76
            $region73: #{net_forward.8} parent=68 // loop_body
              _
            $region74: #{net_forward.8} parent=68 // loop_footer
              %s132 = sadd.s32 1, %s128
            $region75: #{net_forward.8} parent=68 // loop_footer_branch
              %127 = sbr.rel target = $region71
            $region76: #{net_forward.8} parent=68 // loop_exit
              _
            %s136 = ssub.s32 16, 1
            loop: start=0, step=1, limit=1
            $region77: #{net_forward.8} parent=68 // loop_pre_header
              _
            $region78: #{net_forward.8} parent=68 // loop_header
              %s138 = sphi 0, %s142
              %p139 = scmp.ge.s32.totalorder %s138, 1
              %s143 = sphi %s88, %s88
              %s144 = sphi [#allocation3], [#allocation3]
            $region79: #{net_forward.8} parent=68 // loop_header_branch
              %141 = sbr.rel (%p139) target = $region83
            $region80: #{net_forward.8} parent=68 // loop_body
              %v145 = vld [vmem:[%s143] sm:%s136]
              %146 = vst [vmem:[%s144] sm:%s136] %v145
              %v147 = vld [vmem:[%s143 + $0x8] sm:%s136]
              %148 = vst [vmem:[%s144 + $0x4] sm:%s136] %v147
              %v149 = vld [vmem:[%s143 + $0x10] sm:%s136]
              %150 = vst [vmem:[%s144 + $0x8] sm:%s136] %v149
              %v151 = vld [vmem:[%s143 + $0x18] sm:%s136]
              %152 = vst [vmem:[%s144 + $0xc] sm:%s136] %v151
              %v153 = vld [vmem:[%s143 + $0x20] sm:%s136]
              %154 = vst [vmem:[%s144 + $0x10] sm:%s136] %v153
              %v155 = vld [vmem:[%s143 + $0x28] sm:%s136]
              %156 = vst [vmem:[%s144 + $0x14] sm:%s136] %v155
              %v157 = vld [vmem:[%s143 + $0x30] sm:%s136]
              %158 = vst [vmem:[%s144 + $0x18] sm:%s136] %v157
              %v159 = vld [vmem:[%s143 + $0x38] sm:%s136]
              %160 = vst [vmem:[%s144 + $0x1c] sm:%s136] %v159
              %v161 = vld [vmem:[%s143 + $0x40] sm:%s136]
              %162 = vst [vmem:[%s144 + $0x20] sm:%s136] %v161
              %v163 = vld [vmem:[%s143 + $0x48] sm:%s136]
              %164 = vst [vmem:[%s144 + $0x24] sm:%s136] %v163
            $region81: #{net_forward.8} parent=68 // loop_footer
              %s142 = sadd.s32 1, %s138
            $region82: #{net_forward.8} parent=68 // loop_footer_branch
              %137 = sbr.rel target = $region78
            $region83: #{net_forward.8} parent=68 // loop_exit
              _
          $region69: #{net_forward.8} parent=53 // pred_fallthru
            _
        $region54: #{net_forward.8} parent=49 // pred_fallthru
          _
        // Predicated region
        $region55: #{net_forward.8} parent=49 // pred_check
          _
        $region56: #{net_forward.8} parent=49 // pred_check_branch
          %94 = sbr.rel (0) target = $region58
        $region57: #{net_forward.8} parent=49 // pred_region
          %s96 = ssub.s32 16, 1
          loop: start=0, step=1, limit=1
          $region59: #{net_forward.8} parent=57 // loop_pre_header
            _
          $region60: #{net_forward.8} parent=57 // loop_header
            %s98 = sphi 0, %s102
            %p99 = scmp.ge.s32.totalorder %s98, 1
            %s103 = sphi %s88, %s88
            %s104 = sphi [#allocation3], [#allocation3]
          $region61: #{net_forward.8} parent=57 // loop_header_branch
            %101 = sbr.rel (%p99) target = $region65
          $region62: #{net_forward.8} parent=57 // loop_body
            %v105 = vld [vmem:[%s103] sm:%s96]
            %106 = vst [vmem:[%s104] sm:%s96] %v105
            %v107 = vld [vmem:[%s103 + $0x8] sm:%s96]
            %108 = vst [vmem:[%s104 + $0x4] sm:%s96] %v107
            %v109 = vld [vmem:[%s103 + $0x10] sm:%s96]
            %110 = vst [vmem:[%s104 + $0x8] sm:%s96] %v109
            %v111 = vld [vmem:[%s103 + $0x18] sm:%s96]
            %112 = vst [vmem:[%s104 + $0xc] sm:%s96] %v111
            %v113 = vld [vmem:[%s103 + $0x20] sm:%s96]
            %114 = vst [vmem:[%s104 + $0x10] sm:%s96] %v113
            %v115 = vld [vmem:[%s103 + $0x28] sm:%s96]
            %116 = vst [vmem:[%s104 + $0x14] sm:%s96] %v115
            %v117 = vld [vmem:[%s103 + $0x30] sm:%s96]
            %118 = vst [vmem:[%s104 + $0x18] sm:%s96] %v117
            %v119 = vld [vmem:[%s103 + $0x38] sm:%s96]
            %120 = vst [vmem:[%s104 + $0x1c] sm:%s96] %v119
            %v121 = vld [vmem:[%s103 + $0x40] sm:%s96]
            %122 = vst [vmem:[%s104 + $0x20] sm:%s96] %v121
            %v123 = vld [vmem:[%s103 + $0x48] sm:%s96]
            %124 = vst [vmem:[%s104 + $0x24] sm:%s96] %v123
          $region63: #{net_forward.8} parent=57 // loop_footer
            %s102 = sadd.s32 1, %s98
          $region64: #{net_forward.8} parent=57 // loop_footer_branch
            %97 = sbr.rel target = $region60
          $region65: #{net_forward.8} parent=57 // loop_exit
            _
        $region58: #{net_forward.8} parent=49 // pred_fallthru
          _
      $region50: #{net_forward.8} parent=45 // pred_fallthru
        _
      %165 = vnop
    $region46: #{net_forward.8} parent=1 // pred_fallthru
      _
    // Predicated region
    $region84: #{net_forward.8} parent=1 // pred_check
      _
    $region85: #{net_forward.8} parent=1 // pred_check_branch
      %167 = sbr.rel (0) target = $region87
    $region86: #{net_forward.8} parent=1 // pred_region
      _
    $region87: #{net_forward.8} parent=1 // pred_fallthru
      _
    // Predicated region
    $region88: #{net_forward.8} parent=1 // pred_check
      _
    $region89: #{net_forward.8} parent=1 // pred_check_branch
      %169 = sbr.rel (0) target = $region91
    $region90: #{net_forward.8} parent=1 // pred_region
      _
    $region91: #{net_forward.8} parent=1 // pred_fallthru
      _
    %v170 = vld [vmem:[#allocation2] sm:$0x7]
    %v171 = vld [vmem:[#allocation2 + $0x4] sm:$0x7]
    %v172 = vld [vmem:[#allocation2 + $0x8] sm:$0x7]
    %v173 = vld [vmem:[#allocation2 + $0xc] sm:$0x7]
    %v174 = vld [vmem:[#allocation2 + $0x10] sm:$0x7]
    %v175 = vld [vmem:[#allocation2 + $0x14] sm:$0x7]
    %v176 = vld [vmem:[#allocation2 + $0x18] sm:$0x7]
    %v177 = vld [vmem:[#allocation2 + $0x1c] sm:$0x7]
    %v178 = vld [vmem:[#allocation2 + $0x20] sm:$0x7]
    %v179 = vld [vmem:[#allocation2 + $0x24] sm:$0x7]
    %v180 = vld [vmem:[#allocation3] sm:$0x7]
    %v181 = vld [vmem:[#allocation3 + $0x4] sm:$0x7]
    %v182 = vld [vmem:[#allocation3 + $0x8] sm:$0x7]
    %v183 = vld [vmem:[#allocation3 + $0xc] sm:$0x7]
    %v184 = vld [vmem:[#allocation3 + $0x10] sm:$0x7]
    %v185 = vld [vmem:[#allocation3 + $0x14] sm:$0x7]
    %v186 = vld [vmem:[#allocation3 + $0x18] sm:$0x7]
    %v187 = vld [vmem:[#allocation3 + $0x1c] sm:$0x7]
    %v188 = vld [vmem:[#allocation3 + $0x20] sm:$0x7]
    %v189 = vld [vmem:[#allocation3 + $0x24] sm:$0x7]
    %v190 = vmax.bf16 %v170, %v180
    %v191 = vmax.bf16 %v171, %v181
    %v192 = vmax.bf16 %v172, %v182
    %v193 = vmax.bf16 %v173, %v183
    %v194 = vmax.bf16 %v174, %v184
    %v195 = vmax.bf16 %v175, %v185
    %v196 = vmax.bf16 %v176, %v186
    %v197 = vmax.bf16 %v177, %v187
    %v198 = vmax.bf16 %v178, %v188
    %v199 = vmax.bf16 %v179, %v189
    %210 = vrot.lane.b32.xlu0 %v190, 112
    %v211 = vpop.permute.xlu0 %210
    %212 = vrot.lane.b32.xlu0 %v191, 112
    %v213 = vpop.permute.xlu0 %212
    %214 = vrot.lane.b32.xlu0 %v192, 112
    %v215 = vpop.permute.xlu0 %214
    %216 = vrot.lane.b32.xlu0 %v193, 112
    %v217 = vpop.permute.xlu0 %216
    %218 = vrot.lane.b32.xlu0 %v194, 112
    %v219 = vpop.permute.xlu0 %218
    %220 = vrot.lane.b32.xlu0 %v195, 112
    %v221 = vpop.permute.xlu0 %220
    %222 = vrot.lane.b32.xlu0 %v196, 112
    %v223 = vpop.permute.xlu0 %222
    %224 = vrot.lane.b32.xlu0 %v197, 112
    %v225 = vpop.permute.xlu0 %224
    %226 = vrot.lane.b32.xlu0 %v198, 112
    %v227 = vpop.permute.xlu0 %226
    %228 = vrot.lane.b32.xlu0 %v199, 112
    %v229 = vpop.permute.xlu0 %228
    %v240 = vmax.bf16 %v190, %v211
    %v241 = vmax.bf16 %v191, %v213
    %v242 = vmax.bf16 %v192, %v215
    %v243 = vmax.bf16 %v193, %v217
    %v244 = vmax.bf16 %v194, %v219
    %v245 = vmax.bf16 %v195, %v221
    %v246 = vmax.bf16 %v196, %v223
    %v247 = vmax.bf16 %v197, %v225
    %v248 = vmax.bf16 %v198, %v227
    %v249 = vmax.bf16 %v199, %v229
    %vm250 = vcmask 124928
    %vm251 = vsmask.f32 2304
    %vm252 = vmand %vm250, %vm251
    %v253 = vld [vmem:[%s2] sm:$0x7]
    %v254 = vsel %vm252, %v240, %v253
    %255 = vst [vmem:[%s2] sm:$0x7] %v254
    %v256 = vld [vmem:[%s2 + $0x4] sm:$0x7]
    %v257 = vsel %vm252, %v241, %v256
    %258 = vst [vmem:[%s2 + $0x4] sm:$0x7] %v257
    %v259 = vld [vmem:[%s2 + $0x8] sm:$0x7]
    %v260 = vsel %vm252, %v242, %v259
    %261 = vst [vmem:[%s2 + $0x8] sm:$0x7] %v260
    %v262 = vld [vmem:[%s2 + $0xc] sm:$0x7]
    %v263 = vsel %vm252, %v243, %v262
    %264 = vst [vmem:[%s2 + $0xc] sm:$0x7] %v263
    %v265 = vld [vmem:[%s2 + $0x10] sm:$0x7]
    %v266 = vsel %vm252, %v244, %v265
    %267 = vst [vmem:[%s2 + $0x10] sm:$0x7] %v266
    %v268 = vld [vmem:[%s2 + $0x14] sm:$0x7]
    %v269 = vsel %vm252, %v245, %v268
    %270 = vst [vmem:[%s2 + $0x14] sm:$0x7] %v269
    %v271 = vld [vmem:[%s2 + $0x18] sm:$0x7]
    %v272 = vsel %vm252, %v246, %v271
    %273 = vst [vmem:[%s2 + $0x18] sm:$0x7] %v272
    %v274 = vld [vmem:[%s2 + $0x1c] sm:$0x7]
    %v275 = vsel %vm252, %v247, %v274
    %276 = vst [vmem:[%s2 + $0x1c] sm:$0x7] %v275
    %v277 = vld [vmem:[%s2 + $0x20] sm:$0x7]
    %v278 = vsel %vm252, %v248, %v277
    %279 = vst [vmem:[%s2 + $0x20] sm:$0x7] %v278
    %v280 = vld [vmem:[%s2 + $0x24] sm:$0x7]
    %v281 = vsel %vm252, %v249, %v280
    %282 = vst [vmem:[%s2 + $0x24] sm:$0x7] %v281
    // Predicated region
    $region92: #{net_forward.8} parent=1 // pred_check
      _
    $region93: #{net_forward.8} parent=1 // pred_check_branch
      %284 = sbr.rel (0) target = $region95
    $region94: #{net_forward.8} parent=1 // pred_region
      _
    $region95: #{net_forward.8} parent=1 // pred_fallthru
      _
    // Predicated region
    $region96: #{net_forward.8} parent=1 // pred_check
      _
    $region97: #{net_forward.8} parent=1 // pred_check_branch
      %286 = sbr.rel (0) target = $region99
    $region98: #{net_forward.8} parent=1 // pred_region
      _
    $region99: #{net_forward.8} parent=1 // pred_fallthru
      _

// kernel: net_forward.9
$region0: #{net_forward.9}
  #allocation0 [shape = 'u32[]', space=smem, size = 0x4, offset = 0x4, fixed_abs, tag = 'smem constant byte address 0x4 - core index']
  #allocation1 [shape = 'u32[144,128]{1,0:T(1,128)}', space=vmem, size = 0x12000, scoped, tag = 'internal scratch']
  %s0 = inlined_call_operand.vmem [shape: bf16[2,512], index: 0, kind: input, shape index: {}]
  %s1 = inlined_call_operand.vmem [shape: bf16[512,128], index: 1, kind: input, shape index: {}]
  %s2 = inlined_call_operand.vmem [shape: f32[1,128], index: 2, kind: input, shape index: {}]
  %s3 = inlined_call_operand.vmem [shape: bf16[128,128], index: 3, kind: input, shape index: {}]
  %s4 = inlined_call_operand.vmem [shape: f32[1,128], index: 4, kind: input, shape index: {}]
  %s5 = inlined_call_operand.vmem [shape: bf16[128,128], index: 5, kind: input, shape index: {}]
  %s6 = inlined_call_operand.vmem [shape: f32[1,128], index: 6, kind: input, shape index: {}]
  %s7 = inlined_call_operand.hbm [shape: f32[2,128], index: 7, kind: output, shape index: {}]
  %s8 = sld [smem:[#allocation0]]
  $region38: #{net_forward.9} parent=0
    _
  %s10 = ssub.s32 1, %s8
  %s11 = scalar_select 0, %s10, %s8
  $region1: #{net_forward.9} parent=0
    #allocation2 [shape = 'u8[1024]{0}', space=vmem, size = 0x400, scoped, tag = 'output window, operand 0, single buffered']
    #allocation3 [shape = 's32[1]{0}', space=sflag, size = 0x4, scoped, tag = 'scoped memory for net_forward.9']
    %12 = vsyncpa [#allocation3], 0
    // Predicated region
    $region2: #{net_forward.9} parent=1 // pred_check
      _
    $region3: #{net_forward.9} parent=1 // pred_check_branch
      %14 = sbr.rel (0) target = $region5
    $region4: #{net_forward.9} parent=1 // pred_region
      _
    $region5: #{net_forward.9} parent=1 // pred_fallthru
      _
    // Predicated region
    $region6: #{net_forward.9} parent=1 // pred_check
      _
    $region7: #{net_forward.9} parent=1 // pred_check_branch
      %16 = sbr.rel (0) target = $region9
    $region8: #{net_forward.9} parent=1 // pred_region
      _
    $region9: #{net_forward.9} parent=1 // pred_fallthru
      _
    // Predicated region
    $region10: #{net_forward.9} parent=1 // pred_check
      _
    $region11: #{net_forward.9} parent=1 // pred_check_branch
      %18 = sbr.rel (0) target = $region13
    $region12: #{net_forward.9} parent=1 // pred_region
      _
    $region13: #{net_forward.9} parent=1 // pred_fallthru
      _
    // Predicated region
    $region14: #{net_forward.9} parent=1 // pred_check
      _
    $region15: #{net_forward.9} parent=1 // pred_check_branch
      %20 = sbr.rel (0) target = $region17
    $region16: #{net_forward.9} parent=1 // pred_region
      _
    $region17: #{net_forward.9} parent=1 // pred_fallthru
      _
    // Predicated region
    $region18: #{net_forward.9} parent=1 // pred_check
      _
    $region19: #{net_forward.9} parent=1 // pred_check_branch
      %22 = sbr.rel (0) target = $region21
    $region20: #{net_forward.9} parent=1 // pred_region
      _
    $region21: #{net_forward.9} parent=1 // pred_fallthru
      _
    // Predicated region
    $region22: #{net_forward.9} parent=1 // pred_check
      _
    $region23: #{net_forward.9} parent=1 // pred_check_branch
      %24 = sbr.rel (0) target = $region25
    $region24: #{net_forward.9} parent=1 // pred_region
      _
    $region25: #{net_forward.9} parent=1 // pred_fallthru
      _
    // Predicated region
    $region26: #{net_forward.9} parent=1 // pred_check
      _
    $region27: #{net_forward.9} parent=1 // pred_check_branch
      %26 = sbr.rel (0) target = $region29
    $region28: #{net_forward.9} parent=1 // pred_region
      _
    $region29: #{net_forward.9} parent=1 // pred_fallthru
      _
    %v28 = vld [vmem:[%s0] sm:$0xf]
    %v29 = vld [vmem:[%s1] sm:$0xf]
    %v30 = vld [vmem:[%s1 + $0x4] sm:$0xf]
    %v31 = vld [vmem:[%s1 + $0x8] sm:$0xf]
    %v32 = vld [vmem:[%s1 + $0xc] sm:$0xf]
    %v33 = vld [vmem:[%s1 + $0x10] sm:$0xf]
    %v34 = vld [vmem:[%s1 + $0x14] sm:$0xf]
    %v35 = vld [vmem:[%s1 + $0x18] sm:$0xf]
    %v36 = vld [vmem:[%s1 + $0x1c] sm:$0xf]
    %v37 = vld [vmem:[%s1 + $0x20] sm:$0xf]
    %v38 = vld [vmem:[%s1 + $0x24] sm:$0xf]
    %v39 = vld [vmem:[%s1 + $0x28] sm:$0xf]
    %v40 = vld [vmem:[%s1 + $0x2c] sm:$0xf]
    %v41 = vld [vmem:[%s1 + $0x30] sm:$0xf]
    %v42 = vld [vmem:[%s1 + $0x34] sm:$0xf]
    %v43 = vld [vmem:[%s1 + $0x38] sm:$0xf]
    %v44 = vld [vmem:[%s1 + $0x3c] sm:$0xf]
    %v45 = vld [vmem:[%s1 + $0x40] sm:$0xf]
    %v46 = vld [vmem:[%s1 + $0x44] sm:$0xf]
    %v47 = vld [vmem:[%s1 + $0x48] sm:$0xf]
    %v48 = vld [vmem:[%s1 + $0x4c] sm:$0xf]
    %v49 = vld [vmem:[%s1 + $0x50] sm:$0xf]
    %v50 = vld [vmem:[%s1 + $0x54] sm:$0xf]
    %v51 = vld [vmem:[%s1 + $0x58] sm:$0xf]
    %v52 = vld [vmem:[%s1 + $0x5c] sm:$0xf]
    %v53 = vld [vmem:[%s1 + $0x60] sm:$0xf]
    %v54 = vld [vmem:[%s1 + $0x64] sm:$0xf]
    %v55 = vld [vmem:[%s1 + $0x68] sm:$0xf]
    %v56 = vld [vmem:[%s1 + $0x6c] sm:$0xf]
    %v57 = vld [vmem:[%s1 + $0x70] sm:$0xf]
    %v58 = vld [vmem:[%s1 + $0x74] sm:$0xf]
    %v59 = vld [vmem:[%s1 + $0x78] sm:$0xf]
    %v60 = vld [vmem:[%s1 + $0x7c] sm:$0xf]
    %v61 = vld [vmem:[%s1 + $0x80] sm:$0xf]
    %v62 = vld [vmem:[%s1 + $0x84] sm:$0xf]
    %v63 = vld [vmem:[%s1 + $0x88] sm:$0xf]
    %v64 = vld [vmem:[%s1 + $0x8c] sm:$0xf]
    %v65 = vld [vmem:[%s1 + $0x90] sm:$0xf]
    %v66 = vld [vmem:[%s1 + $0x94] sm:$0xf]
    %v67 = vld [vmem:[%s1 + $0x98] sm:$0xf]
    %v68 = vld [vmem:[%s1 + $0x9c] sm:$0xf]
    %v69 = vld [vmem:[%s1 + $0xa0] sm:$0xf]
    %v70 = vld [vmem:[%s1 + $0xa4] sm:$0xf]
    %v71 = vld [vmem:[%s1 + $0xa8] sm:$0xf]
    %v72 = vld [vmem:[%s1 + $0xac] sm:$0xf]
    %v73 = vld [vmem:[%s1 + $0xb0] sm:$0xf]
    %v74 = vld [vmem:[%s1 + $0xb4] sm:$0xf]
    %v75 = vld [vmem:[%s1 + $0xb8] sm:$0xf]
    %v76 = vld [vmem:[%s1 + $0xbc] sm:$0xf]
    %v77 = vld [vmem:[%s1 + $0xc0] sm:$0xf]
    %v78 = vld [vmem:[%s1 + $0xc4] sm:$0xf]
    %v79 = vld [vmem:[%s1 + $0xc8] sm:$0xf]
    %v80 = vld [vmem:[%s1 + $0xcc] sm:$0xf]
    %v81 = vld [vmem:[%s1 + $0xd0] sm:$0xf]
    %v82 = vld [vmem:[%s1 + $0xd4] sm:$0xf]
    %v83 = vld [vmem:[%s1 + $0xd8] sm:$0xf]
    %v84 = vld [vmem:[%s1 + $0xdc] sm:$0xf]
    %v85 = vld [vmem:[%s1 + $0xe0] sm:$0xf]
    %v86 = vld [vmem:[%s1 + $0xe4] sm:$0xf]
    %v87 = vld [vmem:[%s1 + $0xe8] sm:$0xf]
    %v88 = vld [vmem:[%s1 + $0xec] sm:$0xf]
    %v89 = vld [vmem:[%s1 + $0xf0] sm:$0xf]
    %v90 = vld [vmem:[%s1 + $0xf4] sm:$0xf]
    %v91 = vld [vmem:[%s1 + $0xf8] sm:$0xf]
    %v92 = vld [vmem:[%s1 + $0xfc] sm:$0xf]
    %v93 = vld [vmem:[%s2] sm:$0x1]
    %v95 = vlaneseq
    %v96 = vshrl.u32 %v95, 7
    %v97 = vsub.s32 0, %v96
    %v98 = vrot.slane %v93, %v97
    %v102 = vunpack.c.l.s4 1966171168
    %v103 = vunpack.c.0.s8 %v102
    %v104 = vlaneseq
    %v105 = vshrl.u32 %v104, 7
    %v106 = vsub.s32 %v103, %v105
    %v107 = vrot.slane %v28, %v106
    %v108 = vcombine.high %v107, %v107
    %v110 = vunpack.c.l.s4 1966171168
    %v111 = vunpack.c.0.s8 %v110
    %v112 = vlaneseq
    %v113 = vshrl.u32 %v112, 7
    %v114 = vsub.s32 %v111, %v113
    %v115 = vrot.slane %v107, %v114
    %v117 = vunpack.c.l.s4 1966171168
    %v118 = vunpack.c.0.s8 %v117
    %v119 = vlaneseq
    %v120 = vshrl.u32 %v119, 7
    %v121 = vsub.s32 %v118, %v120
    %v122 = vrot.slane %v108, %v121
    %v123 = vcombine.high %v115, %v115
    %v124 = vcombine.high %v122, %v122
    %v193 = vunpack.c.l.b16 %v29
    %v194 = vunpack.c.l.b16 %v30
    %v195 = vunpack.c.l.b16 %v31
    %v196 = vunpack.c.l.b16 %v32
    %v197 = vunpack.c.l.b16 %v33
    %v198 = vunpack.c.l.b16 %v34
    %v199 = vunpack.c.l.b16 %v35
    %v200 = vunpack.c.l.b16 %v36
    %v201 = vunpack.c.l.b16 %v37
    %v202 = vunpack.c.l.b16 %v38
    %v203 = vunpack.c.l.b16 %v39
    %v204 = vunpack.c.l.b16 %v40
    %v205 = vunpack.c.l.b16 %v41
    %v206 = vunpack.c.l.b16 %v42
    %v207 = vunpack.c.l.b16 %v43
    %v208 = vunpack.c.l.b16 %v44
    %v209 = vunpack.c.l.b16 %v45
    %v210 = vunpack.c.l.b16 %v46
    %v211 = vunpack.c.l.b16 %v47
    %v212 = vunpack.c.l.b16 %v48
    %v213 = vunpack.c.l.b16 %v49
    %v214 = vunpack.c.l.b16 %v50
    %v215 = vunpack.c.l.b16 %v51
    %v216 = vunpack.c.l.b16 %v52
    %v217 = vunpack.c.l.b16 %v53
    %v218 = vunpack.c.l.b16 %v54
    %v219 = vunpack.c.l.b16 %v55
    %v220 = vunpack.c.l.b16 %v56
    %v221 = vunpack.c.l.b16 %v57
    %v222 = vunpack.c.l.b16 %v58
    %v223 = vunpack.c.l.b16 %v59
    %v224 = vunpack.c.l.b16 %v60
    %v225 = vunpack.c.l.b16 %v61
    %v226 = vunpack.c.l.b16 %v62
    %v227 = vunpack.c.l.b16 %v63
    %v228 = vunpack.c.l.b16 %v64
    %v229 = vunpack.c.l.b16 %v65
    %v230 = vunpack.c.l.b16 %v66
    %v231 = vunpack.c.l.b16 %v67
    %v232 = vunpack.c.l.b16 %v68
    %v233 = vunpack.c.l.b16 %v69
    %v234 = vunpack.c.l.b16 %v70
    %v235 = vunpack.c.l.b16 %v71
    %v236 = vunpack.c.l.b16 %v72
    %v237 = vunpack.c.l.b16 %v73
    %v238 = vunpack.c.l.b16 %v74
    %v239 = vunpack.c.l.b16 %v75
    %v240 = vunpack.c.l.b16 %v76
    %v241 = vunpack.c.l.b16 %v77
    %v242 = vunpack.c.l.b16 %v78
    %v243 = vunpack.c.l.b16 %v79
    %v244 = vunpack.c.l.b16 %v80
    %v245 = vunpack.c.l.b16 %v81
    %v246 = vunpack.c.l.b16 %v82
    %v247 = vunpack.c.l.b16 %v83
    %v248 = vunpack.c.l.b16 %v84
    %v249 = vunpack.c.l.b16 %v85
    %v250 = vunpack.c.l.b16 %v86
    %v251 = vunpack.c.l.b16 %v87
    %v252 = vunpack.c.l.b16 %v88
    %v253 = vunpack.c.l.b16 %v89
    %v254 = vunpack.c.l.b16 %v90
    %v255 = vunpack.c.l.b16 %v91
    %v256 = vunpack.c.l.b16 %v92
    %v257 = vpack.c.b16 %v194, %v193
    %v258 = vpack.c.b16 %v196, %v195
    %v259 = vpack.c.b16 %v198, %v197
    %v260 = vpack.c.b16 %v200, %v199
    %v261 = vpack.c.b16 %v202, %v201
    %v262 = vpack.c.b16 %v204, %v203
    %v263 = vpack.c.b16 %v206, %v205
    %v264 = vpack.c.b16 %v208, %v207
    %v265 = vpack.c.b16 %v210, %v209
    %v266 = vpack.c.b16 %v212, %v211
    %v267 = vpack.c.b16 %v214, %v213
    %v268 = vpack.c.b16 %v216, %v215
    %v269 = vpack.c.b16 %v218, %v217
    %v270 = vpack.c.b16 %v220, %v219
    %v271 = vpack.c.b16 %v222, %v221
    %v272 = vpack.c.b16 %v224, %v223
    %v273 = vpack.c.b16 %v226, %v225
    %v274 = vpack.c.b16 %v228, %v227
    %v275 = vpack.c.b16 %v230, %v229
    %v276 = vpack.c.b16 %v232, %v231
    %v277 = vpack.c.b16 %v234, %v233
    %v278 = vpack.c.b16 %v236, %v235
    %v279 = vpack.c.b16 %v238, %v237
    %v280 = vpack.c.b16 %v240, %v239
    %v281 = vpack.c.b16 %v242, %v241
    %v282 = vpack.c.b16 %v244, %v243
    %v283 = vpack.c.b16 %v246, %v245
    %v284 = vpack.c.b16 %v248, %v247
    %v285 = vpack.c.b16 %v250, %v249
    %v286 = vpack.c.b16 %v252, %v251
    %v287 = vpack.c.b16 %v254, %v253
    %v288 = vpack.c.b16 %v256, %v255
    %321 = vmatprep.subr.bf16.mxu0 0
    %322 = vmatpush1.bf16.msra.mxu0 %v264
    %323 = vmatprep.subr.bf16.mxu0 0
    %324 = vmatpush1.bf16.msra.mxu0 %v263
    %325 = vmatprep.subr.bf16.mxu0 0
    %326 = vmatpush1.bf16.msra.mxu0 %v262
    %327 = vmatprep.subr.bf16.mxu0 0
    %328 = vmatpush1.bf16.msra.mxu0 %v261
    %329 = vmatprep.subr.bf16.mxu0 0
    %330 = vmatpush1.bf16.msra.mxu0 %v260
    %331 = vmatprep.subr.bf16.mxu0 0
    %332 = vmatpush1.bf16.msra.mxu0 %v259
    %333 = vmatprep.subr.bf16.mxu0 0
    %334 = vmatpush1.bf16.msra.mxu0 %v258
    %335 = vmatprep.subr.bf16.mxu0 0
    %336 = vmatpush1.bf16.msra.mxu0 %v257
    %337 = vmatprep.subr.bf16.mxu0 0
    %338 = vmatpush2.bf16.msra.mxu0 %v272
    %339 = vmatprep.subr.bf16.mxu0 0
    %340 = vmatpush2.bf16.msra.mxu0 %v271
    %341 = vmatprep.subr.bf16.mxu0 0
    %342 = vmatpush2.bf16.msra.mxu0 %v270
    %343 = vmatprep.subr.bf16.mxu0 0
    %344 = vmatpush2.bf16.msra.mxu0 %v269
    %345 = vmatprep.subr.bf16.mxu0 0
    %346 = vmatpush2.bf16.msra.mxu0 %v268
    %347 = vmatprep.subr.bf16.mxu0 0
    %348 = vmatpush2.bf16.msra.mxu0 %v267
    %349 = vmatprep.subr.bf16.mxu0 0
    %350 = vmatpush2.bf16.msra.mxu0 %v266
    %351 = vmatprep.subr.bf16.mxu0 0
    %352 = vmatpush2.bf16.msra.mxu0 %v265
    %353 = vmatprep.mubr.bf16.mxu0 %v122
    %354 = vmatmul.mubr.bf16.gmra.mxu0 %v115
    %v355 = vpop.f32.mrf.mxu0
    %v356 = vadd.f32 %v98, %v355
    %v357 = vpop.f32.mrf.mxu0
    %v358 = vpop.f32.mrf.mxu0
    %v359 = vpop.f32.mrf.mxu0
    %360 = vdwg.mxu0
    %361 = vmatprep.subr.bf16.mxu0 0
    %362 = vmatpush1.bf16.msra.mxu0 %v280
    %363 = vmatprep.subr.bf16.mxu0 0
    %364 = vmatpush1.bf16.msra.mxu0 %v279
    %365 = vmatprep.subr.bf16.mxu0 0
    %366 = vmatpush1.bf16.msra.mxu0 %v278
    %367 = vmatprep.subr.bf16.mxu0 0
    %368 = vmatpush1.bf16.msra.mxu0 %v277
    %369 = vmatprep.subr.bf16.mxu0 0
    %370 = vmatpush1.bf16.msra.mxu0 %v276
    %371 = vmatprep.subr.bf16.mxu0 0
    %372 = vmatpush1.bf16.msra.mxu0 %v275
    %373 = vmatprep.subr.bf16.mxu0 0
    %374 = vmatpush1.bf16.msra.mxu0 %v274
    %375 = vmatprep.subr.bf16.mxu0 0
    %376 = vmatpush1.bf16.msra.mxu0 %v273
    %377 = vmatprep.subr.bf16.mxu0 0
    %378 = vmatpush2.bf16.msra.mxu0 %v288
    %379 = vmatprep.subr.bf16.mxu0 0
    %380 = vmatpush2.bf16.msra.mxu0 %v287
    %381 = vmatprep.subr.bf16.mxu0 0
    %382 = vmatpush2.bf16.msra.mxu0 %v286
    %383 = vmatprep.subr.bf16.mxu0 0
    %384 = vmatpush2.bf16.msra.mxu0 %v285
    %385 = vmatprep.subr.bf16.mxu0 0
    %386 = vmatpush2.bf16.msra.mxu0 %v284
    %387 = vmatprep.subr.bf16.mxu0 0
    %388 = vmatpush2.bf16.msra.mxu0 %v283
    %389 = vmatprep.subr.bf16.mxu0 0
    %390 = vmatpush2.bf16.msra.mxu0 %v282
    %391 = vmatprep.subr.bf16.mxu0 0
    %392 = vmatpush2.bf16.msra.mxu0 %v281
    %393 = vmatprep.mubr.bf16.mxu0 %v124
    %394 = vmatmul.mubr.bf16.gmra.mxu0 %v123
    %v395 = vpop.f32.mrf.mxu0
    %v396 = vadd.f32 %v356, %v395
    %v397 = vpop.f32.mrf.mxu0
    %v398 = vpop.f32.mrf.mxu0
    %v399 = vpop.f32.mrf.mxu0
    %400 = vdwg.mxu0
    %v401 = vmax.f32 %v396, 0.0
    %v402 = vpack.c.bf16 %v401, %v401
    %v403 = vld [vmem:[%s3] sm:$0xf]
    %v404 = vld [vmem:[%s3 + $0x4] sm:$0xf]
    %v405 = vld [vmem:[%s3 + $0x8] sm:$0xf]
    %v406 = vld [vmem:[%s3 + $0xc] sm:$0xf]
    %v407 = vld [vmem:[%s3 + $0x10] sm:$0xf]
    %v408 = vld [vmem:[%s3 + $0x14] sm:$0xf]
    %v409 = vld [vmem:[%s3 + $0x18] sm:$0xf]
    %v410 = vld [vmem:[%s3 + $0x1c] sm:$0xf]
    %v411 = vld [vmem:[%s3 + $0x20] sm:$0xf]
    %v412 = vld [vmem:[%s3 + $0x24] sm:$0xf]
    %v413 = vld [vmem:[%s3 + $0x28] sm:$0xf]
    %v414 = vld [vmem:[%s3 + $0x2c] sm:$0xf]
    %v415 = vld [vmem:[%s3 + $0x30] sm:$0xf]
    %v416 = vld [vmem:[%s3 + $0x34] sm:$0xf]
    %v417 = vld [vmem:[%s3 + $0x38] sm:$0xf]
    %v418 = vld [vmem:[%s3 + $0x3c] sm:$0xf]
    %v419 = vld [vmem:[%s4] sm:$0x1]
    %v421 = vlaneseq
    %v422 = vshrl.u32 %v421, 7
    %v423 = vsub.s32 0, %v422
    %v424 = vrot.slane %v419, %v423
    %v442 = vunpack.c.l.b16 %v403
    %v443 = vunpack.c.l.b16 %v404
    %v444 = vunpack.c.l.b16 %v405
    %v445 = vunpack.c.l.b16 %v406
    %v446 = vunpack.c.l.b16 %v407
    %v447 = vunpack.c.l.b16 %v408
    %v448 = vunpack.c.l.b16 %v409
    %v449 = vunpack.c.l.b16 %v410
    %v450 = vunpack.c.l.b16 %v411
    %v451 = vunpack.c.l.b16 %v412
    %v452 = vunpack.c.l.b16 %v413
    %v453 = vunpack.c.l.b16 %v414
    %v454 = vunpack.c.l.b16 %v415
    %v455 = vunpack.c.l.b16 %v416
    %v456 = vunpack.c.l.b16 %v417
    %v457 = vunpack.c.l.b16 %v418
    %v458 = vpack.c.b16 %v443, %v442
    %v459 = vpack.c.b16 %v445, %v444
    %v460 = vpack.c.b16 %v447, %v446
    %v461 = vpack.c.b16 %v449, %v448
    %v462 = vpack.c.b16 %v451, %v450
    %v463 = vpack.c.b16 %v453, %v452
    %v464 = vpack.c.b16 %v455, %v454
    %v465 = vpack.c.b16 %v457, %v456
    %474 = vmatprep.subr.bf16.mxu0 0
    %475 = vmatpush1.bf16.msra.mxu0 %v465
    %476 = vmatprep.subr.bf16.mxu0 0
    %477 = vmatpush1.bf16.msra.mxu0 %v464
    %478 = vmatprep.subr.bf16.mxu0 0
    %479 = vmatpush1.bf16.msra.mxu0 %v463
    %480 = vmatprep.subr.bf16.mxu0 0
    %481 = vmatpush1.bf16.msra.mxu0 %v462
    %482 = vmatprep.subr.bf16.mxu0 0
    %483 = vmatpush1.bf16.msra.mxu0 %v461
    %484 = vmatprep.subr.bf16.mxu0 0
    %485 = vmatpush1.bf16.msra.mxu0 %v460
    %486 = vmatprep.subr.bf16.mxu0 0
    %487 = vmatpush1.bf16.msra.mxu0 %v459
    %488 = vmatprep.subr.bf16.mxu0 0
    %489 = vmatpush1.bf16.msra.mxu0 %v458
    %490 = vmatprep.subr.bf16.mxu0 0
    %491 = vmatpush2.bf16.msra.mxu0 0
    %492 = vmatprep.subr.bf16.mxu0 0
    %493 = vmatpush2.bf16.msra.mxu0 0
    %494 = vmatprep.subr.bf16.mxu0 0
    %495 = vmatpush2.bf16.msra.mxu0 0
    %496 = vmatprep.subr.bf16.mxu0 0
    %497 = vmatpush2.bf16.msra.mxu0 0
    %498 = vmatprep.subr.bf16.mxu0 0
    %499 = vmatpush2.bf16.msra.mxu0 0
    %500 = vmatprep.subr.bf16.mxu0 0
    %501 = vmatpush2.bf16.msra.mxu0 0
    %502 = vmatprep.subr.bf16.mxu0 0
    %503 = vmatpush2.bf16.msra.mxu0 0
    %504 = vmatprep.subr.bf16.mxu0 0
    %505 = vmatpush2.bf16.msra.mxu0 0
    %506 = vmatprep.mubr.bf16.mxu0 0
    %507 = vmatmul.mubr.bf16.gmra.mxu0 %v402
    %v508 = vpop.f32.mrf.mxu0
    %v509 = vadd.f32 %v424, %v508
    %v510 = vpop.f32.mrf.mxu0
    %v511 = vpop.f32.mrf.mxu0
    %v512 = vpop.f32.mrf.mxu0
    %513 = vdwg.mxu0
    %v514 = vmax.f32 %v509, 0.0
    %v515 = vpack.c.bf16 %v514, %v514
    %v516 = vld [vmem:[%s5] sm:$0xf]
    %v517 = vld [vmem:[%s5 + $0x4] sm:$0xf]
    %v518 = vld [vmem:[%s5 + $0x8] sm:$0xf]
    %v519 = vld [vmem:[%s5 + $0xc] sm:$0xf]
    %v520 = vld [vmem:[%s5 + $0x10] sm:$0xf]
    %v521 = vld [vmem:[%s5 + $0x14] sm:$0xf]
    %v522 = vld [vmem:[%s5 + $0x18] sm:$0xf]
    %v523 = vld [vmem:[%s5 + $0x1c] sm:$0xf]
    %v524 = vld [vmem:[%s5 + $0x20] sm:$0xf]
    %v525 = vld [vmem:[%s5 + $0x24] sm:$0xf]
    %v526 = vld [vmem:[%s5 + $0x28] sm:$0xf]
    %v527 = vld [vmem:[%s5 + $0x2c] sm:$0xf]
    %v528 = vld [vmem:[%s5 + $0x30] sm:$0xf]
    %v529 = vld [vmem:[%s5 + $0x34] sm:$0xf]
    %v530 = vld [vmem:[%s5 + $0x38] sm:$0xf]
    %v531 = vld [vmem:[%s5 + $0x3c] sm:$0xf]
    %v532 = vld [vmem:[%s6] sm:$0x1]
    %v534 = vlaneseq
    %v535 = vshrl.u32 %v534, 7
    %v536 = vsub.s32 0, %v535
    %v537 = vrot.slane %v532, %v536
    %v555 = vunpack.c.l.b16 %v516
    %v556 = vunpack.c.l.b16 %v517
    %v557 = vunpack.c.l.b16 %v518
    %v558 = vunpack.c.l.b16 %v519
    %v559 = vunpack.c.l.b16 %v520
    %v560 = vunpack.c.l.b16 %v521
    %v561 = vunpack.c.l.b16 %v522
    %v562 = vunpack.c.l.b16 %v523
    %v563 = vunpack.c.l.b16 %v524
    %v564 = vunpack.c.l.b16 %v525
    %v565 = vunpack.c.l.b16 %v526
    %v566 = vunpack.c.l.b16 %v527
    %v567 = vunpack.c.l.b16 %v528
    %v568 = vunpack.c.l.b16 %v529
    %v569 = vunpack.c.l.b16 %v530
    %v570 = vunpack.c.l.b16 %v531
    %v571 = vpack.c.b16 %v556, %v555
    %v572 = vpack.c.b16 %v558, %v557
    %v573 = vpack.c.b16 %v560, %v559
    %v574 = vpack.c.b16 %v562, %v561
    %v575 = vpack.c.b16 %v564, %v563
    %v576 = vpack.c.b16 %v566, %v565
    %v577 = vpack.c.b16 %v568, %v567
    %v578 = vpack.c.b16 %v570, %v569
    %587 = vmatprep.subr.bf16.mxu0 0
    %588 = vmatpush1.bf16.msra.mxu0 %v578
    %589 = vmatprep.subr.bf16.mxu0 0
    %590 = vmatpush1.bf16.msra.mxu0 %v577
    %591 = vmatprep.subr.bf16.mxu0 0
    %592 = vmatpush1.bf16.msra.mxu0 %v576
    %593 = vmatprep.subr.bf16.mxu0 0
    %594 = vmatpush1.bf16.msra.mxu0 %v575
    %595 = vmatprep.subr.bf16.mxu0 0
    %596 = vmatpush1.bf16.msra.mxu0 %v574
    %597 = vmatprep.subr.bf16.mxu0 0
    %598 = vmatpush1.bf16.msra.mxu0 %v573
    %599 = vmatprep.subr.bf16.mxu0 0
    %600 = vmatpush1.bf16.msra.mxu0 %v572
    %601 = vmatprep.subr.bf16.mxu0 0
    %602 = vmatpush1.bf16.msra.mxu0 %v571
    %603 = vmatprep.subr.bf16.mxu0 0
    %604 = vmatpush2.bf16.msra.mxu0 0
    %605 = vmatprep.subr.bf16.mxu0 0
    %606 = vmatpush2.bf16.msra.mxu0 0
    %607 = vmatprep.subr.bf16.mxu0 0
    %608 = vmatpush2.bf16.msra.mxu0 0
    %609 = vmatprep.subr.bf16.mxu0 0
    %610 = vmatpush2.bf16.msra.mxu0 0
    %611 = vmatprep.subr.bf16.mxu0 0
    %612 = vmatpush2.bf16.msra.mxu0 0
    %613 = vmatprep.subr.bf16.mxu0 0
    %614 = vmatpush2.bf16.msra.mxu0 0
    %615 = vmatprep.subr.bf16.mxu0 0
    %616 = vmatpush2.bf16.msra.mxu0 0
    %617 = vmatprep.subr.bf16.mxu0 0
    %618 = vmatpush2.bf16.msra.mxu0 0
    %619 = vmatprep.mubr.bf16.mxu0 0
    %620 = vmatmul.mubr.bf16.gmra.mxu0 %v515
    %v621 = vpop.f32.mrf.mxu0
    %v622 = vadd.f32 %v537, %v621
    %v623 = vpop.f32.mrf.mxu0
    %v624 = vpop.f32.mrf.mxu0
    %v625 = vpop.f32.mrf.mxu0
    %626 = vdwg.mxu0
    %v627 = vlaneseq
    %v628 = vand.u32 %v627, 127
    %vm629 = vcmp.lt.s32.totalorder %v628, 10
    %v630 = vsel %vm629, %v622, -1e+30
    %vm631 = vcmask 1041408
    %v632 = vsel %vm631, %v630, -inf
    %633 = vmax.xlane.f32.xlu0 %v632
    %v634 = vpop.xlane.xlu0 %633
    %v635 = vsub.f32 %v630, %v634
    %v636 = vmul.f32 %v635, 1.442695
    %v637 = vpow.pop %v636
    %v638 = vsel %vm631, %v637, 0.0
    %639 = vadd.xlane.f32.xlu0 %v638
    %v640 = vpop.xlane.xlu0 %639
    %v641 = vrcp.pop %v640
    %v642 = vmul.f32 %v637, %v641
    %643 = vst [vmem:[#allocation2] sm:$0x3] %v642
    // Predicated region
    $region30: #{net_forward.9} parent=1 // pred_check
      _
    $region31: #{net_forward.9} parent=1 // pred_check_branch
      %645 = sbr.rel (0) target = $region33
    $region32: #{net_forward.9} parent=1 // pred_region
      %s647 = ssub.s32 32, 32
      %648 = vsyncadd [#allocation3], %s647
      %s650 = sshll.u32 [#allocation2], 4
      %s651 = int_to_ptr.vmem [resolvable:$true] %s650
      %653 = dma.vmem_to_hbm [thread:$0]  %s651, 32, %s7, [#allocation3]
    $region33: #{net_forward.9} parent=1 // pred_fallthru
      _
    // Predicated region
    $region34: #{net_forward.9} parent=1 // pred_check
      _
    $region35: #{net_forward.9} parent=1 // pred_check_branch
      %655 = sbr.rel (0) target = $region37
    $region36: #{net_forward.9} parent=1 // pred_region
      %656 = dma.done [#allocation3], 32
    $region37: #{net_forward.9} parent=1 // pred_fallthru
      _
    %657 = vsyncpa [#allocation3], 1

</llo_original>
